<compile_context>
chip_gen: v7x
topology: tpu7x:2x2x1
jax: 0.10.0
libtpu: 0.0.40
codegen_flags: <defaults>
</compile_context>

<pallas_src>
import math

import jax
import jax.numpy as jnp
from jax.experimental import pallas as pl
from jax.experimental.pallas import tpu as pltpu

INPUT_DIM = 28 * 28     # 784, fixed by the module
HIDDEN = 400            # PyTorch hidden width
HIDDEN_PAD = 512        # zero-padded hidden width (multiple of 128 lanes)
LATENT_DIM = 10         # args.latent_dim (small, chosen for the synthetic run)


def _vae_kernel(
    x_ref, eps_ref,
    ew1_ref, eb1_ref, ew2_ref, eb2_ref, ew3_ref, eb3_ref,
    dw1_ref, db1_ref, dw2_ref, db2_ref, dw3_ref, db3_ref,
    mulogvar_ref, recon_ref,
):
    # In-kernel bf16 cast of x (VPU work that hides under the 784x512 MXU pass).
    x = x_ref[...].astype(jnp.bfloat16)                      # (TB, 784)

    # ---- Encoder: Linear->ReLU->Linear->ReLU->Linear (fused mu|logvar) ----
    # bf16 matmul inputs, f32 accumulation and all elementwise math.
    h = jnp.dot(x, ew1_ref[...], preferred_element_type=jnp.float32) + eb1_ref[...]
    h = jnp.maximum(h, 0.0)
    h = jnp.dot(h.astype(jnp.bfloat16), ew2_ref[...],
                preferred_element_type=jnp.float32) + eb2_ref[...]
    h = jnp.maximum(h, 0.0)
    ml = jnp.dot(h.astype(jnp.bfloat16), ew3_ref[...],
                 preferred_element_type=jnp.float32) + eb3_ref[...]
    mulogvar_ref[...] = ml                                   # (TB, 2*LATENT)

    z_mu = ml[:, :LATENT_DIM]
    z_logvar = ml[:, LATENT_DIM:]

    # ---- Reparameterize: z = mu + eps * exp(0.5 * logvar), all in f32 ----
    std = jnp.exp(0.5 * z_logvar)
    z = z_mu + eps_ref[...] * std                            # (TB, LATENT) f32

    # ---- Decoder: Linear->ReLU->Linear->ReLU->Linear->sigmoid ----
    # First matmul has K=10 (~0.4% of MACs): keep z / dw1 / db1 in f32.
    d = jnp.dot(z, dw1_ref[...], preferred_element_type=jnp.float32) + db1_ref[...]
    d = jnp.maximum(d, 0.0)
    d = jnp.dot(d.astype(jnp.bfloat16), dw2_ref[...],
                preferred_element_type=jnp.float32) + db2_ref[...]
    d = jnp.maximum(d, 0.0)
    logits = jnp.dot(d.astype(jnp.bfloat16), dw3_ref[...],
                     preferred_element_type=jnp.float32) + db3_ref[...]
    # sigmoid already lands in [0, 1] -> the original .clamp(0, 1) is a no-op.
    # f32 sigmoid (safe on v5e), bf16 store (halves recon HBM writeback).
    recon_ref[...] = jax.nn.sigmoid(logits).astype(recon_ref.dtype)


def _round_up(n, m):
    return ((n + m - 1) // m) * m


def _pick_tile_batch(B, max_tile=1024, target_steps=4):
    """Batch tile giving ~`target_steps` grid steps so the BlockSpec pipeline
    overlaps DMA with compute, preferring an even step count so v7x's two
    TensorCores split the 'parallel' batch axis evenly. Capped at 1024 rows
    (fits v7x's 64 MiB VMEM with headroom; fine on v5e/v6e)."""
    if B <= 16:
        return B                                  # tiny batch: single tile
    tb = min(max_tile, _round_up(pl.cdiv(B, target_steps), 8))
    for cand in (tb, tb - 8, tb - 16, tb - 24):   # small nudge toward even steps
        if cand >= 8 and pl.cdiv(B, cand) % 2 == 0:
            return cand
    return tb


def vae_rotated_mnist_forward(x, eps, kernel_params, *, tile_batch=None):
    """x: (B, 1, 28, 28) or (B, 784), f32. eps: (B, LATENT_DIM) standard normal.

    Returns (z_mu, z_logvar, x_recon_probs) -- x_recon_probs (bf16, in [0,1])
    are the Bernoulli probabilities (the `.probs` of the module's
    torch.distributions.Bernoulli output).
    kernel_params: output of prepare_kernel_params(make_params(key)).
    """
    B = x.shape[0]
    x_flat = x.reshape(B, -1).astype(jnp.float32)   # keep f32; bf16 cast in-kernel
    assert x_flat.shape[1] == INPUT_DIM
    eps = eps.astype(jnp.float32)

    TB = tile_batch if tile_batch is not None else _pick_tile_batch(B)
    TB = min(TB, B)
    grid = (pl.cdiv(B, TB),)

    def batch_spec(width):
        return pl.BlockSpec((TB, width), lambda i: (i, 0))

    def resident_spec(shape):
        # Constant-index weights/biases: DMA'd once, single-buffered so they
        # don't burn 2x VMEM (headroom that matters on v7x's 64 MiB VMEM).
        return pl.BlockSpec(shape, lambda i: (0, 0),
                            pipeline_mode=pl.Buffered(buffer_count=1))

    in_specs = [batch_spec(INPUT_DIM), batch_spec(LATENT_DIM)]
    in_specs += [resident_spec(p.shape) for p in kernel_params]

    mulogvar, recon = pl.pallas_call(
        _vae_kernel,
        grid=grid,
        out_shape=(
            jax.ShapeDtypeStruct((B, 2 * LATENT_DIM), jnp.float32),
            jax.ShapeDtypeStruct((B, INPUT_DIM), jnp.bfloat16),
        ),
        in_specs=in_specs,
        out_specs=(batch_spec(2 * LATENT_DIM), batch_spec(INPUT_DIM)),
        compiler_params=pltpu.CompilerParams(
            dimension_semantics=("parallel",),
            vmem_limit_bytes=48 * 1024 * 1024,
        ),
    )(x_flat, eps, *kernel_params)

    # Column order matches PyTorch: h[:, :L] = mu, h[:, L:] = logvar.
    return mulogvar[:, :LATENT_DIM], mulogvar[:, LATENT_DIM:], recon


# ----------------------- parameter construction ----------------------------

def _linear_init(key, fan_in, fan_out):
    """PyTorch nn.Linear default init: U(-1/sqrt(fan_in), 1/sqrt(fan_in))."""
    kw, kb = jax.random.split(key)
    bound = 1.0 / math.sqrt(fan_in)
    w = jax.random.uniform(kw, (fan_in, fan_out), jnp.float32, -bound, bound)
    b = jax.random.uniform(kb, (1, fan_out), jnp.float32, -bound, bound)
    return w, b


def make_params(key):
    """Unpadded f32 params in PyTorch layout (W as (in, out), b as (1, out))."""
    keys = jax.random.split(key, 6)
    ew1, eb1 = _linear_init(keys[0], INPUT_DIM, HIDDEN)
    ew2, eb2 = _linear_init(keys[1], HIDDEN, HIDDEN)
    ew3, eb3 = _linear_init(keys[2], HIDDEN, 2 * LATENT_DIM)   # fused mu|logvar
    dw1, db1 = _linear_init(keys[3], LATENT_DIM, HIDDEN)
    dw2, db2 = _linear_init(keys[4], HIDDEN, HIDDEN)
    dw3, db3 = _linear_init(keys[5], HIDDEN, INPUT_DIM)
    return (ew1, eb1, ew2, eb2, ew3, eb3, dw1, db1, dw2, db2, dw3, db3)


def _pad_cols(a, n):
    return jnp.pad(a, ((0, 0), (0, n - a.shape[1])))


def _pad_rows(a, n):
    return jnp.pad(a, ((0, n - a.shape[0]), (0, 0)))


def prepare_kernel_params(params):
    """Zero-pad hidden 400->512 (exactly preserves numerics: padded hidden
    units are ReLU(0)=0 and their outgoing weight rows are zero). Large matmul
    weights are cast to bf16; biases and the tiny K=10 decoder input layer
    (dw1/db1) stay f32 for accuracy at zero MXU cost."""
    (ew1, eb1, ew2, eb2, ew3, eb3, dw1, db1, dw2, db2, dw3, db3) = params
    HP = HIDDEN_PAD
    ew1 = _pad_cols(ew1, HP); eb1 = _pad_cols(eb1, HP)
    ew2 = _pad_cols(_pad_rows(ew2, HP), HP); eb2 = _pad_cols(eb2, HP)
    ew3 = _pad_rows(ew3, HP)
    dw1 = _pad_cols(dw1, HP); db1 = _pad_cols(db1, HP)
    dw2 = _pad_cols(_pad_rows(dw2, HP), HP); db2 = _pad_cols(db2, HP)
    dw3 = _pad_rows(dw3, HP)
    bf16 = lambda w: w.astype(jnp.bfloat16)
    return (bf16(ew1), eb1, bf16(ew2), eb2, bf16(ew3), eb3,
            dw1, db1, bf16(dw2), db2, bf16(dw3), db3)


# ------------------------------ reference ----------------------------------

def _reference_forward(x, eps, params):
    """Pure-JAX f32 reference mirroring the PyTorch module."""
    (ew1, eb1, ew2, eb2, ew3, eb3, dw1, db1, dw2, db2, dw3, db3) = params
    B = x.shape[0]
    xf = x.reshape(B, -1).astype(jnp.float32)
    h = jnp.maximum(xf @ ew1 + eb1, 0.0)
    h = jnp.maximum(h @ ew2 + eb2, 0.0)
    ml = h @ ew3 + eb3
    mu, lv = ml[:, :LATENT_DIM], ml[:, LATENT_DIM:]
    z = mu + eps * jnp.exp(0.5 * lv)
    d = jnp.maximum(z @ dw1 + db1, 0.0)
    d = jnp.maximum(d @ dw2 + db2, 0.0)
    recon = jnp.clip(jax.nn.sigmoid(d @ dw3 + db3), 0.0, 1.0)
    return mu, lv, recon


if __name__ == "__main__":
    key = jax.random.PRNGKey(0)
    k_params, k_x, k_eps = jax.random.split(key, 3)

    params = make_params(k_params)
    kparams = prepare_kernel_params(params)

    # TODO(synk): torch.distributions.Bernoulli has no Pallas equivalent; we
    # return the clamped Bernoulli probabilities (px_z.probs) instead.

    # B=2: required tiny case (single tile).  B=50: multi-step pipelined grid
    # (TB=16, 4 steps) with a partial last batch tile.
    for B in (2, 50):
        kx = jax.random.fold_in(k_x, B)
        ke = jax.random.fold_in(k_eps, B)
        x = jax.random.uniform(kx, (B, 1, 28, 28), jnp.float32)     # MNIST-like input
        eps = jax.random.normal(ke, (B, LATENT_DIM), jnp.float32)   # reparam noise

        z_mu, z_logvar, recon = vae_rotated_mnist_forward(x, eps, kparams)
        jax.block_until_ready((z_mu, z_logvar, recon))

        r_mu, r_lv, r_recon = _reference_forward(x, eps, params)

        assert z_mu.shape == (B, LATENT_DIM)
        assert z_logvar.shape == (B, LATENT_DIM)
        assert recon.shape == (B, INPUT_DIM)
        recon_f32 = recon.astype(jnp.float32)
        assert bool(jnp.all((recon_f32 >= 0.0) & (recon_f32 <= 1.0)))
        # bf16 matmul inputs / bf16 recon store, f32 accumulation -> generous
        # tolerance vs the pure-f32 reference.
        assert bool(jnp.allclose(z_mu, r_mu, atol=5e-2, rtol=5e-2))
        assert bool(jnp.allclose(z_logvar, r_lv, atol=5e-2, rtol=5e-2))
        assert bool(jnp.allclose(recon_f32, r_recon, atol=5e-2, rtol=5e-2))

    print("KERNEL_OK")
</pallas_src>

<mosaic_0001>
module attributes {stable_mosaic.version = 11 : i64} {
  func.func @_vae_kernel(%arg0: i32, %arg1: memref<2x784xf32, #tpu.memory_space<vmem>>, %arg2: memref<2x10xf32, #tpu.memory_space<vmem>>, %arg3: memref<784x512xbf16, #tpu.memory_space<vmem>>, %arg4: memref<1x512xf32, #tpu.memory_space<vmem>>, %arg5: memref<512x512xbf16, #tpu.memory_space<vmem>>, %arg6: memref<1x512xf32, #tpu.memory_space<vmem>>, %arg7: memref<512x20xbf16, #tpu.memory_space<vmem>>, %arg8: memref<1x20xf32, #tpu.memory_space<vmem>>, %arg9: memref<10x512xf32, #tpu.memory_space<vmem>>, %arg10: memref<1x512xf32, #tpu.memory_space<vmem>>, %arg11: memref<512x512xbf16, #tpu.memory_space<vmem>>, %arg12: memref<1x512xf32, #tpu.memory_space<vmem>>, %arg13: memref<512x784xbf16, #tpu.memory_space<vmem>>, %arg14: memref<1x784xf32, #tpu.memory_space<vmem>>, %arg15: memref<2x20xf32, #tpu.memory_space<vmem>>, %arg16: memref<2x784xbf16, #tpu.memory_space<vmem>>) attributes {dimension_semantics = [#tpu.dimension_semantics<parallel>], iteration_bounds = array<i64: 1>, scalar_prefetch = 0 : i64, scratch_operands = 0 : i64, tpu.core_type = #tpu.core_type<tc>, window_params = [{transform_indices = @transform_0, window_bounds = array<i64: 2, 784>}, {transform_indices = @transform_1, window_bounds = array<i64: 2, 10>}, {pipeline_mode = #tpu.pipeline_mode<synchronous>, transform_indices = @transform_2, window_bounds = array<i64: 784, 512>}, {pipeline_mode = #tpu.pipeline_mode<synchronous>, transform_indices = @transform_3, window_bounds = array<i64: 1, 512>}, {pipeline_mode = #tpu.pipeline_mode<synchronous>, transform_indices = @transform_4, window_bounds = array<i64: 512, 512>}, {pipeline_mode = #tpu.pipeline_mode<synchronous>, transform_indices = @transform_5, window_bounds = array<i64: 1, 512>}, {pipeline_mode = #tpu.pipeline_mode<synchronous>, transform_indices = @transform_6, window_bounds = array<i64: 512, 20>}, {pipeline_mode = #tpu.pipeline_mode<synchronous>, transform_indices = @transform_7, window_bounds = array<i64: 1, 20>}, {pipeline_mode = #tpu.pipeline_mode<synchronous>, transform_indices = @transform_8, window_bounds = array<i64: 10, 512>}, {pipeline_mode = #tpu.pipeline_mode<synchronous>, transform_indices = @transform_9, window_bounds = array<i64: 1, 512>}, {pipeline_mode = #tpu.pipeline_mode<synchronous>, transform_indices = @transform_10, window_bounds = array<i64: 512, 512>}, {pipeline_mode = #tpu.pipeline_mode<synchronous>, transform_indices = @transform_11, window_bounds = array<i64: 1, 512>}, {pipeline_mode = #tpu.pipeline_mode<synchronous>, transform_indices = @transform_12, window_bounds = array<i64: 512, 784>}, {pipeline_mode = #tpu.pipeline_mode<synchronous>, transform_indices = @transform_13, window_bounds = array<i64: 1, 784>}, {transform_indices = @transform_14, window_bounds = array<i64: 2, 20>}, {transform_indices = @transform_15, window_bounds = array<i64: 2, 784>}]} {
    %c0 = arith.constant 0 : index
    %c0_0 = arith.constant 0 : index
    %0 = vector.load %arg1[%c0, %c0_0] : memref<2x784xf32, #tpu.memory_space<vmem>>, vector<2x784xf32>
    %1 = arith.truncf %0 : vector<2x784xf32> to vector<2x784xbf16>
    %c0_1 = arith.constant 0 : index
    %c0_2 = arith.constant 0 : index
    %2 = vector.load %arg3[%c0_1, %c0_2] : memref<784x512xbf16, #tpu.memory_space<vmem>>, vector<784x512xbf16>
    %cst = arith.constant dense<0.000000e+00> : vector<2x512xf32>
    %3 = tpu.matmul %1, %2, %cst {dimension_numbers = #tpu.dot_dimension_numbers<[1], [0], [0], [1], [0, 0, 1, 1], [], []>} : vector<2x784xbf16>, vector<784x512xbf16>, vector<2x512xf32> -> vector<2x512xf32>
    %c0_3 = arith.constant 0 : index
    %c0_4 = arith.constant 0 : index
    %4 = vector.load %arg4[%c0_3, %c0_4] : memref<1x512xf32, #tpu.memory_space<vmem>>, vector<1x512xf32>
    %5 = vector.broadcast %4 : vector<1x512xf32> to vector<2x512xf32>
    %6 = arith.addf %3, %5 : vector<2x512xf32>
    %cst_5 = arith.constant 0.000000e+00 : f32
    %7 = vector.broadcast %cst_5 : f32 to vector<2x512xf32>
    %8 = arith.maximumf %6, %7 : vector<2x512xf32>
    %9 = arith.truncf %8 : vector<2x512xf32> to vector<2x512xbf16>
    %c0_6 = arith.constant 0 : index
    %c0_7 = arith.constant 0 : index
    %10 = vector.load %arg5[%c0_6, %c0_7] : memref<512x512xbf16, #tpu.memory_space<vmem>>, vector<512x512xbf16>
    %cst_8 = arith.constant dense<0.000000e+00> : vector<2x512xf32>
    %11 = tpu.matmul %9, %10, %cst_8 {dimension_numbers = #tpu.dot_dimension_numbers<[1], [0], [0], [1], [0, 0, 1, 1], [], []>} : vector<2x512xbf16>, vector<512x512xbf16>, vector<2x512xf32> -> vector<2x512xf32>
    %c0_9 = arith.constant 0 : index
    %c0_10 = arith.constant 0 : index
    %12 = vector.load %arg6[%c0_9, %c0_10] : memref<1x512xf32, #tpu.memory_space<vmem>>, vector<1x512xf32>
    %13 = vector.broadcast %12 : vector<1x512xf32> to vector<2x512xf32>
    %14 = arith.addf %11, %13 : vector<2x512xf32>
    %cst_11 = arith.constant 0.000000e+00 : f32
    %15 = vector.broadcast %cst_11 : f32 to vector<2x512xf32>
    %16 = arith.maximumf %14, %15 : vector<2x512xf32>
    %17 = arith.truncf %16 : vector<2x512xf32> to vector<2x512xbf16>
    %c0_12 = arith.constant 0 : index
    %c0_13 = arith.constant 0 : index
    %18 = vector.load %arg7[%c0_12, %c0_13] : memref<512x20xbf16, #tpu.memory_space<vmem>>, vector<512x20xbf16>
    %cst_14 = arith.constant dense<0.000000e+00> : vector<2x20xf32>
    %19 = tpu.matmul %17, %18, %cst_14 {dimension_numbers = #tpu.dot_dimension_numbers<[1], [0], [0], [1], [0, 0, 1, 1], [], []>} : vector<2x512xbf16>, vector<512x20xbf16>, vector<2x20xf32> -> vector<2x20xf32>
    %c0_15 = arith.constant 0 : index
    %c0_16 = arith.constant 0 : index
    %20 = vector.load %arg8[%c0_15, %c0_16] : memref<1x20xf32, #tpu.memory_space<vmem>>, vector<1x20xf32>
    %21 = vector.broadcast %20 : vector<1x20xf32> to vector<2x20xf32>
    %22 = arith.addf %19, %21 : vector<2x20xf32>
    %c0_17 = arith.constant 0 : index
    %c0_18 = arith.constant 0 : index
    %23 = vector.load %arg15[%c0_17, %c0_18] : memref<2x20xf32, #tpu.memory_space<vmem>>, vector<2x20xf32>
    tpu.vector_store %arg15[%c0_17, %c0_18], %22 {strides = array<i32>} : memref<2x20xf32, #tpu.memory_space<vmem>>, vector<2x20xf32>,
    %24 = vector.extract_strided_slice %22 {offsets = [0, 0], sizes = [2, 10], strides = [1, 1]} : vector<2x20xf32> to vector<2x10xf32>
    %25 = vector.extract_strided_slice %22 {offsets = [0, 10], sizes = [2, 10], strides = [1, 1]} : vector<2x20xf32> to vector<2x10xf32>
    %cst_19 = arith.constant 5.000000e-01 : f32
    %26 = vector.broadcast %cst_19 : f32 to vector<2x10xf32>
    %27 = arith.mulf %26, %25 : vector<2x10xf32>
    %28 = math.exp %27 : vector<2x10xf32>
    %c0_20 = arith.constant 0 : index
    %c0_21 = arith.constant 0 : index
    %29 = vector.load %arg2[%c0_20, %c0_21] : memref<2x10xf32, #tpu.memory_space<vmem>>, vector<2x10xf32>
    %30 = arith.mulf %29, %28 : vector<2x10xf32>
    %31 = arith.addf %24, %30 : vector<2x10xf32>
    %c0_22 = arith.constant 0 : index
    %c0_23 = arith.constant 0 : index
    %32 = vector.load %arg9[%c0_22, %c0_23] : memref<10x512xf32, #tpu.memory_space<vmem>>, vector<10x512xf32>
    %cst_24 = arith.constant dense<0.000000e+00> : vector<2x512xf32>
    %33 = tpu.matmul %31, %32, %cst_24 {dimension_numbers = #tpu.dot_dimension_numbers<[1], [0], [0], [1], [0, 0, 1, 1], [], []>} : vector<2x10xf32>, vector<10x512xf32>, vector<2x512xf32> -> vector<2x512xf32>
    %c0_25 = arith.constant 0 : index
    %c0_26 = arith.constant 0 : index
    %34 = vector.load %arg10[%c0_25, %c0_26] : memref<1x512xf32, #tpu.memory_space<vmem>>, vector<1x512xf32>
    %35 = vector.broadcast %34 : vector<1x512xf32> to vector<2x512xf32>
    %36 = arith.addf %33, %35 : vector<2x512xf32>
    %cst_27 = arith.constant 0.000000e+00 : f32
    %37 = vector.broadcast %cst_27 : f32 to vector<2x512xf32>
    %38 = arith.maximumf %36, %37 : vector<2x512xf32>
    %39 = arith.truncf %38 : vector<2x512xf32> to vector<2x512xbf16>
    %c0_28 = arith.constant 0 : index
    %c0_29 = arith.constant 0 : index
    %40 = vector.load %arg11[%c0_28, %c0_29] : memref<512x512xbf16, #tpu.memory_space<vmem>>, vector<512x512xbf16>
    %cst_30 = arith.constant dense<0.000000e+00> : vector<2x512xf32>
    %41 = tpu.matmul %39, %40, %cst_30 {dimension_numbers = #tpu.dot_dimension_numbers<[1], [0], [0], [1], [0, 0, 1, 1], [], []>} : vector<2x512xbf16>, vector<512x512xbf16>, vector<2x512xf32> -> vector<2x512xf32>
    %c0_31 = arith.constant 0 : index
    %c0_32 = arith.constant 0 : index
    %42 = vector.load %arg12[%c0_31, %c0_32] : memref<1x512xf32, #tpu.memory_space<vmem>>, vector<1x512xf32>
    %43 = vector.broadcast %42 : vector<1x512xf32> to vector<2x512xf32>
    %44 = arith.addf %41, %43 : vector<2x512xf32>
    %cst_33 = arith.constant 0.000000e+00 : f32
    %45 = vector.broadcast %cst_33 : f32 to vector<2x512xf32>
    %46 = arith.maximumf %44, %45 : vector<2x512xf32>
    %47 = arith.truncf %46 : vector<2x512xf32> to vector<2x512xbf16>
    %c0_34 = arith.constant 0 : index
    %c0_35 = arith.constant 0 : index
    %48 = vector.load %arg13[%c0_34, %c0_35] : memref<512x784xbf16, #tpu.memory_space<vmem>>, vector<512x784xbf16>
    %cst_36 = arith.constant dense<0.000000e+00> : vector<2x784xf32>
    %49 = tpu.matmul %47, %48, %cst_36 {dimension_numbers = #tpu.dot_dimension_numbers<[1], [0], [0], [1], [0, 0, 1, 1], [], []>} : vector<2x512xbf16>, vector<512x784xbf16>, vector<2x784xf32> -> vector<2x784xf32>
    %c0_37 = arith.constant 0 : index
    %c0_38 = arith.constant 0 : index
    %50 = vector.load %arg14[%c0_37, %c0_38] : memref<1x784xf32, #tpu.memory_space<vmem>>, vector<1x784xf32>
    %51 = vector.broadcast %50 : vector<1x784xf32> to vector<2x784xf32>
    %52 = arith.addf %49, %51 : vector<2x784xf32>
    %53 = arith.negf %52 : vector<2x784xf32>
    %54 = math.exp %53 : vector<2x784xf32>
    %cst_39 = arith.constant 1.000000e+00 : f32
    %55 = vector.broadcast %cst_39 : f32 to vector<2x784xf32>
    %56 = arith.addf %55, %54 : vector<2x784xf32>
    %57 = arith.divf %55, %56 : vector<2x784xf32>
    %58 = arith.truncf %57 : vector<2x784xf32> to vector<2x784xbf16>
    %c0_40 = arith.constant 0 : index
    %c0_41 = arith.constant 0 : index
    %59 = vector.load %arg16[%c0_40, %c0_41] : memref<2x784xbf16, #tpu.memory_space<vmem>>, vector<2x784xbf16>
    tpu.vector_store %arg16[%c0_40, %c0_41], %58 {strides = array<i32>} : memref<2x784xbf16, #tpu.memory_space<vmem>>, vector<2x784xbf16>,
    return
  }
  func.func @transform_0(%arg0: i32) -> (i32, i32) {
    %c0_i32 = arith.constant 0 : i32
    %c0_i32_0 = arith.constant 0 : i32
    return %arg0, %c0_i32 : i32, i32
  }
  func.func @transform_1(%arg0: i32) -> (i32, i32) {
    %c0_i32 = arith.constant 0 : i32
    %c0_i32_0 = arith.constant 0 : i32
    return %arg0, %c0_i32 : i32, i32
  }
  func.func @transform_2(%arg0: i32) -> (i32, i32) {
    %c0_i32 = arith.constant 0 : i32
    %c0_i32_0 = arith.constant 0 : i32
    %c0_i32_1 = arith.constant 0 : i32
    return %c0_i32, %c0_i32_0 : i32, i32
  }
  func.func @transform_3(%arg0: i32) -> (i32, i32) {
    %c0_i32 = arith.constant 0 : i32
    %c0_i32_0 = arith.constant 0 : i32
    %c0_i32_1 = arith.constant 0 : i32
    return %c0_i32, %c0_i32_0 : i32, i32
  }
  func.func @transform_4(%arg0: i32) -> (i32, i32) {
    %c0_i32 = arith.constant 0 : i32
    %c0_i32_0 = arith.constant 0 : i32
    %c0_i32_1 = arith.constant 0 : i32
    return %c0_i32, %c0_i32_0 : i32, i32
  }
  func.func @transform_5(%arg0: i32) -> (i32, i32) {
    %c0_i32 = arith.constant 0 : i32
    %c0_i32_0 = arith.constant 0 : i32
    %c0_i32_1 = arith.constant 0 : i32
    return %c0_i32, %c0_i32_0 : i32, i32
  }
  func.func @transform_6(%arg0: i32) -> (i32, i32) {
    %c0_i32 = arith.constant 0 : i32
    %c0_i32_0 = arith.constant 0 : i32
    %c0_i32_1 = arith.constant 0 : i32
    return %c0_i32, %c0_i32_0 : i32, i32
  }
  func.func @transform_7(%arg0: i32) -> (i32, i32) {
    %c0_i32 = arith.constant 0 : i32
    %c0_i32_0 = arith.constant 0 : i32
    %c0_i32_1 = arith.constant 0 : i32
    return %c0_i32, %c0_i32_0 : i32, i32
  }
  func.func @transform_8(%arg0: i32) -> (i32, i32) {
    %c0_i32 = arith.constant 0 : i32
    %c0_i32_0 = arith.constant 0 : i32
    %c0_i32_1 = arith.constant 0 : i32
    return %c0_i32, %c0_i32_0 : i32, i32
  }
  func.func @transform_9(%arg0: i32) -> (i32, i32) {
    %c0_i32 = arith.constant 0 : i32
    %c0_i32_0 = arith.constant 0 : i32
    %c0_i32_1 = arith.constant 0 : i32
    return %c0_i32, %c0_i32_0 : i32, i32
  }
  func.func @transform_10(%arg0: i32) -> (i32, i32) {
    %c0_i32 = arith.constant 0 : i32
    %c0_i32_0 = arith.constant 0 : i32
    %c0_i32_1 = arith.constant 0 : i32
    return %c0_i32, %c0_i32_0 : i32, i32
  }
  func.func @transform_11(%arg0: i32) -> (i32, i32) {
    %c0_i32 = arith.constant 0 : i32
    %c0_i32_0 = arith.constant 0 : i32
    %c0_i32_1 = arith.constant 0 : i32
    return %c0_i32, %c0_i32_0 : i32, i32
  }
  func.func @transform_12(%arg0: i32) -> (i32, i32) {
    %c0_i32 = arith.constant 0 : i32
    %c0_i32_0 = arith.constant 0 : i32
    %c0_i32_1 = arith.constant 0 : i32
    return %c0_i32, %c0_i32_0 : i32, i32
  }
  func.func @transform_13(%arg0: i32) -> (i32, i32) {
    %c0_i32 = arith.constant 0 : i32
    %c0_i32_0 = arith.constant 0 : i32
    %c0_i32_1 = arith.constant 0 : i32
    return %c0_i32, %c0_i32_0 : i32, i32
  }
  func.func @transform_14(%arg0: i32) -> (i32, i32) {
    %c0_i32 = arith.constant 0 : i32
    %c0_i32_0 = arith.constant 0 : i32
    return %arg0, %c0_i32 : i32, i32
  }
  func.func @transform_15(%arg0: i32) -> (i32, i32) {
    %c0_i32 = arith.constant 0 : i32
    %c0_i32_0 = arith.constant 0 : i32
    return %arg0, %c0_i32 : i32, i32
  }
}

</mosaic_0001>

<llo_original>
// kernel: tpu_custom_call.1
$region0: #{tpu_custom_call.1}
  #allocation0 [shape = 'u32[]', space=smem, size = 0x4, offset = 0x4, fixed_abs, tag = 'smem constant byte address 0x4 - core index']
  #allocation1 [shape = 'u32[144,128]{1,0:T(1,128)}', space=vmem, size = 0x12000, scoped, tag = 'internal scratch']
  %s0 = inlined_call_operand.vmem [shape: f32[2,784], index: 0, kind: input, shape index: {}]
  %s1 = inlined_call_operand.vmem [shape: f32[2,10], index: 1, kind: input, shape index: {}]
  %s2 = inlined_call_operand.vmem [shape: bf16[784,512], index: 2, kind: input, shape index: {}]
  %s3 = inlined_call_operand.vmem [shape: f32[1,512], index: 3, kind: input, shape index: {}]
  %s4 = inlined_call_operand.vmem [shape: bf16[512,512], index: 4, kind: input, shape index: {}]
  %s5 = inlined_call_operand.vmem [shape: f32[1,512], index: 5, kind: input, shape index: {}]
  %s6 = inlined_call_operand.vmem [shape: bf16[512,20], index: 6, kind: input, shape index: {}]
  %s7 = inlined_call_operand.vmem [shape: f32[1,20], index: 7, kind: input, shape index: {}]
  %s8 = inlined_call_operand.hbm [shape: f32[10,512], index: 8, kind: input, shape index: {}]
  %s9 = inlined_call_operand.vmem [shape: f32[1,512], index: 9, kind: input, shape index: {}]
  %s10 = inlined_call_operand.vmem [shape: bf16[512,512], index: 10, kind: input, shape index: {}]
  %s11 = inlined_call_operand.vmem [shape: f32[1,512], index: 11, kind: input, shape index: {}]
  %s12 = inlined_call_operand.vmem [shape: bf16[512,784], index: 12, kind: input, shape index: {}]
  %s13 = inlined_call_operand.vmem [shape: f32[1,784], index: 13, kind: input, shape index: {}]
  %s14 = inlined_call_operand.hbm [shape: f32[2,20], index: 14, kind: output, shape index: {0}]
  %s15 = inlined_call_operand.hbm [shape: bf16[2,784], index: 15, kind: output, shape index: {1}]
  %16 = xla_tuple %s14, %s15
  %s17 = sld [smem:[#allocation0]]
  $region78: #{tpu_custom_call.1} parent=0
    _
  %s19 = ssub.s32 1, %s17
  %s20 = scalar_select 0, %s19, %s17
  $region1: #{tpu_custom_call.1} parent=0
    #allocation2 [shape = 'u8[32768]{0}', space=vmem, size = 0x8000, scoped, tag = 'input window, operand 8, single buffered']
    #allocation3 [shape = 's32[1]{0}', space=sflag, size = 0x4, scoped, tag = 'scoped memory for tpu_custom_call.1']
    #allocation4 [shape = 's32[1]{0}', space=sflag, size = 0x4, scoped, tag = 'scoped memory for tpu_custom_call.1']
    #allocation5 [shape = 'u8[1024]{0}', space=vmem, size = 0x400, scoped, tag = 'output window, operand 0, single buffered']
    #allocation6 [shape = 'u8[3584]{0}', space=vmem, size = 0x1000, scoped, tag = 'output window, operand 1, single buffered']
    #allocation7 [shape = 's32[1]{0}', space=sflag, size = 0x4, scoped, tag = 'scoped memory for tpu_custom_call.1']
    %21 = vsyncpa [#allocation3], 0
    %22 = vsyncpa [#allocation4], 0
    %23 = vsyncpa [#allocation7], 0
    // Predicated region
    $region2: #{tpu_custom_call.1} parent=1 // pred_check
      _
    $region3: #{tpu_custom_call.1} parent=1 // pred_check_branch
      %25 = sbr.rel (0) target = $region5
    $region4: #{tpu_custom_call.1} parent=1 // pred_region
      _
    $region5: #{tpu_custom_call.1} parent=1 // pred_fallthru
      _
    // Predicated region
    $region6: #{tpu_custom_call.1} parent=1 // pred_check
      _
    $region7: #{tpu_custom_call.1} parent=1 // pred_check_branch
      %27 = sbr.rel (0) target = $region9
    $region8: #{tpu_custom_call.1} parent=1 // pred_region
      _
    $region9: #{tpu_custom_call.1} parent=1 // pred_fallthru
      _
    // Predicated region
    $region10: #{tpu_custom_call.1} parent=1 // pred_check
      _
    $region11: #{tpu_custom_call.1} parent=1 // pred_check_branch
      %29 = sbr.rel (0) target = $region13
    $region12: #{tpu_custom_call.1} parent=1 // pred_region
      _
    $region13: #{tpu_custom_call.1} parent=1 // pred_fallthru
      _
    // Predicated region
    $region14: #{tpu_custom_call.1} parent=1 // pred_check
      _
    $region15: #{tpu_custom_call.1} parent=1 // pred_check_branch
      %31 = sbr.rel (0) target = $region17
    $region16: #{tpu_custom_call.1} parent=1 // pred_region
      _
    $region17: #{tpu_custom_call.1} parent=1 // pred_fallthru
      _
    // Predicated region
    $region18: #{tpu_custom_call.1} parent=1 // pred_check
      _
    $region19: #{tpu_custom_call.1} parent=1 // pred_check_branch
      %33 = sbr.rel (0) target = $region21
    $region20: #{tpu_custom_call.1} parent=1 // pred_region
      _
    $region21: #{tpu_custom_call.1} parent=1 // pred_fallthru
      _
    // Predicated region
    $region22: #{tpu_custom_call.1} parent=1 // pred_check
      _
    $region23: #{tpu_custom_call.1} parent=1 // pred_check_branch
      %35 = sbr.rel (0) target = $region25
    $region24: #{tpu_custom_call.1} parent=1 // pred_region
      _
    $region25: #{tpu_custom_call.1} parent=1 // pred_fallthru
      _
    // Predicated region
    $region26: #{tpu_custom_call.1} parent=1 // pred_check
      _
    $region27: #{tpu_custom_call.1} parent=1 // pred_check_branch
      %37 = sbr.rel (0) target = $region29
    $region28: #{tpu_custom_call.1} parent=1 // pred_region
      _
    $region29: #{tpu_custom_call.1} parent=1 // pred_fallthru
      _
    // Predicated region
    $region30: #{tpu_custom_call.1} parent=1 // pred_check
      _
    $region31: #{tpu_custom_call.1} parent=1 // pred_check_branch
      %39 = sbr.rel (0) target = $region33
    $region32: #{tpu_custom_call.1} parent=1 // pred_region
      _
    $region33: #{tpu_custom_call.1} parent=1 // pred_fallthru
      _
    // Predicated region
    $region34: #{tpu_custom_call.1} parent=1 // pred_check
      _
    $region35: #{tpu_custom_call.1} parent=1 // pred_check_branch
      %41 = sbr.rel (0) target = $region37
    $region36: #{tpu_custom_call.1} parent=1 // pred_region
      %s43 = ssub.s32 1024, 1024
      %44 = vsyncadd [#allocation3], %s43
      %s45 = sshll.u32 [#allocation2], 4
      %s46 = int_to_ptr.vmem [resolvable:$true] %s45
      %51 = dma.hbm_to_vmem [thread:$0]  %s8, 1024, %s46, [#allocation3], 512, 512, 32
    $region37: #{tpu_custom_call.1} parent=1 // pred_fallthru
      _
    // Predicated region
    $region38: #{tpu_custom_call.1} parent=1 // pred_check
      _
    $region39: #{tpu_custom_call.1} parent=1 // pred_check_branch
      %53 = sbr.rel (0) target = $region41
    $region40: #{tpu_custom_call.1} parent=1 // pred_region
      _
    $region41: #{tpu_custom_call.1} parent=1 // pred_fallthru
      _
    // Predicated region
    $region42: #{tpu_custom_call.1} parent=1 // pred_check
      _
    $region43: #{tpu_custom_call.1} parent=1 // pred_check_branch
      %55 = sbr.rel (0) target = $region45
    $region44: #{tpu_custom_call.1} parent=1 // pred_region
      _
    $region45: #{tpu_custom_call.1} parent=1 // pred_fallthru
      _
    // Predicated region
    $region46: #{tpu_custom_call.1} parent=1 // pred_check
      _
    $region47: #{tpu_custom_call.1} parent=1 // pred_check_branch
      %57 = sbr.rel (0) target = $region49
    $region48: #{tpu_custom_call.1} parent=1 // pred_region
      _
    $region49: #{tpu_custom_call.1} parent=1 // pred_fallthru
      _
    // Predicated region
    $region50: #{tpu_custom_call.1} parent=1 // pred_check
      _
    $region51: #{tpu_custom_call.1} parent=1 // pred_check_branch
      %59 = sbr.rel (0) target = $region53
    $region52: #{tpu_custom_call.1} parent=1 // pred_region
      _
    $region53: #{tpu_custom_call.1} parent=1 // pred_fallthru
      _
    // Predicated region
    $region54: #{tpu_custom_call.1} parent=1 // pred_check
      _
    $region55: #{tpu_custom_call.1} parent=1 // pred_check_branch
      %61 = sbr.rel (0) target = $region57
    $region56: #{tpu_custom_call.1} parent=1 // pred_region
      _
    $region57: #{tpu_custom_call.1} parent=1 // pred_fallthru
      _
    // Predicated region
    $region58: #{tpu_custom_call.1} parent=1 // pred_check
      _
    $region59: #{tpu_custom_call.1} parent=1 // pred_check_branch
      %63 = sbr.rel (0) target = $region61
    $region60: #{tpu_custom_call.1} parent=1 // pred_region
      %64 = dma.done [#allocation3], 1024
    $region61: #{tpu_custom_call.1} parent=1 // pred_fallthru
      _
    %v66 = vld [vmem:[%s0] sm:$0xff]
    %v67 = vld [vmem:[%s0 + $0x8] sm:$0x3f]
    %v70 = vcombine.high %v66, %v66
    %v72 = vunpack.c.l.s4 1983009808
    %v73 = vunpack.c.0.s8 %v72
    %v74 = vlaneseq
    %v75 = vshrl.u32 %v74, 7
    %v76 = vsub.s32 %v73, %v75
    %v77 = vrot.slane %v66, %v76
    %v79 = vunpack.c.l.s4 1983009808
    %v80 = vunpack.c.0.s8 %v79
    %v81 = vlaneseq
    %v82 = vshrl.u32 %v81, 7
    %v83 = vsub.s32 %v80, %v82
    %v84 = vrot.slane %v70, %v83
    %v85 = vcombine.high %v77, %v77
    %v86 = vcombine.high %v84, %v84
    %v87 = vcombine.high %v67, %v67
    %v89 = vunpack.c.l.s4 1983009808
    %v90 = vunpack.c.0.s8 %v89
    %v91 = vlaneseq
    %v92 = vshrl.u32 %v91, 7
    %v93 = vsub.s32 %v90, %v92
    %v94 = vrot.slane %v67, %v93
    %v96 = vunpack.c.l.s4 1983009808
    %v97 = vunpack.c.0.s8 %v96
    %v98 = vlaneseq
    %v99 = vshrl.u32 %v98, 7
    %v100 = vsub.s32 %v97, %v99
    %v101 = vrot.slane %v87, %v100
    %v102 = vcombine.high %v94, %v94
    %v110 = vpack.c.bf16 %v77, %v77
    %v111 = vpack.c.bf16 %v85, %v85
    %v112 = vpack.c.bf16 %v84, %v84
    %v113 = vpack.c.bf16 %v86, %v86
    %v114 = vpack.c.bf16 %v94, %v94
    %v115 = vpack.c.bf16 %v102, %v102
    %v116 = vpack.c.bf16 %v101, %v101
    %v117 = vld [vmem:[%s2] sm:$0xff]
    %v118 = vld [vmem:[%s2 + $0x8] sm:$0xff]
    %v119 = vld [vmem:[%s2 + $0x10] sm:$0xff]
    %v120 = vld [vmem:[%s2 + $0x18] sm:$0xff]
    %v121 = vld [vmem:[%s2 + $0x20] sm:$0xff]
    %v122 = vld [vmem:[%s2 + $0x28] sm:$0xff]
    %v123 = vld [vmem:[%s2 + $0x30] sm:$0xff]
    %v124 = vld [vmem:[%s2 + $0x38] sm:$0xff]
    %v125 = vld [vmem:[%s2 + $0x40] sm:$0xff]
    %v126 = vld [vmem:[%s2 + $0x48] sm:$0xff]
    %v127 = vld [vmem:[%s2 + $0x50] sm:$0xff]
    %v128 = vld [vmem:[%s2 + $0x58] sm:$0xff]
    %v129 = vld [vmem:[%s2 + $0x60] sm:$0xff]
    %v130 = vld [vmem:[%s2 + $0x68] sm:$0xff]
    %v131 = vld [vmem:[%s2 + $0x70] sm:$0xff]
    %v132 = vld [vmem:[%s2 + $0x78] sm:$0xff]
    %v133 = vld [vmem:[%s2 + $0x80] sm:$0xff]
    %v134 = vld [vmem:[%s2 + $0x88] sm:$0xff]
    %v135 = vld [vmem:[%s2 + $0x90] sm:$0xff]
    %v136 = vld [vmem:[%s2 + $0x98] sm:$0xff]
    %v137 = vld [vmem:[%s2 + $0xa0] sm:$0xff]
    %v138 = vld [vmem:[%s2 + $0xa8] sm:$0xff]
    %v139 = vld [vmem:[%s2 + $0xb0] sm:$0xff]
    %v140 = vld [vmem:[%s2 + $0xb8] sm:$0xff]
    %v141 = vld [vmem:[%s2 + $0xc0] sm:$0xff]
    %v142 = vld [vmem:[%s2 + $0xc8] sm:$0xff]
    %v143 = vld [vmem:[%s2 + $0xd0] sm:$0xff]
    %v144 = vld [vmem:[%s2 + $0xd8] sm:$0xff]
    %v145 = vld [vmem:[%s2 + $0xe0] sm:$0xff]
    %v146 = vld [vmem:[%s2 + $0xe8] sm:$0xff]
    %v147 = vld [vmem:[%s2 + $0xf0] sm:$0xff]
    %v148 = vld [vmem:[%s2 + $0xf8] sm:$0xff]
    %v149 = vld [vmem:[%s2 + $0x100] sm:$0xff]
    %v150 = vld [vmem:[%s2 + $0x108] sm:$0xff]
    %v151 = vld [vmem:[%s2 + $0x110] sm:$0xff]
    %v152 = vld [vmem:[%s2 + $0x118] sm:$0xff]
    %v153 = vld [vmem:[%s2 + $0x120] sm:$0xff]
    %v154 = vld [vmem:[%s2 + $0x128] sm:$0xff]
    %v155 = vld [vmem:[%s2 + $0x130] sm:$0xff]
    %v156 = vld [vmem:[%s2 + $0x138] sm:$0xff]
    %v157 = vld [vmem:[%s2 + $0x140] sm:$0xff]
    %v158 = vld [vmem:[%s2 + $0x148] sm:$0xff]
    %v159 = vld [vmem:[%s2 + $0x150] sm:$0xff]
    %v160 = vld [vmem:[%s2 + $0x158] sm:$0xff]
    %v161 = vld [vmem:[%s2 + $0x160] sm:$0xff]
    %v162 = vld [vmem:[%s2 + $0x168] sm:$0xff]
    %v163 = vld [vmem:[%s2 + $0x170] sm:$0xff]
    %v164 = vld [vmem:[%s2 + $0x178] sm:$0xff]
    %v165 = vld [vmem:[%s2 + $0x180] sm:$0xff]
    %v166 = vld [vmem:[%s2 + $0x188] sm:$0xff]
    %v167 = vld [vmem:[%s2 + $0x190] sm:$0xff]
    %v168 = vld [vmem:[%s2 + $0x198] sm:$0xff]
    %v169 = vld [vmem:[%s2 + $0x1a0] sm:$0xff]
    %v170 = vld [vmem:[%s2 + $0x1a8] sm:$0xff]
    %v171 = vld [vmem:[%s2 + $0x1b0] sm:$0xff]
    %v172 = vld [vmem:[%s2 + $0x1b8] sm:$0xff]
    %v173 = vld [vmem:[%s2 + $0x1c0] sm:$0xff]
    %v174 = vld [vmem:[%s2 + $0x1c8] sm:$0xff]
    %v175 = vld [vmem:[%s2 + $0x1d0] sm:$0xff]
    %v176 = vld [vmem:[%s2 + $0x1d8] sm:$0xff]
    %v177 = vld [vmem:[%s2 + $0x1e0] sm:$0xff]
    %v178 = vld [vmem:[%s2 + $0x1e8] sm:$0xff]
    %v179 = vld [vmem:[%s2 + $0x1f0] sm:$0xff]
    %v180 = vld [vmem:[%s2 + $0x1f8] sm:$0xff]
    %v181 = vld [vmem:[%s2 + $0x200] sm:$0xff]
    %v182 = vld [vmem:[%s2 + $0x208] sm:$0xff]
    %v183 = vld [vmem:[%s2 + $0x210] sm:$0xff]
    %v184 = vld [vmem:[%s2 + $0x218] sm:$0xff]
    %v185 = vld [vmem:[%s2 + $0x220] sm:$0xff]
    %v186 = vld [vmem:[%s2 + $0x228] sm:$0xff]
    %v187 = vld [vmem:[%s2 + $0x230] sm:$0xff]
    %v188 = vld [vmem:[%s2 + $0x238] sm:$0xff]
    %v189 = vld [vmem:[%s2 + $0x240] sm:$0xff]
    %v190 = vld [vmem:[%s2 + $0x248] sm:$0xff]
    %v191 = vld [vmem:[%s2 + $0x250] sm:$0xff]
    %v192 = vld [vmem:[%s2 + $0x258] sm:$0xff]
    %v193 = vld [vmem:[%s2 + $0x260] sm:$0xff]
    %v194 = vld [vmem:[%s2 + $0x268] sm:$0xff]
    %v195 = vld [vmem:[%s2 + $0x270] sm:$0xff]
    %v196 = vld [vmem:[%s2 + $0x278] sm:$0xff]
    %v197 = vld [vmem:[%s2 + $0x280] sm:$0xff]
    %v198 = vld [vmem:[%s2 + $0x288] sm:$0xff]
    %v199 = vld [vmem:[%s2 + $0x290] sm:$0xff]
    %v200 = vld [vmem:[%s2 + $0x298] sm:$0xff]
    %v201 = vld [vmem:[%s2 + $0x2a0] sm:$0xff]
    %v202 = vld [vmem:[%s2 + $0x2a8] sm:$0xff]
    %v203 = vld [vmem:[%s2 + $0x2b0] sm:$0xff]
    %v204 = vld [vmem:[%s2 + $0x2b8] sm:$0xff]
    %v205 = vld [vmem:[%s2 + $0x2c0] sm:$0xff]
    %v206 = vld [vmem:[%s2 + $0x2c8] sm:$0xff]
    %v207 = vld [vmem:[%s2 + $0x2d0] sm:$0xff]
    %v208 = vld [vmem:[%s2 + $0x2d8] sm:$0xff]
    %v209 = vld [vmem:[%s2 + $0x2e0] sm:$0xff]
    %v210 = vld [vmem:[%s2 + $0x2e8] sm:$0xff]
    %v211 = vld [vmem:[%s2 + $0x2f0] sm:$0xff]
    %v212 = vld [vmem:[%s2 + $0x2f8] sm:$0xff]
    %v213 = vld [vmem:[%s2 + $0x300] sm:$0xff]
    %v214 = vld [vmem:[%s2 + $0x308] sm:$0xff]
    %v215 = vld [vmem:[%s2 + $0x310] sm:$0xff]
    %v216 = vld [vmem:[%s2 + $0x318] sm:$0xff]
    %v217 = vld [vmem:[%s2 + $0x320] sm:$0xff]
    %v218 = vld [vmem:[%s2 + $0x328] sm:$0xff]
    %v219 = vld [vmem:[%s2 + $0x330] sm:$0xff]
    %v220 = vld [vmem:[%s2 + $0x338] sm:$0xff]
    %v221 = vld [vmem:[%s2 + $0x340] sm:$0xff]
    %v222 = vld [vmem:[%s2 + $0x348] sm:$0xff]
    %v223 = vld [vmem:[%s2 + $0x350] sm:$0xff]
    %v224 = vld [vmem:[%s2 + $0x358] sm:$0xff]
    %v225 = vld [vmem:[%s2 + $0x360] sm:$0xff]
    %v226 = vld [vmem:[%s2 + $0x368] sm:$0xff]
    %v227 = vld [vmem:[%s2 + $0x370] sm:$0xff]
    %v228 = vld [vmem:[%s2 + $0x378] sm:$0xff]
    %v229 = vld [vmem:[%s2 + $0x380] sm:$0xff]
    %v230 = vld [vmem:[%s2 + $0x388] sm:$0xff]
    %v231 = vld [vmem:[%s2 + $0x390] sm:$0xff]
    %v232 = vld [vmem:[%s2 + $0x398] sm:$0xff]
    %v233 = vld [vmem:[%s2 + $0x3a0] sm:$0xff]
    %v234 = vld [vmem:[%s2 + $0x3a8] sm:$0xff]
    %v235 = vld [vmem:[%s2 + $0x3b0] sm:$0xff]
    %v236 = vld [vmem:[%s2 + $0x3b8] sm:$0xff]
    %v237 = vld [vmem:[%s2 + $0x3c0] sm:$0xff]
    %v238 = vld [vmem:[%s2 + $0x3c8] sm:$0xff]
    %v239 = vld [vmem:[%s2 + $0x3d0] sm:$0xff]
    %v240 = vld [vmem:[%s2 + $0x3d8] sm:$0xff]
    %v241 = vld [vmem:[%s2 + $0x3e0] sm:$0xff]
    %v242 = vld [vmem:[%s2 + $0x3e8] sm:$0xff]
    %v243 = vld [vmem:[%s2 + $0x3f0] sm:$0xff]
    %v244 = vld [vmem:[%s2 + $0x3f8] sm:$0xff]
    %v245 = vld [vmem:[%s2 + $0x400] sm:$0xff]
    %v246 = vld [vmem:[%s2 + $0x408] sm:$0xff]
    %v247 = vld [vmem:[%s2 + $0x410] sm:$0xff]
    %v248 = vld [vmem:[%s2 + $0x418] sm:$0xff]
    %v249 = vld [vmem:[%s2 + $0x420] sm:$0xff]
    %v250 = vld [vmem:[%s2 + $0x428] sm:$0xff]
    %v251 = vld [vmem:[%s2 + $0x430] sm:$0xff]
    %v252 = vld [vmem:[%s2 + $0x438] sm:$0xff]
    %v253 = vld [vmem:[%s2 + $0x440] sm:$0xff]
    %v254 = vld [vmem:[%s2 + $0x448] sm:$0xff]
    %v255 = vld [vmem:[%s2 + $0x450] sm:$0xff]
    %v256 = vld [vmem:[%s2 + $0x458] sm:$0xff]
    %v257 = vld [vmem:[%s2 + $0x460] sm:$0xff]
    %v258 = vld [vmem:[%s2 + $0x468] sm:$0xff]
    %v259 = vld [vmem:[%s2 + $0x470] sm:$0xff]
    %v260 = vld [vmem:[%s2 + $0x478] sm:$0xff]
    %v261 = vld [vmem:[%s2 + $0x480] sm:$0xff]
    %v262 = vld [vmem:[%s2 + $0x488] sm:$0xff]
    %v263 = vld [vmem:[%s2 + $0x490] sm:$0xff]
    %v264 = vld [vmem:[%s2 + $0x498] sm:$0xff]
    %v265 = vld [vmem:[%s2 + $0x4a0] sm:$0xff]
    %v266 = vld [vmem:[%s2 + $0x4a8] sm:$0xff]
    %v267 = vld [vmem:[%s2 + $0x4b0] sm:$0xff]
    %v268 = vld [vmem:[%s2 + $0x4b8] sm:$0xff]
    %v269 = vld [vmem:[%s2 + $0x4c0] sm:$0xff]
    %v270 = vld [vmem:[%s2 + $0x4c8] sm:$0xff]
    %v271 = vld [vmem:[%s2 + $0x4d0] sm:$0xff]
    %v272 = vld [vmem:[%s2 + $0x4d8] sm:$0xff]
    %v273 = vld [vmem:[%s2 + $0x4e0] sm:$0xff]
    %v274 = vld [vmem:[%s2 + $0x4e8] sm:$0xff]
    %v275 = vld [vmem:[%s2 + $0x4f0] sm:$0xff]
    %v276 = vld [vmem:[%s2 + $0x4f8] sm:$0xff]
    %v277 = vld [vmem:[%s2 + $0x500] sm:$0xff]
    %v278 = vld [vmem:[%s2 + $0x508] sm:$0xff]
    %v279 = vld [vmem:[%s2 + $0x510] sm:$0xff]
    %v280 = vld [vmem:[%s2 + $0x518] sm:$0xff]
    %v281 = vld [vmem:[%s2 + $0x520] sm:$0xff]
    %v282 = vld [vmem:[%s2 + $0x528] sm:$0xff]
    %v283 = vld [vmem:[%s2 + $0x530] sm:$0xff]
    %v284 = vld [vmem:[%s2 + $0x538] sm:$0xff]
    %v285 = vld [vmem:[%s2 + $0x540] sm:$0xff]
    %v286 = vld [vmem:[%s2 + $0x548] sm:$0xff]
    %v287 = vld [vmem:[%s2 + $0x550] sm:$0xff]
    %v288 = vld [vmem:[%s2 + $0x558] sm:$0xff]
    %v289 = vld [vmem:[%s2 + $0x560] sm:$0xff]
    %v290 = vld [vmem:[%s2 + $0x568] sm:$0xff]
    %v291 = vld [vmem:[%s2 + $0x570] sm:$0xff]
    %v292 = vld [vmem:[%s2 + $0x578] sm:$0xff]
    %v293 = vld [vmem:[%s2 + $0x580] sm:$0xff]
    %v294 = vld [vmem:[%s2 + $0x588] sm:$0xff]
    %v295 = vld [vmem:[%s2 + $0x590] sm:$0xff]
    %v296 = vld [vmem:[%s2 + $0x598] sm:$0xff]
    %v297 = vld [vmem:[%s2 + $0x5a0] sm:$0xff]
    %v298 = vld [vmem:[%s2 + $0x5a8] sm:$0xff]
    %v299 = vld [vmem:[%s2 + $0x5b0] sm:$0xff]
    %v300 = vld [vmem:[%s2 + $0x5b8] sm:$0xff]
    %v301 = vld [vmem:[%s2 + $0x5c0] sm:$0xff]
    %v302 = vld [vmem:[%s2 + $0x5c8] sm:$0xff]
    %v303 = vld [vmem:[%s2 + $0x5d0] sm:$0xff]
    %v304 = vld [vmem:[%s2 + $0x5d8] sm:$0xff]
    %v305 = vld [vmem:[%s2 + $0x5e0] sm:$0xff]
    %v306 = vld [vmem:[%s2 + $0x5e8] sm:$0xff]
    %v307 = vld [vmem:[%s2 + $0x5f0] sm:$0xff]
    %v308 = vld [vmem:[%s2 + $0x5f8] sm:$0xff]
    %v309 = vld [vmem:[%s2 + $0x600] sm:$0xff]
    %v310 = vld [vmem:[%s2 + $0x608] sm:$0xff]
    %v311 = vld [vmem:[%s2 + $0x610] sm:$0xff]
    %v312 = vld [vmem:[%s2 + $0x618] sm:$0xff]
    %v313 = vld [vmem:[%s3] sm:$0xf]
    %v315 = vlaneseq
    %v316 = vshrl.u32 %v315, 7
    %v317 = vsub.s32 0, %v316
    %v318 = vrot.slane %v313, %v317
    %v319 = vlaneseq
    %v320 = vshrl.u32 %v319, 7
    %v321 = vsub.s32 1, %v320
    %v322 = vrot.slane %v313, %v321
    %v323 = vlaneseq
    %v324 = vshrl.u32 %v323, 7
    %v325 = vsub.s32 2, %v324
    %v326 = vrot.slane %v313, %v325
    %v327 = vlaneseq
    %v328 = vshrl.u32 %v327, 7
    %v329 = vsub.s32 3, %v328
    %v330 = vrot.slane %v313, %v329
    %v531 = vunpack.c.l.b16 %v117
    %v532 = vunpack.c.h.b16 %v117
    %v533 = vunpack.c.l.b16 %v118
    %v534 = vunpack.c.h.b16 %v118
    %v535 = vunpack.c.l.b16 %v119
    %v536 = vunpack.c.h.b16 %v119
    %v537 = vunpack.c.l.b16 %v120
    %v538 = vunpack.c.h.b16 %v120
    %v539 = vunpack.c.l.b16 %v121
    %v540 = vunpack.c.h.b16 %v121
    %v541 = vunpack.c.l.b16 %v122
    %v542 = vunpack.c.h.b16 %v122
    %v543 = vunpack.c.l.b16 %v123
    %v544 = vunpack.c.h.b16 %v123
    %v545 = vunpack.c.l.b16 %v124
    %v546 = vunpack.c.h.b16 %v124
    %v547 = vunpack.c.l.b16 %v125
    %v548 = vunpack.c.h.b16 %v125
    %v549 = vunpack.c.l.b16 %v126
    %v550 = vunpack.c.h.b16 %v126
    %v551 = vunpack.c.l.b16 %v127
    %v552 = vunpack.c.h.b16 %v127
    %v553 = vunpack.c.l.b16 %v128
    %v554 = vunpack.c.h.b16 %v128
    %v555 = vunpack.c.l.b16 %v129
    %v556 = vunpack.c.h.b16 %v129
    %v557 = vunpack.c.l.b16 %v130
    %v558 = vunpack.c.h.b16 %v130
    %v559 = vunpack.c.l.b16 %v131
    %v560 = vunpack.c.h.b16 %v131
    %v561 = vunpack.c.l.b16 %v132
    %v562 = vunpack.c.h.b16 %v132
    %v563 = vunpack.c.l.b16 %v133
    %v564 = vunpack.c.h.b16 %v133
    %v565 = vunpack.c.l.b16 %v134
    %v566 = vunpack.c.h.b16 %v134
    %v567 = vunpack.c.l.b16 %v135
    %v568 = vunpack.c.h.b16 %v135
    %v569 = vunpack.c.l.b16 %v136
    %v570 = vunpack.c.h.b16 %v136
    %v571 = vunpack.c.l.b16 %v137
    %v572 = vunpack.c.h.b16 %v137
    %v573 = vunpack.c.l.b16 %v138
    %v574 = vunpack.c.h.b16 %v138
    %v575 = vunpack.c.l.b16 %v139
    %v576 = vunpack.c.h.b16 %v139
    %v577 = vunpack.c.l.b16 %v140
    %v578 = vunpack.c.h.b16 %v140
    %v579 = vunpack.c.l.b16 %v141
    %v580 = vunpack.c.h.b16 %v141
    %v581 = vunpack.c.l.b16 %v142
    %v582 = vunpack.c.h.b16 %v142
    %v583 = vunpack.c.l.b16 %v143
    %v584 = vunpack.c.h.b16 %v143
    %v585 = vunpack.c.l.b16 %v144
    %v586 = vunpack.c.h.b16 %v144
    %v587 = vunpack.c.l.b16 %v145
    %v588 = vunpack.c.h.b16 %v145
    %v589 = vunpack.c.l.b16 %v146
    %v590 = vunpack.c.h.b16 %v146
    %v591 = vunpack.c.l.b16 %v147
    %v592 = vunpack.c.h.b16 %v147
    %v593 = vunpack.c.l.b16 %v148
    %v594 = vunpack.c.h.b16 %v148
    %v595 = vunpack.c.l.b16 %v149
    %v596 = vunpack.c.h.b16 %v149
    %v597 = vunpack.c.l.b16 %v150
    %v598 = vunpack.c.h.b16 %v150
    %v599 = vunpack.c.l.b16 %v151
    %v600 = vunpack.c.h.b16 %v151
    %v601 = vunpack.c.l.b16 %v152
    %v602 = vunpack.c.h.b16 %v152
    %v603 = vunpack.c.l.b16 %v153
    %v604 = vunpack.c.h.b16 %v153
    %v605 = vunpack.c.l.b16 %v154
    %v606 = vunpack.c.h.b16 %v154
    %v607 = vunpack.c.l.b16 %v155
    %v608 = vunpack.c.h.b16 %v155
    %v609 = vunpack.c.l.b16 %v156
    %v610 = vunpack.c.h.b16 %v156
    %v611 = vunpack.c.l.b16 %v157
    %v612 = vunpack.c.h.b16 %v157
    %v613 = vunpack.c.l.b16 %v158
    %v614 = vunpack.c.h.b16 %v158
    %v615 = vunpack.c.l.b16 %v159
    %v616 = vunpack.c.h.b16 %v159
    %v617 = vunpack.c.l.b16 %v160
    %v618 = vunpack.c.h.b16 %v160
    %v619 = vunpack.c.l.b16 %v161
    %v620 = vunpack.c.h.b16 %v161
    %v621 = vunpack.c.l.b16 %v162
    %v622 = vunpack.c.h.b16 %v162
    %v623 = vunpack.c.l.b16 %v163
    %v624 = vunpack.c.h.b16 %v163
    %v625 = vunpack.c.l.b16 %v164
    %v626 = vunpack.c.h.b16 %v164
    %v627 = vunpack.c.l.b16 %v165
    %v628 = vunpack.c.h.b16 %v165
    %v629 = vunpack.c.l.b16 %v166
    %v630 = vunpack.c.h.b16 %v166
    %v631 = vunpack.c.l.b16 %v167
    %v632 = vunpack.c.h.b16 %v167
    %v633 = vunpack.c.l.b16 %v168
    %v634 = vunpack.c.h.b16 %v168
    %v635 = vunpack.c.l.b16 %v169
    %v636 = vunpack.c.h.b16 %v169
    %v637 = vunpack.c.l.b16 %v170
    %v638 = vunpack.c.h.b16 %v170
    %v639 = vunpack.c.l.b16 %v171
    %v640 = vunpack.c.h.b16 %v171
    %v641 = vunpack.c.l.b16 %v172
    %v642 = vunpack.c.h.b16 %v172
    %v643 = vunpack.c.l.b16 %v173
    %v644 = vunpack.c.h.b16 %v173
    %v645 = vunpack.c.l.b16 %v174
    %v646 = vunpack.c.h.b16 %v174
    %v647 = vunpack.c.l.b16 %v175
    %v648 = vunpack.c.h.b16 %v175
    %v649 = vunpack.c.l.b16 %v176
    %v650 = vunpack.c.h.b16 %v176
    %v651 = vunpack.c.l.b16 %v177
    %v652 = vunpack.c.h.b16 %v177
    %v653 = vunpack.c.l.b16 %v178
    %v654 = vunpack.c.h.b16 %v178
    %v655 = vunpack.c.l.b16 %v179
    %v656 = vunpack.c.h.b16 %v179
    %v657 = vunpack.c.l.b16 %v180
    %v658 = vunpack.c.h.b16 %v180
    %v659 = vunpack.c.l.b16 %v181
    %v660 = vunpack.c.h.b16 %v181
    %v661 = vunpack.c.l.b16 %v182
    %v662 = vunpack.c.h.b16 %v182
    %v663 = vunpack.c.l.b16 %v183
    %v664 = vunpack.c.h.b16 %v183
    %v665 = vunpack.c.l.b16 %v184
    %v666 = vunpack.c.h.b16 %v184
    %v667 = vunpack.c.l.b16 %v185
    %v668 = vunpack.c.h.b16 %v185
    %v669 = vunpack.c.l.b16 %v186
    %v670 = vunpack.c.h.b16 %v186
    %v671 = vunpack.c.l.b16 %v187
    %v672 = vunpack.c.h.b16 %v187
    %v673 = vunpack.c.l.b16 %v188
    %v674 = vunpack.c.h.b16 %v188
    %v675 = vunpack.c.l.b16 %v189
    %v676 = vunpack.c.h.b16 %v189
    %v677 = vunpack.c.l.b16 %v190
    %v678 = vunpack.c.h.b16 %v190
    %v679 = vunpack.c.l.b16 %v191
    %v680 = vunpack.c.h.b16 %v191
    %v681 = vunpack.c.l.b16 %v192
    %v682 = vunpack.c.h.b16 %v192
    %v683 = vunpack.c.l.b16 %v193
    %v684 = vunpack.c.h.b16 %v193
    %v685 = vunpack.c.l.b16 %v194
    %v686 = vunpack.c.h.b16 %v194
    %v687 = vunpack.c.l.b16 %v195
    %v688 = vunpack.c.h.b16 %v195
    %v689 = vunpack.c.l.b16 %v196
    %v690 = vunpack.c.h.b16 %v196
    %v691 = vunpack.c.l.b16 %v197
    %v692 = vunpack.c.h.b16 %v197
    %v693 = vunpack.c.l.b16 %v198
    %v694 = vunpack.c.h.b16 %v198
    %v695 = vunpack.c.l.b16 %v199
    %v696 = vunpack.c.h.b16 %v199
    %v697 = vunpack.c.l.b16 %v200
    %v698 = vunpack.c.h.b16 %v200
    %v699 = vunpack.c.l.b16 %v201
    %v700 = vunpack.c.h.b16 %v201
    %v701 = vunpack.c.l.b16 %v202
    %v702 = vunpack.c.h.b16 %v202
    %v703 = vunpack.c.l.b16 %v203
    %v704 = vunpack.c.h.b16 %v203
    %v705 = vunpack.c.l.b16 %v204
    %v706 = vunpack.c.h.b16 %v204
    %v707 = vunpack.c.l.b16 %v205
    %v708 = vunpack.c.h.b16 %v205
    %v709 = vunpack.c.l.b16 %v206
    %v710 = vunpack.c.h.b16 %v206
    %v711 = vunpack.c.l.b16 %v207
    %v712 = vunpack.c.h.b16 %v207
    %v713 = vunpack.c.l.b16 %v208
    %v714 = vunpack.c.h.b16 %v208
    %v715 = vunpack.c.l.b16 %v209
    %v716 = vunpack.c.h.b16 %v209
    %v717 = vunpack.c.l.b16 %v210
    %v718 = vunpack.c.h.b16 %v210
    %v719 = vunpack.c.l.b16 %v211
    %v720 = vunpack.c.h.b16 %v211
    %v721 = vunpack.c.l.b16 %v212
    %v722 = vunpack.c.h.b16 %v212
    %v723 = vunpack.c.l.b16 %v213
    %v724 = vunpack.c.h.b16 %v213
    %v725 = vunpack.c.l.b16 %v214
    %v726 = vunpack.c.h.b16 %v214
    %v727 = vunpack.c.l.b16 %v215
    %v728 = vunpack.c.h.b16 %v215
    %v729 = vunpack.c.l.b16 %v216
    %v730 = vunpack.c.h.b16 %v216
    %v731 = vunpack.c.l.b16 %v217
    %v732 = vunpack.c.h.b16 %v217
    %v733 = vunpack.c.l.b16 %v218
    %v734 = vunpack.c.h.b16 %v218
    %v735 = vunpack.c.l.b16 %v219
    %v736 = vunpack.c.h.b16 %v219
    %v737 = vunpack.c.l.b16 %v220
    %v738 = vunpack.c.h.b16 %v220
    %v739 = vunpack.c.l.b16 %v221
    %v740 = vunpack.c.h.b16 %v221
    %v741 = vunpack.c.l.b16 %v222
    %v742 = vunpack.c.h.b16 %v222
    %v743 = vunpack.c.l.b16 %v223
    %v744 = vunpack.c.h.b16 %v223
    %v745 = vunpack.c.l.b16 %v224
    %v746 = vunpack.c.h.b16 %v224
    %v747 = vunpack.c.l.b16 %v225
    %v748 = vunpack.c.h.b16 %v225
    %v749 = vunpack.c.l.b16 %v226
    %v750 = vunpack.c.h.b16 %v226
    %v751 = vunpack.c.l.b16 %v227
    %v752 = vunpack.c.h.b16 %v227
    %v753 = vunpack.c.l.b16 %v228
    %v754 = vunpack.c.h.b16 %v228
    %v755 = vunpack.c.l.b16 %v229
    %v756 = vunpack.c.h.b16 %v229
    %v757 = vunpack.c.l.b16 %v230
    %v758 = vunpack.c.h.b16 %v230
    %v759 = vunpack.c.l.b16 %v231
    %v760 = vunpack.c.h.b16 %v231
    %v761 = vunpack.c.l.b16 %v232
    %v762 = vunpack.c.h.b16 %v232
    %v763 = vunpack.c.l.b16 %v233
    %v764 = vunpack.c.h.b16 %v233
    %v765 = vunpack.c.l.b16 %v234
    %v766 = vunpack.c.h.b16 %v234
    %v767 = vunpack.c.l.b16 %v235
    %v768 = vunpack.c.h.b16 %v235
    %v769 = vunpack.c.l.b16 %v236
    %v770 = vunpack.c.h.b16 %v236
    %v771 = vunpack.c.l.b16 %v237
    %v772 = vunpack.c.h.b16 %v237
    %v773 = vunpack.c.l.b16 %v238
    %v774 = vunpack.c.h.b16 %v238
    %v775 = vunpack.c.l.b16 %v239
    %v776 = vunpack.c.h.b16 %v239
    %v777 = vunpack.c.l.b16 %v240
    %v778 = vunpack.c.h.b16 %v240
    %v779 = vunpack.c.l.b16 %v241
    %v780 = vunpack.c.h.b16 %v241
    %v781 = vunpack.c.l.b16 %v242
    %v782 = vunpack.c.h.b16 %v242
    %v783 = vunpack.c.l.b16 %v243
    %v784 = vunpack.c.h.b16 %v243
    %v785 = vunpack.c.l.b16 %v244
    %v786 = vunpack.c.h.b16 %v244
    %v787 = vunpack.c.l.b16 %v245
    %v788 = vunpack.c.h.b16 %v245
    %v789 = vunpack.c.l.b16 %v246
    %v790 = vunpack.c.h.b16 %v246
    %v791 = vunpack.c.l.b16 %v247
    %v792 = vunpack.c.h.b16 %v247
    %v793 = vunpack.c.l.b16 %v248
    %v794 = vunpack.c.h.b16 %v248
    %v795 = vunpack.c.l.b16 %v249
    %v796 = vunpack.c.h.b16 %v249
    %v797 = vunpack.c.l.b16 %v250
    %v798 = vunpack.c.h.b16 %v250
    %v799 = vunpack.c.l.b16 %v251
    %v800 = vunpack.c.h.b16 %v251
    %v801 = vunpack.c.l.b16 %v252
    %v802 = vunpack.c.h.b16 %v252
    %v803 = vunpack.c.l.b16 %v253
    %v804 = vunpack.c.h.b16 %v253
    %v805 = vunpack.c.l.b16 %v254
    %v806 = vunpack.c.h.b16 %v254
    %v807 = vunpack.c.l.b16 %v255
    %v808 = vunpack.c.h.b16 %v255
    %v809 = vunpack.c.l.b16 %v256
    %v810 = vunpack.c.h.b16 %v256
    %v811 = vunpack.c.l.b16 %v257
    %v812 = vunpack.c.h.b16 %v257
    %v813 = vunpack.c.l.b16 %v258
    %v814 = vunpack.c.h.b16 %v258
    %v815 = vunpack.c.l.b16 %v259
    %v816 = vunpack.c.h.b16 %v259
    %v817 = vunpack.c.l.b16 %v260
    %v818 = vunpack.c.h.b16 %v260
    %v819 = vunpack.c.l.b16 %v261
    %v820 = vunpack.c.h.b16 %v261
    %v821 = vunpack.c.l.b16 %v262
    %v822 = vunpack.c.h.b16 %v262
    %v823 = vunpack.c.l.b16 %v263
    %v824 = vunpack.c.h.b16 %v263
    %v825 = vunpack.c.l.b16 %v264
    %v826 = vunpack.c.h.b16 %v264
    %v827 = vunpack.c.l.b16 %v265
    %v828 = vunpack.c.h.b16 %v265
    %v829 = vunpack.c.l.b16 %v266
    %v830 = vunpack.c.h.b16 %v266
    %v831 = vunpack.c.l.b16 %v267
    %v832 = vunpack.c.h.b16 %v267
    %v833 = vunpack.c.l.b16 %v268
    %v834 = vunpack.c.h.b16 %v268
    %v835 = vunpack.c.l.b16 %v269
    %v836 = vunpack.c.h.b16 %v269
    %v837 = vunpack.c.l.b16 %v270
    %v838 = vunpack.c.h.b16 %v270
    %v839 = vunpack.c.l.b16 %v271
    %v840 = vunpack.c.h.b16 %v271
    %v841 = vunpack.c.l.b16 %v272
    %v842 = vunpack.c.h.b16 %v272
    %v843 = vunpack.c.l.b16 %v273
    %v844 = vunpack.c.h.b16 %v273
    %v845 = vunpack.c.l.b16 %v274
    %v846 = vunpack.c.h.b16 %v274
    %v847 = vunpack.c.l.b16 %v275
    %v848 = vunpack.c.h.b16 %v275
    %v849 = vunpack.c.l.b16 %v276
    %v850 = vunpack.c.h.b16 %v276
    %v851 = vunpack.c.l.b16 %v277
    %v852 = vunpack.c.h.b16 %v277
    %v853 = vunpack.c.l.b16 %v278
    %v854 = vunpack.c.h.b16 %v278
    %v855 = vunpack.c.l.b16 %v279
    %v856 = vunpack.c.h.b16 %v279
    %v857 = vunpack.c.l.b16 %v280
    %v858 = vunpack.c.h.b16 %v280
    %v859 = vunpack.c.l.b16 %v281
    %v860 = vunpack.c.h.b16 %v281
    %v861 = vunpack.c.l.b16 %v282
    %v862 = vunpack.c.h.b16 %v282
    %v863 = vunpack.c.l.b16 %v283
    %v864 = vunpack.c.h.b16 %v283
    %v865 = vunpack.c.l.b16 %v284
    %v866 = vunpack.c.h.b16 %v284
    %v867 = vunpack.c.l.b16 %v285
    %v868 = vunpack.c.h.b16 %v285
    %v869 = vunpack.c.l.b16 %v286
    %v870 = vunpack.c.h.b16 %v286
    %v871 = vunpack.c.l.b16 %v287
    %v872 = vunpack.c.h.b16 %v287
    %v873 = vunpack.c.l.b16 %v288
    %v874 = vunpack.c.h.b16 %v288
    %v875 = vunpack.c.l.b16 %v289
    %v876 = vunpack.c.h.b16 %v289
    %v877 = vunpack.c.l.b16 %v290
    %v878 = vunpack.c.h.b16 %v290
    %v879 = vunpack.c.l.b16 %v291
    %v880 = vunpack.c.h.b16 %v291
    %v881 = vunpack.c.l.b16 %v292
    %v882 = vunpack.c.h.b16 %v292
    %v883 = vunpack.c.l.b16 %v293
    %v884 = vunpack.c.h.b16 %v293
    %v885 = vunpack.c.l.b16 %v294
    %v886 = vunpack.c.h.b16 %v294
    %v887 = vunpack.c.l.b16 %v295
    %v888 = vunpack.c.h.b16 %v295
    %v889 = vunpack.c.l.b16 %v296
    %v890 = vunpack.c.h.b16 %v296
    %v891 = vunpack.c.l.b16 %v297
    %v892 = vunpack.c.h.b16 %v297
    %v893 = vunpack.c.l.b16 %v298
    %v894 = vunpack.c.h.b16 %v298
    %v895 = vunpack.c.l.b16 %v299
    %v896 = vunpack.c.h.b16 %v299
    %v897 = vunpack.c.l.b16 %v300
    %v898 = vunpack.c.h.b16 %v300
    %v899 = vunpack.c.l.b16 %v301
    %v900 = vunpack.c.h.b16 %v301
    %v901 = vunpack.c.l.b16 %v302
    %v902 = vunpack.c.h.b16 %v302
    %v903 = vunpack.c.l.b16 %v303
    %v904 = vunpack.c.h.b16 %v303
    %v905 = vunpack.c.l.b16 %v304
    %v906 = vunpack.c.h.b16 %v304
    %v907 = vunpack.c.l.b16 %v305
    %v908 = vunpack.c.h.b16 %v305
    %v909 = vunpack.c.l.b16 %v306
    %v910 = vunpack.c.h.b16 %v306
    %v911 = vunpack.c.l.b16 %v307
    %v912 = vunpack.c.h.b16 %v307
    %v913 = vunpack.c.l.b16 %v308
    %v914 = vunpack.c.h.b16 %v308
    %v915 = vunpack.c.l.b16 %v309
    %v916 = vunpack.c.h.b16 %v309
    %v917 = vunpack.c.l.b16 %v310
    %v918 = vunpack.c.h.b16 %v310
    %v919 = vunpack.c.l.b16 %v311
    %v920 = vunpack.c.h.b16 %v311
    %v921 = vunpack.c.l.b16 %v312
    %v922 = vunpack.c.h.b16 %v312
    %v923 = vpack.c.b16 %v535, %v531
    %v924 = vpack.c.b16 %v536, %v532
    %v925 = vpack.c.b16 %v537, %v533
    %v926 = vpack.c.b16 %v538, %v534
    %v927 = vpack.c.b16 %v543, %v539
    %v928 = vpack.c.b16 %v544, %v540
    %v929 = vpack.c.b16 %v545, %v541
    %v930 = vpack.c.b16 %v546, %v542
    %v931 = vpack.c.b16 %v551, %v547
    %v932 = vpack.c.b16 %v552, %v548
    %v933 = vpack.c.b16 %v553, %v549
    %v934 = vpack.c.b16 %v554, %v550
    %v935 = vpack.c.b16 %v559, %v555
    %v936 = vpack.c.b16 %v560, %v556
    %v937 = vpack.c.b16 %v561, %v557
    %v938 = vpack.c.b16 %v562, %v558
    %v939 = vpack.c.b16 %v567, %v563
    %v940 = vpack.c.b16 %v568, %v564
    %v941 = vpack.c.b16 %v569, %v565
    %v942 = vpack.c.b16 %v570, %v566
    %v943 = vpack.c.b16 %v575, %v571
    %v944 = vpack.c.b16 %v576, %v572
    %v945 = vpack.c.b16 %v577, %v573
    %v946 = vpack.c.b16 %v578, %v574
    %v947 = vpack.c.b16 %v583, %v579
    %v948 = vpack.c.b16 %v584, %v580
    %v949 = vpack.c.b16 %v585, %v581
    %v950 = vpack.c.b16 %v586, %v582
    %v951 = vpack.c.b16 %v591, %v587
    %v952 = vpack.c.b16 %v592, %v588
    %v953 = vpack.c.b16 %v593, %v589
    %v954 = vpack.c.b16 %v594, %v590
    %v955 = vpack.c.b16 %v599, %v595
    %v956 = vpack.c.b16 %v600, %v596
    %v957 = vpack.c.b16 %v601, %v597
    %v958 = vpack.c.b16 %v602, %v598
    %v959 = vpack.c.b16 %v607, %v603
    %v960 = vpack.c.b16 %v608, %v604
    %v961 = vpack.c.b16 %v609, %v605
    %v962 = vpack.c.b16 %v610, %v606
    %v963 = vpack.c.b16 %v615, %v611
    %v964 = vpack.c.b16 %v616, %v612
    %v965 = vpack.c.b16 %v617, %v613
    %v966 = vpack.c.b16 %v618, %v614
    %v967 = vpack.c.b16 %v623, %v619
    %v968 = vpack.c.b16 %v624, %v620
    %v969 = vpack.c.b16 %v625, %v621
    %v970 = vpack.c.b16 %v626, %v622
    %v971 = vpack.c.b16 %v631, %v627
    %v972 = vpack.c.b16 %v632, %v628
    %v973 = vpack.c.b16 %v633, %v629
    %v974 = vpack.c.b16 %v634, %v630
    %v975 = vpack.c.b16 %v639, %v635
    %v976 = vpack.c.b16 %v640, %v636
    %v977 = vpack.c.b16 %v641, %v637
    %v978 = vpack.c.b16 %v642, %v638
    %v979 = vpack.c.b16 %v647, %v643
    %v980 = vpack.c.b16 %v648, %v644
    %v981 = vpack.c.b16 %v649, %v645
    %v982 = vpack.c.b16 %v650, %v646
    %v983 = vpack.c.b16 %v655, %v651
    %v984 = vpack.c.b16 %v656, %v652
    %v985 = vpack.c.b16 %v657, %v653
    %v986 = vpack.c.b16 %v658, %v654
    %v987 = vpack.c.b16 %v663, %v659
    %v988 = vpack.c.b16 %v664, %v660
    %v989 = vpack.c.b16 %v665, %v661
    %v990 = vpack.c.b16 %v666, %v662
    %v991 = vpack.c.b16 %v671, %v667
    %v992 = vpack.c.b16 %v672, %v668
    %v993 = vpack.c.b16 %v673, %v669
    %v994 = vpack.c.b16 %v674, %v670
    %v995 = vpack.c.b16 %v679, %v675
    %v996 = vpack.c.b16 %v680, %v676
    %v997 = vpack.c.b16 %v681, %v677
    %v998 = vpack.c.b16 %v682, %v678
    %v999 = vpack.c.b16 %v687, %v683
    %v1000 = vpack.c.b16 %v688, %v684
    %v1001 = vpack.c.b16 %v689, %v685
    %v1002 = vpack.c.b16 %v690, %v686
    %v1003 = vpack.c.b16 %v695, %v691
    %v1004 = vpack.c.b16 %v696, %v692
    %v1005 = vpack.c.b16 %v697, %v693
    %v1006 = vpack.c.b16 %v698, %v694
    %v1007 = vpack.c.b16 %v703, %v699
    %v1008 = vpack.c.b16 %v704, %v700
    %v1009 = vpack.c.b16 %v705, %v701
    %v1010 = vpack.c.b16 %v706, %v702
    %v1011 = vpack.c.b16 %v711, %v707
    %v1012 = vpack.c.b16 %v712, %v708
    %v1013 = vpack.c.b16 %v713, %v709
    %v1014 = vpack.c.b16 %v714, %v710
    %v1015 = vpack.c.b16 %v719, %v715
    %v1016 = vpack.c.b16 %v720, %v716
    %v1017 = vpack.c.b16 %v721, %v717
    %v1018 = vpack.c.b16 %v722, %v718
    %v1019 = vpack.c.b16 %v727, %v723
    %v1020 = vpack.c.b16 %v728, %v724
    %v1021 = vpack.c.b16 %v729, %v725
    %v1022 = vpack.c.b16 %v730, %v726
    %v1023 = vpack.c.b16 %v735, %v731
    %v1024 = vpack.c.b16 %v736, %v732
    %v1025 = vpack.c.b16 %v737, %v733
    %v1026 = vpack.c.b16 %v738, %v734
    %v1027 = vpack.c.b16 %v743, %v739
    %v1028 = vpack.c.b16 %v744, %v740
    %v1029 = vpack.c.b16 %v745, %v741
    %v1030 = vpack.c.b16 %v746, %v742
    %v1031 = vpack.c.b16 %v751, %v747
    %v1032 = vpack.c.b16 %v752, %v748
    %v1033 = vpack.c.b16 %v753, %v749
    %v1034 = vpack.c.b16 %v754, %v750
    %v1035 = vpack.c.b16 %v759, %v755
    %v1036 = vpack.c.b16 %v760, %v756
    %v1037 = vpack.c.b16 %v761, %v757
    %v1038 = vpack.c.b16 %v762, %v758
    %v1039 = vpack.c.b16 %v767, %v763
    %v1040 = vpack.c.b16 %v768, %v764
    %v1041 = vpack.c.b16 %v769, %v765
    %v1042 = vpack.c.b16 %v770, %v766
    %v1043 = vpack.c.b16 %v775, %v771
    %v1044 = vpack.c.b16 %v776, %v772
    %v1045 = vpack.c.b16 %v777, %v773
    %v1046 = vpack.c.b16 %v778, %v774
    %v1047 = vpack.c.b16 %v783, %v779
    %v1048 = vpack.c.b16 %v784, %v780
    %v1049 = vpack.c.b16 %v785, %v781
    %v1050 = vpack.c.b16 %v786, %v782
    %v1051 = vpack.c.b16 %v791, %v787
    %v1052 = vpack.c.b16 %v792, %v788
    %v1053 = vpack.c.b16 %v793, %v789
    %v1054 = vpack.c.b16 %v794, %v790
    %v1055 = vpack.c.b16 %v799, %v795
    %v1056 = vpack.c.b16 %v800, %v796
    %v1057 = vpack.c.b16 %v801, %v797
    %v1058 = vpack.c.b16 %v802, %v798
    %v1059 = vpack.c.b16 %v807, %v803
    %v1060 = vpack.c.b16 %v808, %v804
    %v1061 = vpack.c.b16 %v809, %v805
    %v1062 = vpack.c.b16 %v810, %v806
    %v1063 = vpack.c.b16 %v815, %v811
    %v1064 = vpack.c.b16 %v816, %v812
    %v1065 = vpack.c.b16 %v817, %v813
    %v1066 = vpack.c.b16 %v818, %v814
    %v1067 = vpack.c.b16 %v823, %v819
    %v1068 = vpack.c.b16 %v824, %v820
    %v1069 = vpack.c.b16 %v825, %v821
    %v1070 = vpack.c.b16 %v826, %v822
    %v1071 = vpack.c.b16 %v831, %v827
    %v1072 = vpack.c.b16 %v832, %v828
    %v1073 = vpack.c.b16 %v833, %v829
    %v1074 = vpack.c.b16 %v834, %v830
    %v1075 = vpack.c.b16 %v839, %v835
    %v1076 = vpack.c.b16 %v840, %v836
    %v1077 = vpack.c.b16 %v841, %v837
    %v1078 = vpack.c.b16 %v842, %v838
    %v1079 = vpack.c.b16 %v847, %v843
    %v1080 = vpack.c.b16 %v848, %v844
    %v1081 = vpack.c.b16 %v849, %v845
    %v1082 = vpack.c.b16 %v850, %v846
    %v1083 = vpack.c.b16 %v855, %v851
    %v1084 = vpack.c.b16 %v856, %v852
    %v1085 = vpack.c.b16 %v857, %v853
    %v1086 = vpack.c.b16 %v858, %v854
    %v1087 = vpack.c.b16 %v863, %v859
    %v1088 = vpack.c.b16 %v864, %v860
    %v1089 = vpack.c.b16 %v865, %v861
    %v1090 = vpack.c.b16 %v866, %v862
    %v1091 = vpack.c.b16 %v871, %v867
    %v1092 = vpack.c.b16 %v872, %v868
    %v1093 = vpack.c.b16 %v873, %v869
    %v1094 = vpack.c.b16 %v874, %v870
    %v1095 = vpack.c.b16 %v879, %v875
    %v1096 = vpack.c.b16 %v880, %v876
    %v1097 = vpack.c.b16 %v881, %v877
    %v1098 = vpack.c.b16 %v882, %v878
    %v1099 = vpack.c.b16 %v887, %v883
    %v1100 = vpack.c.b16 %v888, %v884
    %v1101 = vpack.c.b16 %v889, %v885
    %v1102 = vpack.c.b16 %v890, %v886
    %v1103 = vpack.c.b16 %v895, %v891
    %v1104 = vpack.c.b16 %v896, %v892
    %v1105 = vpack.c.b16 %v897, %v893
    %v1106 = vpack.c.b16 %v898, %v894
    %v1107 = vpack.c.b16 %v903, %v899
    %v1108 = vpack.c.b16 %v904, %v900
    %v1109 = vpack.c.b16 %v905, %v901
    %v1110 = vpack.c.b16 %v906, %v902
    %v1111 = vpack.c.b16 %v911, %v907
    %v1112 = vpack.c.b16 %v912, %v908
    %v1113 = vpack.c.b16 %v913, %v909
    %v1114 = vpack.c.b16 %v914, %v910
    %v1115 = vpack.c.b16 %v919, %v915
    %v1116 = vpack.c.b16 %v920, %v916
    %v1117 = vpack.c.b16 %v921, %v917
    %v1118 = vpack.c.b16 %v922, %v918
    %vm1315 = vcmask 130048
    %v1317 = vsel %vm1315, %v116, 0
    %1319 = vmatprep.subr.bf16.mxu0 %v924
    %1320 = vmatpush1.bf16.msra.mxu0 %v923
    %1321 = vmatprep.subr.bf16.mxu0 %v928
    %1322 = vmatpush1.bf16.msra.mxu0 %v927
    %1323 = vmatprep.subr.bf16.mxu0 %v932
    %1324 = vmatpush1.bf16.msra.mxu0 %v931
    %1325 = vmatprep.subr.bf16.mxu0 %v936
    %1326 = vmatpush1.bf16.msra.mxu0 %v935
    %1327 = vmatprep.subr.bf16.mxu0 %v940
    %1328 = vmatpush1.bf16.msra.mxu0 %v939
    %1329 = vmatprep.subr.bf16.mxu0 %v944
    %1330 = vmatpush1.bf16.msra.mxu0 %v943
    %1331 = vmatprep.subr.bf16.mxu0 %v948
    %1332 = vmatpush1.bf16.msra.mxu0 %v947
    %1333 = vmatprep.subr.bf16.mxu0 %v952
    %1334 = vmatpush1.bf16.msra.mxu0 %v951
    %1335 = vmatprep.subr.bf16.mxu0 %v956
    %1336 = vmatpush1.bf16.msra.mxu0 %v955
    %1337 = vmatprep.subr.bf16.mxu0 %v960
    %1338 = vmatpush1.bf16.msra.mxu0 %v959
    %1339 = vmatprep.subr.bf16.mxu0 %v964
    %1340 = vmatpush1.bf16.msra.mxu0 %v963
    %1341 = vmatprep.subr.bf16.mxu0 %v968
    %1342 = vmatpush1.bf16.msra.mxu0 %v967
    %1343 = vmatprep.subr.bf16.mxu0 %v972
    %1344 = vmatpush1.bf16.msra.mxu0 %v971
    %1345 = vmatprep.subr.bf16.mxu0 %v976
    %1346 = vmatpush1.bf16.msra.mxu0 %v975
    %1347 = vmatprep.subr.bf16.mxu0 %v980
    %1348 = vmatpush1.bf16.msra.mxu0 %v979
    %1349 = vmatprep.subr.bf16.mxu0 %v984
    %1350 = vmatpush1.bf16.msra.mxu0 %v983
    %1351 = vmatprep.mubr.bf16.mxu0 %v111
    %1352 = vmatmul.mubr.bf16.gmra.mrb[0].mxu0 %v110
    %v1353 = vpop.f32.mrb[0].mxu0
    %v1354 = vadd.f32 %v318, %v1353
    %v1355 = vpop.f32.mrb[0].mxu0
    %v1356 = vadd.f32 %v322, %v1355
    %v1357 = vpop.f32.mrb[0].mxu0
    %v1358 = vpop.f32.mrb[0].mxu0
    %1359 = vdwg.mxu0
    %1360 = vmatprep.subr.bf16.mxu0 %v988
    %1361 = vmatpush1.bf16.msra.mxu0 %v987
    %1362 = vmatprep.subr.bf16.mxu0 %v992
    %1363 = vmatpush1.bf16.msra.mxu0 %v991
    %1364 = vmatprep.subr.bf16.mxu0 %v996
    %1365 = vmatpush1.bf16.msra.mxu0 %v995
    %1366 = vmatprep.subr.bf16.mxu0 %v1000
    %1367 = vmatpush1.bf16.msra.mxu0 %v999
    %1368 = vmatprep.subr.bf16.mxu0 %v1004
    %1369 = vmatpush1.bf16.msra.mxu0 %v1003
    %1370 = vmatprep.subr.bf16.mxu0 %v1008
    %1371 = vmatpush1.bf16.msra.mxu0 %v1007
    %1372 = vmatprep.subr.bf16.mxu0 %v1012
    %1373 = vmatpush1.bf16.msra.mxu0 %v1011
    %1374 = vmatprep.subr.bf16.mxu0 %v1016
    %1375 = vmatpush1.bf16.msra.mxu0 %v1015
    %1376 = vmatprep.subr.bf16.mxu0 %v1020
    %1377 = vmatpush1.bf16.msra.mxu0 %v1019
    %1378 = vmatprep.subr.bf16.mxu0 %v1024
    %1379 = vmatpush1.bf16.msra.mxu0 %v1023
    %1380 = vmatprep.subr.bf16.mxu0 %v1028
    %1381 = vmatpush1.bf16.msra.mxu0 %v1027
    %1382 = vmatprep.subr.bf16.mxu0 %v1032
    %1383 = vmatpush1.bf16.msra.mxu0 %v1031
    %1384 = vmatprep.subr.bf16.mxu0 %v1036
    %1385 = vmatpush1.bf16.msra.mxu0 %v1035
    %1386 = vmatprep.subr.bf16.mxu0 %v1040
    %1387 = vmatpush1.bf16.msra.mxu0 %v1039
    %1388 = vmatprep.subr.bf16.mxu0 %v1044
    %1389 = vmatpush1.bf16.msra.mxu0 %v1043
    %1390 = vmatprep.subr.bf16.mxu0 %v1048
    %1391 = vmatpush1.bf16.msra.mxu0 %v1047
    %1392 = vmatprep.mubr.bf16.mxu0 %v113
    %1393 = vmatmul.mubr.bf16.gmra.mrb[0].mxu0 %v112
    %v1394 = vpop.f32.mrb[0].mxu0
    %v1395 = vadd.f32 %v1354, %v1394
    %v1396 = vpop.f32.mrb[0].mxu0
    %v1397 = vadd.f32 %v1356, %v1396
    %v1398 = vpop.f32.mrb[0].mxu0
    %v1399 = vpop.f32.mrb[0].mxu0
    %1400 = vdwg.mxu0
    %1401 = vmatprep.subr.bf16.mxu0 %v1052
    %1402 = vmatpush1.bf16.msra.mxu0 %v1051
    %1403 = vmatprep.subr.bf16.mxu0 %v1056
    %1404 = vmatpush1.bf16.msra.mxu0 %v1055
    %1405 = vmatprep.subr.bf16.mxu0 %v1060
    %1406 = vmatpush1.bf16.msra.mxu0 %v1059
    %1407 = vmatprep.subr.bf16.mxu0 %v1064
    %1408 = vmatpush1.bf16.msra.mxu0 %v1063
    %1409 = vmatprep.subr.bf16.mxu0 %v1068
    %1410 = vmatpush1.bf16.msra.mxu0 %v1067
    %1411 = vmatprep.subr.bf16.mxu0 %v1072
    %1412 = vmatpush1.bf16.msra.mxu0 %v1071
    %1413 = vmatprep.subr.bf16.mxu0 %v1076
    %1414 = vmatpush1.bf16.msra.mxu0 %v1075
    %1415 = vmatprep.subr.bf16.mxu0 %v1080
    %1416 = vmatpush1.bf16.msra.mxu0 %v1079
    %1417 = vmatprep.subr.bf16.mxu0 %v1084
    %1418 = vmatpush1.bf16.msra.mxu0 %v1083
    %1419 = vmatprep.subr.bf16.mxu0 %v1088
    %1420 = vmatpush1.bf16.msra.mxu0 %v1087
    %1421 = vmatprep.subr.bf16.mxu0 %v1092
    %1422 = vmatpush1.bf16.msra.mxu0 %v1091
    %1423 = vmatprep.subr.bf16.mxu0 %v1096
    %1424 = vmatpush1.bf16.msra.mxu0 %v1095
    %1425 = vmatprep.subr.bf16.mxu0 %v1100
    %1426 = vmatpush1.bf16.msra.mxu0 %v1099
    %1427 = vmatprep.subr.bf16.mxu0 %v1104
    %1428 = vmatpush1.bf16.msra.mxu0 %v1103
    %1429 = vmatprep.subr.bf16.mxu0 %v1108
    %1430 = vmatpush1.bf16.msra.mxu0 %v1107
    %1431 = vmatprep.subr.bf16.mxu0 %v1112
    %1432 = vmatpush1.bf16.msra.mxu0 %v1111
    %1433 = vmatprep.mubr.bf16.mxu0 %v115
    %1434 = vmatmul.mubr.bf16.gmra.mrb[0].mxu0 %v114
    %v1435 = vpop.f32.mrb[0].mxu0
    %v1436 = vadd.f32 %v1395, %v1435
    %v1437 = vpop.f32.mrb[0].mxu0
    %v1438 = vadd.f32 %v1397, %v1437
    %v1439 = vpop.f32.mrb[0].mxu0
    %v1440 = vpop.f32.mrb[0].mxu0
    %1441 = vdwg.mxu0
    %1442 = vmatprep.subr.bf16.mxu0 %v1116
    %1443 = vmatpush1.bf16.msra.mxu0 %v1115
    %1444 = vmatprep.subr.bf16.mxu0 0
    %1445 = vmatpush1.bf16.msra.mxu0 0
    %1446 = vmatprep.subr.bf16.mxu0 0
    %1447 = vmatpush1.bf16.msra.mxu0 0
    %1448 = vmatprep.subr.bf16.mxu0 0
    %1449 = vmatpush1.bf16.msra.mxu0 0
    %1450 = vmatprep.subr.bf16.mxu0 0
    %1451 = vmatpush1.bf16.msra.mxu0 0
    %1452 = vmatprep.subr.bf16.mxu0 0
    %1453 = vmatpush1.bf16.msra.mxu0 0
    %1454 = vmatprep.subr.bf16.mxu0 0
    %1455 = vmatpush1.bf16.msra.mxu0 0
    %1456 = vmatprep.subr.bf16.mxu0 0
    %1457 = vmatpush1.bf16.msra.mxu0 0
    %1458 = vmatprep.subr.bf16.mxu0 0
    %1459 = vmatpush1.bf16.msra.mxu0 0
    %1460 = vmatprep.subr.bf16.mxu0 0
    %1461 = vmatpush1.bf16.msra.mxu0 0
    %1462 = vmatprep.subr.bf16.mxu0 0
    %1463 = vmatpush1.bf16.msra.mxu0 0
    %1464 = vmatprep.subr.bf16.mxu0 0
    %1465 = vmatpush1.bf16.msra.mxu0 0
    %1466 = vmatprep.subr.bf16.mxu0 0
    %1467 = vmatpush1.bf16.msra.mxu0 0
    %1468 = vmatprep.subr.bf16.mxu0 0
    %1469 = vmatpush1.bf16.msra.mxu0 0
    %1470 = vmatprep.subr.bf16.mxu0 0
    %1471 = vmatpush1.bf16.msra.mxu0 0
    %1472 = vmatprep.subr.bf16.mxu0 0
    %1473 = vmatpush1.bf16.msra.mxu0 0
    %1474 = vmatprep.mubr.bf16.mxu0 0
    %1475 = vmatmul.mubr.bf16.gmra.mrb[0].mxu0 %v1317
    %v1476 = vpop.f32.mrb[0].mxu0
    %v1477 = vadd.f32 %v1436, %v1476
    %v1478 = vpop.f32.mrb[0].mxu0
    %v1479 = vadd.f32 %v1438, %v1478
    %v1480 = vpop.f32.mrb[0].mxu0
    %v1481 = vpop.f32.mrb[0].mxu0
    %1482 = vdwg.mxu0
    %1483 = vmatprep.subr.bf16.mxu0 %v926
    %1484 = vmatpush1.bf16.msra.mxu0 %v925
    %1485 = vmatprep.subr.bf16.mxu0 %v930
    %1486 = vmatpush1.bf16.msra.mxu0 %v929
    %1487 = vmatprep.subr.bf16.mxu0 %v934
    %1488 = vmatpush1.bf16.msra.mxu0 %v933
    %1489 = vmatprep.subr.bf16.mxu0 %v938
    %1490 = vmatpush1.bf16.msra.mxu0 %v937
    %1491 = vmatprep.subr.bf16.mxu0 %v942
    %1492 = vmatpush1.bf16.msra.mxu0 %v941
    %1493 = vmatprep.subr.bf16.mxu0 %v946
    %1494 = vmatpush1.bf16.msra.mxu0 %v945
    %1495 = vmatprep.subr.bf16.mxu0 %v950
    %1496 = vmatpush1.bf16.msra.mxu0 %v949
    %1497 = vmatprep.subr.bf16.mxu0 %v954
    %1498 = vmatpush1.bf16.msra.mxu0 %v953
    %1499 = vmatprep.subr.bf16.mxu0 %v958
    %1500 = vmatpush1.bf16.msra.mxu0 %v957
    %1501 = vmatprep.subr.bf16.mxu0 %v962
    %1502 = vmatpush1.bf16.msra.mxu0 %v961
    %1503 = vmatprep.subr.bf16.mxu0 %v966
    %1504 = vmatpush1.bf16.msra.mxu0 %v965
    %1505 = vmatprep.subr.bf16.mxu0 %v970
    %1506 = vmatpush1.bf16.msra.mxu0 %v969
    %1507 = vmatprep.subr.bf16.mxu0 %v974
    %1508 = vmatpush1.bf16.msra.mxu0 %v973
    %1509 = vmatprep.subr.bf16.mxu0 %v978
    %1510 = vmatpush1.bf16.msra.mxu0 %v977
    %1511 = vmatprep.subr.bf16.mxu0 %v982
    %1512 = vmatpush1.bf16.msra.mxu0 %v981
    %1513 = vmatprep.subr.bf16.mxu0 %v986
    %1514 = vmatpush1.bf16.msra.mxu0 %v985
    %1515 = vmatprep.mubr.bf16.mxu0 %v111
    %1516 = vmatmul.mubr.bf16.gmra.mrb[0].mxu0 %v110
    %v1517 = vpop.f32.mrb[0].mxu0
    %v1518 = vadd.f32 %v326, %v1517
    %v1519 = vpop.f32.mrb[0].mxu0
    %v1520 = vadd.f32 %v330, %v1519
    %v1521 = vpop.f32.mrb[0].mxu0
    %v1522 = vpop.f32.mrb[0].mxu0
    %1523 = vdwg.mxu0
    %1524 = vmatprep.subr.bf16.mxu0 %v990
    %1525 = vmatpush1.bf16.msra.mxu0 %v989
    %1526 = vmatprep.subr.bf16.mxu0 %v994
    %1527 = vmatpush1.bf16.msra.mxu0 %v993
    %1528 = vmatprep.subr.bf16.mxu0 %v998
    %1529 = vmatpush1.bf16.msra.mxu0 %v997
    %1530 = vmatprep.subr.bf16.mxu0 %v1002
    %1531 = vmatpush1.bf16.msra.mxu0 %v1001
    %1532 = vmatprep.subr.bf16.mxu0 %v1006
    %1533 = vmatpush1.bf16.msra.mxu0 %v1005
    %1534 = vmatprep.subr.bf16.mxu0 %v1010
    %1535 = vmatpush1.bf16.msra.mxu0 %v1009
    %1536 = vmatprep.subr.bf16.mxu0 %v1014
    %1537 = vmatpush1.bf16.msra.mxu0 %v1013
    %1538 = vmatprep.subr.bf16.mxu0 %v1018
    %1539 = vmatpush1.bf16.msra.mxu0 %v1017
    %1540 = vmatprep.subr.bf16.mxu0 %v1022
    %1541 = vmatpush1.bf16.msra.mxu0 %v1021
    %1542 = vmatprep.subr.bf16.mxu0 %v1026
    %1543 = vmatpush1.bf16.msra.mxu0 %v1025
    %1544 = vmatprep.subr.bf16.mxu0 %v1030
    %1545 = vmatpush1.bf16.msra.mxu0 %v1029
    %1546 = vmatprep.subr.bf16.mxu0 %v1034
    %1547 = vmatpush1.bf16.msra.mxu0 %v1033
    %1548 = vmatprep.subr.bf16.mxu0 %v1038
    %1549 = vmatpush1.bf16.msra.mxu0 %v1037
    %1550 = vmatprep.subr.bf16.mxu0 %v1042
    %1551 = vmatpush1.bf16.msra.mxu0 %v1041
    %1552 = vmatprep.subr.bf16.mxu0 %v1046
    %1553 = vmatpush1.bf16.msra.mxu0 %v1045
    %1554 = vmatprep.subr.bf16.mxu0 %v1050
    %1555 = vmatpush1.bf16.msra.mxu0 %v1049
    %1556 = vmatprep.mubr.bf16.mxu0 %v113
    %1557 = vmatmul.mubr.bf16.gmra.mrb[0].mxu0 %v112
    %v1558 = vpop.f32.mrb[0].mxu0
    %v1559 = vadd.f32 %v1518, %v1558
    %v1560 = vpop.f32.mrb[0].mxu0
    %v1561 = vadd.f32 %v1520, %v1560
    %v1562 = vpop.f32.mrb[0].mxu0
    %v1563 = vpop.f32.mrb[0].mxu0
    %1564 = vdwg.mxu0
    %1565 = vmatprep.subr.bf16.mxu0 %v1054
    %1566 = vmatpush1.bf16.msra.mxu0 %v1053
    %1567 = vmatprep.subr.bf16.mxu0 %v1058
    %1568 = vmatpush1.bf16.msra.mxu0 %v1057
    %1569 = vmatprep.subr.bf16.mxu0 %v1062
    %1570 = vmatpush1.bf16.msra.mxu0 %v1061
    %1571 = vmatprep.subr.bf16.mxu0 %v1066
    %1572 = vmatpush1.bf16.msra.mxu0 %v1065
    %1573 = vmatprep.subr.bf16.mxu0 %v1070
    %1574 = vmatpush1.bf16.msra.mxu0 %v1069
    %1575 = vmatprep.subr.bf16.mxu0 %v1074
    %1576 = vmatpush1.bf16.msra.mxu0 %v1073
    %1577 = vmatprep.subr.bf16.mxu0 %v1078
    %1578 = vmatpush1.bf16.msra.mxu0 %v1077
    %1579 = vmatprep.subr.bf16.mxu0 %v1082
    %1580 = vmatpush1.bf16.msra.mxu0 %v1081
    %1581 = vmatprep.subr.bf16.mxu0 %v1086
    %1582 = vmatpush1.bf16.msra.mxu0 %v1085
    %1583 = vmatprep.subr.bf16.mxu0 %v1090
    %1584 = vmatpush1.bf16.msra.mxu0 %v1089
    %1585 = vmatprep.subr.bf16.mxu0 %v1094
    %1586 = vmatpush1.bf16.msra.mxu0 %v1093
    %1587 = vmatprep.subr.bf16.mxu0 %v1098
    %1588 = vmatpush1.bf16.msra.mxu0 %v1097
    %1589 = vmatprep.subr.bf16.mxu0 %v1102
    %1590 = vmatpush1.bf16.msra.mxu0 %v1101
    %1591 = vmatprep.subr.bf16.mxu0 %v1106
    %1592 = vmatpush1.bf16.msra.mxu0 %v1105
    %1593 = vmatprep.subr.bf16.mxu0 %v1110
    %1594 = vmatpush1.bf16.msra.mxu0 %v1109
    %1595 = vmatprep.subr.bf16.mxu0 %v1114
    %1596 = vmatpush1.bf16.msra.mxu0 %v1113
    %1597 = vmatprep.mubr.bf16.mxu0 %v115
    %1598 = vmatmul.mubr.bf16.gmra.mrb[0].mxu0 %v114
    %v1599 = vpop.f32.mrb[0].mxu0
    %v1600 = vadd.f32 %v1559, %v1599
    %v1601 = vpop.f32.mrb[0].mxu0
    %v1602 = vadd.f32 %v1561, %v1601
    %v1603 = vpop.f32.mrb[0].mxu0
    %v1604 = vpop.f32.mrb[0].mxu0
    %1605 = vdwg.mxu0
    %1606 = vmatprep.subr.bf16.mxu0 %v1118
    %1607 = vmatpush1.bf16.msra.mxu0 %v1117
    %1608 = vmatprep.subr.bf16.mxu0 0
    %1609 = vmatpush1.bf16.msra.mxu0 0
    %1610 = vmatprep.subr.bf16.mxu0 0
    %1611 = vmatpush1.bf16.msra.mxu0 0
    %1612 = vmatprep.subr.bf16.mxu0 0
    %1613 = vmatpush1.bf16.msra.mxu0 0
    %1614 = vmatprep.subr.bf16.mxu0 0
    %1615 = vmatpush1.bf16.msra.mxu0 0
    %1616 = vmatprep.subr.bf16.mxu0 0
    %1617 = vmatpush1.bf16.msra.mxu0 0
    %1618 = vmatprep.subr.bf16.mxu0 0
    %1619 = vmatpush1.bf16.msra.mxu0 0
    %1620 = vmatprep.subr.bf16.mxu0 0
    %1621 = vmatpush1.bf16.msra.mxu0 0
    %1622 = vmatprep.subr.bf16.mxu0 0
    %1623 = vmatpush1.bf16.msra.mxu0 0
    %1624 = vmatprep.subr.bf16.mxu0 0
    %1625 = vmatpush1.bf16.msra.mxu0 0
    %1626 = vmatprep.subr.bf16.mxu0 0
    %1627 = vmatpush1.bf16.msra.mxu0 0
    %1628 = vmatprep.subr.bf16.mxu0 0
    %1629 = vmatpush1.bf16.msra.mxu0 0
    %1630 = vmatprep.subr.bf16.mxu0 0
    %1631 = vmatpush1.bf16.msra.mxu0 0
    %1632 = vmatprep.subr.bf16.mxu0 0
    %1633 = vmatpush1.bf16.msra.mxu0 0
    %1634 = vmatprep.subr.bf16.mxu0 0
    %1635 = vmatpush1.bf16.msra.mxu0 0
    %1636 = vmatprep.subr.bf16.mxu0 0
    %1637 = vmatpush1.bf16.msra.mxu0 0
    %1638 = vmatprep.mubr.bf16.mxu0 0
    %1639 = vmatmul.mubr.bf16.gmra.mrb[0].mxu0 %v1317
    %v1640 = vpop.f32.mrb[0].mxu0
    %v1641 = vadd.f32 %v1600, %v1640
    %v1642 = vpop.f32.mrb[0].mxu0
    %v1643 = vadd.f32 %v1602, %v1642
    %v1644 = vpop.f32.mrb[0].mxu0
    %v1645 = vpop.f32.mrb[0].mxu0
    %1646 = vdwg.mxu0
    %v1647 = vmax.f32 %v1477, 0.0
    %v1648 = vmax.f32 %v1479, 0.0
    %v1649 = vmax.f32 %v1641, 0.0
    %v1650 = vmax.f32 %v1643, 0.0
    %v1651 = vpack.c.bf16 %v1647, %v1647
    %v1652 = vpack.c.bf16 %v1648, %v1648
    %v1653 = vpack.c.bf16 %v1649, %v1649
    %v1654 = vpack.c.bf16 %v1650, %v1650
    %v1655 = vld [vmem:[%s4] sm:$0xff]
    %v1656 = vld [vmem:[%s4 + $0x8] sm:$0xff]
    %v1657 = vld [vmem:[%s4 + $0x10] sm:$0xff]
    %v1658 = vld [vmem:[%s4 + $0x18] sm:$0xff]
    %v1659 = vld [vmem:[%s4 + $0x20] sm:$0xff]
    %v1660 = vld [vmem:[%s4 + $0x28] sm:$0xff]
    %v1661 = vld [vmem:[%s4 + $0x30] sm:$0xff]
    %v1662 = vld [vmem:[%s4 + $0x38] sm:$0xff]
    %v1663 = vld [vmem:[%s4 + $0x40] sm:$0xff]
    %v1664 = vld [vmem:[%s4 + $0x48] sm:$0xff]
    %v1665 = vld [vmem:[%s4 + $0x50] sm:$0xff]
    %v1666 = vld [vmem:[%s4 + $0x58] sm:$0xff]
    %v1667 = vld [vmem:[%s4 + $0x60] sm:$0xff]
    %v1668 = vld [vmem:[%s4 + $0x68] sm:$0xff]
    %v1669 = vld [vmem:[%s4 + $0x70] sm:$0xff]
    %v1670 = vld [vmem:[%s4 + $0x78] sm:$0xff]
    %v1671 = vld [vmem:[%s4 + $0x80] sm:$0xff]
    %v1672 = vld [vmem:[%s4 + $0x88] sm:$0xff]
    %v1673 = vld [vmem:[%s4 + $0x90] sm:$0xff]
    %v1674 = vld [vmem:[%s4 + $0x98] sm:$0xff]
    %v1675 = vld [vmem:[%s4 + $0xa0] sm:$0xff]
    %v1676 = vld [vmem:[%s4 + $0xa8] sm:$0xff]
    %v1677 = vld [vmem:[%s4 + $0xb0] sm:$0xff]
    %v1678 = vld [vmem:[%s4 + $0xb8] sm:$0xff]
    %v1679 = vld [vmem:[%s4 + $0xc0] sm:$0xff]
    %v1680 = vld [vmem:[%s4 + $0xc8] sm:$0xff]
    %v1681 = vld [vmem:[%s4 + $0xd0] sm:$0xff]
    %v1682 = vld [vmem:[%s4 + $0xd8] sm:$0xff]
    %v1683 = vld [vmem:[%s4 + $0xe0] sm:$0xff]
    %v1684 = vld [vmem:[%s4 + $0xe8] sm:$0xff]
    %v1685 = vld [vmem:[%s4 + $0xf0] sm:$0xff]
    %v1686 = vld [vmem:[%s4 + $0xf8] sm:$0xff]
    %v1687 = vld [vmem:[%s4 + $0x100] sm:$0xff]
    %v1688 = vld [vmem:[%s4 + $0x108] sm:$0xff]
    %v1689 = vld [vmem:[%s4 + $0x110] sm:$0xff]
    %v1690 = vld [vmem:[%s4 + $0x118] sm:$0xff]
    %v1691 = vld [vmem:[%s4 + $0x120] sm:$0xff]
    %v1692 = vld [vmem:[%s4 + $0x128] sm:$0xff]
    %v1693 = vld [vmem:[%s4 + $0x130] sm:$0xff]
    %v1694 = vld [vmem:[%s4 + $0x138] sm:$0xff]
    %v1695 = vld [vmem:[%s4 + $0x140] sm:$0xff]
    %v1696 = vld [vmem:[%s4 + $0x148] sm:$0xff]
    %v1697 = vld [vmem:[%s4 + $0x150] sm:$0xff]
    %v1698 = vld [vmem:[%s4 + $0x158] sm:$0xff]
    %v1699 = vld [vmem:[%s4 + $0x160] sm:$0xff]
    %v1700 = vld [vmem:[%s4 + $0x168] sm:$0xff]
    %v1701 = vld [vmem:[%s4 + $0x170] sm:$0xff]
    %v1702 = vld [vmem:[%s4 + $0x178] sm:$0xff]
    %v1703 = vld [vmem:[%s4 + $0x180] sm:$0xff]
    %v1704 = vld [vmem:[%s4 + $0x188] sm:$0xff]
    %v1705 = vld [vmem:[%s4 + $0x190] sm:$0xff]
    %v1706 = vld [vmem:[%s4 + $0x198] sm:$0xff]
    %v1707 = vld [vmem:[%s4 + $0x1a0] sm:$0xff]
    %v1708 = vld [vmem:[%s4 + $0x1a8] sm:$0xff]
    %v1709 = vld [vmem:[%s4 + $0x1b0] sm:$0xff]
    %v1710 = vld [vmem:[%s4 + $0x1b8] sm:$0xff]
    %v1711 = vld [vmem:[%s4 + $0x1c0] sm:$0xff]
    %v1712 = vld [vmem:[%s4 + $0x1c8] sm:$0xff]
    %v1713 = vld [vmem:[%s4 + $0x1d0] sm:$0xff]
    %v1714 = vld [vmem:[%s4 + $0x1d8] sm:$0xff]
    %v1715 = vld [vmem:[%s4 + $0x1e0] sm:$0xff]
    %v1716 = vld [vmem:[%s4 + $0x1e8] sm:$0xff]
    %v1717 = vld [vmem:[%s4 + $0x1f0] sm:$0xff]
    %v1718 = vld [vmem:[%s4 + $0x1f8] sm:$0xff]
    %v1719 = vld [vmem:[%s4 + $0x200] sm:$0xff]
    %v1720 = vld [vmem:[%s4 + $0x208] sm:$0xff]
    %v1721 = vld [vmem:[%s4 + $0x210] sm:$0xff]
    %v1722 = vld [vmem:[%s4 + $0x218] sm:$0xff]
    %v1723 = vld [vmem:[%s4 + $0x220] sm:$0xff]
    %v1724 = vld [vmem:[%s4 + $0x228] sm:$0xff]
    %v1725 = vld [vmem:[%s4 + $0x230] sm:$0xff]
    %v1726 = vld [vmem:[%s4 + $0x238] sm:$0xff]
    %v1727 = vld [vmem:[%s4 + $0x240] sm:$0xff]
    %v1728 = vld [vmem:[%s4 + $0x248] sm:$0xff]
    %v1729 = vld [vmem:[%s4 + $0x250] sm:$0xff]
    %v1730 = vld [vmem:[%s4 + $0x258] sm:$0xff]
    %v1731 = vld [vmem:[%s4 + $0x260] sm:$0xff]
    %v1732 = vld [vmem:[%s4 + $0x268] sm:$0xff]
    %v1733 = vld [vmem:[%s4 + $0x270] sm:$0xff]
    %v1734 = vld [vmem:[%s4 + $0x278] sm:$0xff]
    %v1735 = vld [vmem:[%s4 + $0x280] sm:$0xff]
    %v1736 = vld [vmem:[%s4 + $0x288] sm:$0xff]
    %v1737 = vld [vmem:[%s4 + $0x290] sm:$0xff]
    %v1738 = vld [vmem:[%s4 + $0x298] sm:$0xff]
    %v1739 = vld [vmem:[%s4 + $0x2a0] sm:$0xff]
    %v1740 = vld [vmem:[%s4 + $0x2a8] sm:$0xff]
    %v1741 = vld [vmem:[%s4 + $0x2b0] sm:$0xff]
    %v1742 = vld [vmem:[%s4 + $0x2b8] sm:$0xff]
    %v1743 = vld [vmem:[%s4 + $0x2c0] sm:$0xff]
    %v1744 = vld [vmem:[%s4 + $0x2c8] sm:$0xff]
    %v1745 = vld [vmem:[%s4 + $0x2d0] sm:$0xff]
    %v1746 = vld [vmem:[%s4 + $0x2d8] sm:$0xff]
    %v1747 = vld [vmem:[%s4 + $0x2e0] sm:$0xff]
    %v1748 = vld [vmem:[%s4 + $0x2e8] sm:$0xff]
    %v1749 = vld [vmem:[%s4 + $0x2f0] sm:$0xff]
    %v1750 = vld [vmem:[%s4 + $0x2f8] sm:$0xff]
    %v1751 = vld [vmem:[%s4 + $0x300] sm:$0xff]
    %v1752 = vld [vmem:[%s4 + $0x308] sm:$0xff]
    %v1753 = vld [vmem:[%s4 + $0x310] sm:$0xff]
    %v1754 = vld [vmem:[%s4 + $0x318] sm:$0xff]
    %v1755 = vld [vmem:[%s4 + $0x320] sm:$0xff]
    %v1756 = vld [vmem:[%s4 + $0x328] sm:$0xff]
    %v1757 = vld [vmem:[%s4 + $0x330] sm:$0xff]
    %v1758 = vld [vmem:[%s4 + $0x338] sm:$0xff]
    %v1759 = vld [vmem:[%s4 + $0x340] sm:$0xff]
    %v1760 = vld [vmem:[%s4 + $0x348] sm:$0xff]
    %v1761 = vld [vmem:[%s4 + $0x350] sm:$0xff]
    %v1762 = vld [vmem:[%s4 + $0x358] sm:$0xff]
    %v1763 = vld [vmem:[%s4 + $0x360] sm:$0xff]
    %v1764 = vld [vmem:[%s4 + $0x368] sm:$0xff]
    %v1765 = vld [vmem:[%s4 + $0x370] sm:$0xff]
    %v1766 = vld [vmem:[%s4 + $0x378] sm:$0xff]
    %v1767 = vld [vmem:[%s4 + $0x380] sm:$0xff]
    %v1768 = vld [vmem:[%s4 + $0x388] sm:$0xff]
    %v1769 = vld [vmem:[%s4 + $0x390] sm:$0xff]
    %v1770 = vld [vmem:[%s4 + $0x398] sm:$0xff]
    %v1771 = vld [vmem:[%s4 + $0x3a0] sm:$0xff]
    %v1772 = vld [vmem:[%s4 + $0x3a8] sm:$0xff]
    %v1773 = vld [vmem:[%s4 + $0x3b0] sm:$0xff]
    %v1774 = vld [vmem:[%s4 + $0x3b8] sm:$0xff]
    %v1775 = vld [vmem:[%s4 + $0x3c0] sm:$0xff]
    %v1776 = vld [vmem:[%s4 + $0x3c8] sm:$0xff]
    %v1777 = vld [vmem:[%s4 + $0x3d0] sm:$0xff]
    %v1778 = vld [vmem:[%s4 + $0x3d8] sm:$0xff]
    %v1779 = vld [vmem:[%s4 + $0x3e0] sm:$0xff]
    %v1780 = vld [vmem:[%s4 + $0x3e8] sm:$0xff]
    %v1781 = vld [vmem:[%s4 + $0x3f0] sm:$0xff]
    %v1782 = vld [vmem:[%s4 + $0x3f8] sm:$0xff]
    %v1783 = vld [vmem:[%s5] sm:$0xf]
    %v1785 = vlaneseq
    %v1786 = vshrl.u32 %v1785, 7
    %v1787 = vsub.s32 0, %v1786
    %v1788 = vrot.slane %v1783, %v1787
    %v1789 = vlaneseq
    %v1790 = vshrl.u32 %v1789, 7
    %v1791 = vsub.s32 1, %v1790
    %v1792 = vrot.slane %v1783, %v1791
    %v1793 = vlaneseq
    %v1794 = vshrl.u32 %v1793, 7
    %v1795 = vsub.s32 2, %v1794
    %v1796 = vrot.slane %v1783, %v1795
    %v1797 = vlaneseq
    %v1798 = vshrl.u32 %v1797, 7
    %v1799 = vsub.s32 3, %v1798
    %v1800 = vrot.slane %v1783, %v1799
    %v1933 = vunpack.c.l.b16 %v1655
    %v1934 = vunpack.c.h.b16 %v1655
    %v1935 = vunpack.c.l.b16 %v1656
    %v1936 = vunpack.c.h.b16 %v1656
    %v1937 = vunpack.c.l.b16 %v1657
    %v1938 = vunpack.c.h.b16 %v1657
    %v1939 = vunpack.c.l.b16 %v1658
    %v1940 = vunpack.c.h.b16 %v1658
    %v1941 = vunpack.c.l.b16 %v1659
    %v1942 = vunpack.c.h.b16 %v1659
    %v1943 = vunpack.c.l.b16 %v1660
    %v1944 = vunpack.c.h.b16 %v1660
    %v1945 = vunpack.c.l.b16 %v1661
    %v1946 = vunpack.c.h.b16 %v1661
    %v1947 = vunpack.c.l.b16 %v1662
    %v1948 = vunpack.c.h.b16 %v1662
    %v1949 = vunpack.c.l.b16 %v1663
    %v1950 = vunpack.c.h.b16 %v1663
    %v1951 = vunpack.c.l.b16 %v1664
    %v1952 = vunpack.c.h.b16 %v1664
    %v1953 = vunpack.c.l.b16 %v1665
    %v1954 = vunpack.c.h.b16 %v1665
    %v1955 = vunpack.c.l.b16 %v1666
    %v1956 = vunpack.c.h.b16 %v1666
    %v1957 = vunpack.c.l.b16 %v1667
    %v1958 = vunpack.c.h.b16 %v1667
    %v1959 = vunpack.c.l.b16 %v1668
    %v1960 = vunpack.c.h.b16 %v1668
    %v1961 = vunpack.c.l.b16 %v1669
    %v1962 = vunpack.c.h.b16 %v1669
    %v1963 = vunpack.c.l.b16 %v1670
    %v1964 = vunpack.c.h.b16 %v1670
    %v1965 = vunpack.c.l.b16 %v1671
    %v1966 = vunpack.c.h.b16 %v1671
    %v1967 = vunpack.c.l.b16 %v1672
    %v1968 = vunpack.c.h.b16 %v1672
    %v1969 = vunpack.c.l.b16 %v1673
    %v1970 = vunpack.c.h.b16 %v1673
    %v1971 = vunpack.c.l.b16 %v1674
    %v1972 = vunpack.c.h.b16 %v1674
    %v1973 = vunpack.c.l.b16 %v1675
    %v1974 = vunpack.c.h.b16 %v1675
    %v1975 = vunpack.c.l.b16 %v1676
    %v1976 = vunpack.c.h.b16 %v1676
    %v1977 = vunpack.c.l.b16 %v1677
    %v1978 = vunpack.c.h.b16 %v1677
    %v1979 = vunpack.c.l.b16 %v1678
    %v1980 = vunpack.c.h.b16 %v1678
    %v1981 = vunpack.c.l.b16 %v1679
    %v1982 = vunpack.c.h.b16 %v1679
    %v1983 = vunpack.c.l.b16 %v1680
    %v1984 = vunpack.c.h.b16 %v1680
    %v1985 = vunpack.c.l.b16 %v1681
    %v1986 = vunpack.c.h.b16 %v1681
    %v1987 = vunpack.c.l.b16 %v1682
    %v1988 = vunpack.c.h.b16 %v1682
    %v1989 = vunpack.c.l.b16 %v1683
    %v1990 = vunpack.c.h.b16 %v1683
    %v1991 = vunpack.c.l.b16 %v1684
    %v1992 = vunpack.c.h.b16 %v1684
    %v1993 = vunpack.c.l.b16 %v1685
    %v1994 = vunpack.c.h.b16 %v1685
    %v1995 = vunpack.c.l.b16 %v1686
    %v1996 = vunpack.c.h.b16 %v1686
    %v1997 = vunpack.c.l.b16 %v1687
    %v1998 = vunpack.c.h.b16 %v1687
    %v1999 = vunpack.c.l.b16 %v1688
    %v2000 = vunpack.c.h.b16 %v1688
    %v2001 = vunpack.c.l.b16 %v1689
    %v2002 = vunpack.c.h.b16 %v1689
    %v2003 = vunpack.c.l.b16 %v1690
    %v2004 = vunpack.c.h.b16 %v1690
    %v2005 = vunpack.c.l.b16 %v1691
    %v2006 = vunpack.c.h.b16 %v1691
    %v2007 = vunpack.c.l.b16 %v1692
    %v2008 = vunpack.c.h.b16 %v1692
    %v2009 = vunpack.c.l.b16 %v1693
    %v2010 = vunpack.c.h.b16 %v1693
    %v2011 = vunpack.c.l.b16 %v1694
    %v2012 = vunpack.c.h.b16 %v1694
    %v2013 = vunpack.c.l.b16 %v1695
    %v2014 = vunpack.c.h.b16 %v1695
    %v2015 = vunpack.c.l.b16 %v1696
    %v2016 = vunpack.c.h.b16 %v1696
    %v2017 = vunpack.c.l.b16 %v1697
    %v2018 = vunpack.c.h.b16 %v1697
    %v2019 = vunpack.c.l.b16 %v1698
    %v2020 = vunpack.c.h.b16 %v1698
    %v2021 = vunpack.c.l.b16 %v1699
    %v2022 = vunpack.c.h.b16 %v1699
    %v2023 = vunpack.c.l.b16 %v1700
    %v2024 = vunpack.c.h.b16 %v1700
    %v2025 = vunpack.c.l.b16 %v1701
    %v2026 = vunpack.c.h.b16 %v1701
    %v2027 = vunpack.c.l.b16 %v1702
    %v2028 = vunpack.c.h.b16 %v1702
    %v2029 = vunpack.c.l.b16 %v1703
    %v2030 = vunpack.c.h.b16 %v1703
    %v2031 = vunpack.c.l.b16 %v1704
    %v2032 = vunpack.c.h.b16 %v1704
    %v2033 = vunpack.c.l.b16 %v1705
    %v2034 = vunpack.c.h.b16 %v1705
    %v2035 = vunpack.c.l.b16 %v1706
    %v2036 = vunpack.c.h.b16 %v1706
    %v2037 = vunpack.c.l.b16 %v1707
    %v2038 = vunpack.c.h.b16 %v1707
    %v2039 = vunpack.c.l.b16 %v1708
    %v2040 = vunpack.c.h.b16 %v1708
    %v2041 = vunpack.c.l.b16 %v1709
    %v2042 = vunpack.c.h.b16 %v1709
    %v2043 = vunpack.c.l.b16 %v1710
    %v2044 = vunpack.c.h.b16 %v1710
    %v2045 = vunpack.c.l.b16 %v1711
    %v2046 = vunpack.c.h.b16 %v1711
    %v2047 = vunpack.c.l.b16 %v1712
    %v2048 = vunpack.c.h.b16 %v1712
    %v2049 = vunpack.c.l.b16 %v1713
    %v2050 = vunpack.c.h.b16 %v1713
    %v2051 = vunpack.c.l.b16 %v1714
    %v2052 = vunpack.c.h.b16 %v1714
    %v2053 = vunpack.c.l.b16 %v1715
    %v2054 = vunpack.c.h.b16 %v1715
    %v2055 = vunpack.c.l.b16 %v1716
    %v2056 = vunpack.c.h.b16 %v1716
    %v2057 = vunpack.c.l.b16 %v1717
    %v2058 = vunpack.c.h.b16 %v1717
    %v2059 = vunpack.c.l.b16 %v1718
    %v2060 = vunpack.c.h.b16 %v1718
    %v2061 = vunpack.c.l.b16 %v1719
    %v2062 = vunpack.c.h.b16 %v1719
    %v2063 = vunpack.c.l.b16 %v1720
    %v2064 = vunpack.c.h.b16 %v1720
    %v2065 = vunpack.c.l.b16 %v1721
    %v2066 = vunpack.c.h.b16 %v1721
    %v2067 = vunpack.c.l.b16 %v1722
    %v2068 = vunpack.c.h.b16 %v1722
    %v2069 = vunpack.c.l.b16 %v1723
    %v2070 = vunpack.c.h.b16 %v1723
    %v2071 = vunpack.c.l.b16 %v1724
    %v2072 = vunpack.c.h.b16 %v1724
    %v2073 = vunpack.c.l.b16 %v1725
    %v2074 = vunpack.c.h.b16 %v1725
    %v2075 = vunpack.c.l.b16 %v1726
    %v2076 = vunpack.c.h.b16 %v1726
    %v2077 = vunpack.c.l.b16 %v1727
    %v2078 = vunpack.c.h.b16 %v1727
    %v2079 = vunpack.c.l.b16 %v1728
    %v2080 = vunpack.c.h.b16 %v1728
    %v2081 = vunpack.c.l.b16 %v1729
    %v2082 = vunpack.c.h.b16 %v1729
    %v2083 = vunpack.c.l.b16 %v1730
    %v2084 = vunpack.c.h.b16 %v1730
    %v2085 = vunpack.c.l.b16 %v1731
    %v2086 = vunpack.c.h.b16 %v1731
    %v2087 = vunpack.c.l.b16 %v1732
    %v2088 = vunpack.c.h.b16 %v1732
    %v2089 = vunpack.c.l.b16 %v1733
    %v2090 = vunpack.c.h.b16 %v1733
    %v2091 = vunpack.c.l.b16 %v1734
    %v2092 = vunpack.c.h.b16 %v1734
    %v2093 = vunpack.c.l.b16 %v1735
    %v2094 = vunpack.c.h.b16 %v1735
    %v2095 = vunpack.c.l.b16 %v1736
    %v2096 = vunpack.c.h.b16 %v1736
    %v2097 = vunpack.c.l.b16 %v1737
    %v2098 = vunpack.c.h.b16 %v1737
    %v2099 = vunpack.c.l.b16 %v1738
    %v2100 = vunpack.c.h.b16 %v1738
    %v2101 = vunpack.c.l.b16 %v1739
    %v2102 = vunpack.c.h.b16 %v1739
    %v2103 = vunpack.c.l.b16 %v1740
    %v2104 = vunpack.c.h.b16 %v1740
    %v2105 = vunpack.c.l.b16 %v1741
    %v2106 = vunpack.c.h.b16 %v1741
    %v2107 = vunpack.c.l.b16 %v1742
    %v2108 = vunpack.c.h.b16 %v1742
    %v2109 = vunpack.c.l.b16 %v1743
    %v2110 = vunpack.c.h.b16 %v1743
    %v2111 = vunpack.c.l.b16 %v1744
    %v2112 = vunpack.c.h.b16 %v1744
    %v2113 = vunpack.c.l.b16 %v1745
    %v2114 = vunpack.c.h.b16 %v1745
    %v2115 = vunpack.c.l.b16 %v1746
    %v2116 = vunpack.c.h.b16 %v1746
    %v2117 = vunpack.c.l.b16 %v1747
    %v2118 = vunpack.c.h.b16 %v1747
    %v2119 = vunpack.c.l.b16 %v1748
    %v2120 = vunpack.c.h.b16 %v1748
    %v2121 = vunpack.c.l.b16 %v1749
    %v2122 = vunpack.c.h.b16 %v1749
    %v2123 = vunpack.c.l.b16 %v1750
    %v2124 = vunpack.c.h.b16 %v1750
    %v2125 = vunpack.c.l.b16 %v1751
    %v2126 = vunpack.c.h.b16 %v1751
    %v2127 = vunpack.c.l.b16 %v1752
    %v2128 = vunpack.c.h.b16 %v1752
    %v2129 = vunpack.c.l.b16 %v1753
    %v2130 = vunpack.c.h.b16 %v1753
    %v2131 = vunpack.c.l.b16 %v1754
    %v2132 = vunpack.c.h.b16 %v1754
    %v2133 = vunpack.c.l.b16 %v1755
    %v2134 = vunpack.c.h.b16 %v1755
    %v2135 = vunpack.c.l.b16 %v1756
    %v2136 = vunpack.c.h.b16 %v1756
    %v2137 = vunpack.c.l.b16 %v1757
    %v2138 = vunpack.c.h.b16 %v1757
    %v2139 = vunpack.c.l.b16 %v1758
    %v2140 = vunpack.c.h.b16 %v1758
    %v2141 = vunpack.c.l.b16 %v1759
    %v2142 = vunpack.c.h.b16 %v1759
    %v2143 = vunpack.c.l.b16 %v1760
    %v2144 = vunpack.c.h.b16 %v1760
    %v2145 = vunpack.c.l.b16 %v1761
    %v2146 = vunpack.c.h.b16 %v1761
    %v2147 = vunpack.c.l.b16 %v1762
    %v2148 = vunpack.c.h.b16 %v1762
    %v2149 = vunpack.c.l.b16 %v1763
    %v2150 = vunpack.c.h.b16 %v1763
    %v2151 = vunpack.c.l.b16 %v1764
    %v2152 = vunpack.c.h.b16 %v1764
    %v2153 = vunpack.c.l.b16 %v1765
    %v2154 = vunpack.c.h.b16 %v1765
    %v2155 = vunpack.c.l.b16 %v1766
    %v2156 = vunpack.c.h.b16 %v1766
    %v2157 = vunpack.c.l.b16 %v1767
    %v2158 = vunpack.c.h.b16 %v1767
    %v2159 = vunpack.c.l.b16 %v1768
    %v2160 = vunpack.c.h.b16 %v1768
    %v2161 = vunpack.c.l.b16 %v1769
    %v2162 = vunpack.c.h.b16 %v1769
    %v2163 = vunpack.c.l.b16 %v1770
    %v2164 = vunpack.c.h.b16 %v1770
    %v2165 = vunpack.c.l.b16 %v1771
    %v2166 = vunpack.c.h.b16 %v1771
    %v2167 = vunpack.c.l.b16 %v1772
    %v2168 = vunpack.c.h.b16 %v1772
    %v2169 = vunpack.c.l.b16 %v1773
    %v2170 = vunpack.c.h.b16 %v1773
    %v2171 = vunpack.c.l.b16 %v1774
    %v2172 = vunpack.c.h.b16 %v1774
    %v2173 = vunpack.c.l.b16 %v1775
    %v2174 = vunpack.c.h.b16 %v1775
    %v2175 = vunpack.c.l.b16 %v1776
    %v2176 = vunpack.c.h.b16 %v1776
    %v2177 = vunpack.c.l.b16 %v1777
    %v2178 = vunpack.c.h.b16 %v1777
    %v2179 = vunpack.c.l.b16 %v1778
    %v2180 = vunpack.c.h.b16 %v1778
    %v2181 = vunpack.c.l.b16 %v1779
    %v2182 = vunpack.c.h.b16 %v1779
    %v2183 = vunpack.c.l.b16 %v1780
    %v2184 = vunpack.c.h.b16 %v1780
    %v2185 = vunpack.c.l.b16 %v1781
    %v2186 = vunpack.c.h.b16 %v1781
    %v2187 = vunpack.c.l.b16 %v1782
    %v2188 = vunpack.c.h.b16 %v1782
    %v2189 = vpack.c.b16 %v1937, %v1933
    %v2190 = vpack.c.b16 %v1938, %v1934
    %v2191 = vpack.c.b16 %v1939, %v1935
    %v2192 = vpack.c.b16 %v1940, %v1936
    %v2193 = vpack.c.b16 %v1945, %v1941
    %v2194 = vpack.c.b16 %v1946, %v1942
    %v2195 = vpack.c.b16 %v1947, %v1943
    %v2196 = vpack.c.b16 %v1948, %v1944
    %v2197 = vpack.c.b16 %v1953, %v1949
    %v2198 = vpack.c.b16 %v1954, %v1950
    %v2199 = vpack.c.b16 %v1955, %v1951
    %v2200 = vpack.c.b16 %v1956, %v1952
    %v2201 = vpack.c.b16 %v1961, %v1957
    %v2202 = vpack.c.b16 %v1962, %v1958
    %v2203 = vpack.c.b16 %v1963, %v1959
    %v2204 = vpack.c.b16 %v1964, %v1960
    %v2205 = vpack.c.b16 %v1969, %v1965
    %v2206 = vpack.c.b16 %v1970, %v1966
    %v2207 = vpack.c.b16 %v1971, %v1967
    %v2208 = vpack.c.b16 %v1972, %v1968
    %v2209 = vpack.c.b16 %v1977, %v1973
    %v2210 = vpack.c.b16 %v1978, %v1974
    %v2211 = vpack.c.b16 %v1979, %v1975
    %v2212 = vpack.c.b16 %v1980, %v1976
    %v2213 = vpack.c.b16 %v1985, %v1981
    %v2214 = vpack.c.b16 %v1986, %v1982
    %v2215 = vpack.c.b16 %v1987, %v1983
    %v2216 = vpack.c.b16 %v1988, %v1984
    %v2217 = vpack.c.b16 %v1993, %v1989
    %v2218 = vpack.c.b16 %v1994, %v1990
    %v2219 = vpack.c.b16 %v1995, %v1991
    %v2220 = vpack.c.b16 %v1996, %v1992
    %v2221 = vpack.c.b16 %v2001, %v1997
    %v2222 = vpack.c.b16 %v2002, %v1998
    %v2223 = vpack.c.b16 %v2003, %v1999
    %v2224 = vpack.c.b16 %v2004, %v2000
    %v2225 = vpack.c.b16 %v2009, %v2005
    %v2226 = vpack.c.b16 %v2010, %v2006
    %v2227 = vpack.c.b16 %v2011, %v2007
    %v2228 = vpack.c.b16 %v2012, %v2008
    %v2229 = vpack.c.b16 %v2017, %v2013
    %v2230 = vpack.c.b16 %v2018, %v2014
    %v2231 = vpack.c.b16 %v2019, %v2015
    %v2232 = vpack.c.b16 %v2020, %v2016
    %v2233 = vpack.c.b16 %v2025, %v2021
    %v2234 = vpack.c.b16 %v2026, %v2022
    %v2235 = vpack.c.b16 %v2027, %v2023
    %v2236 = vpack.c.b16 %v2028, %v2024
    %v2237 = vpack.c.b16 %v2033, %v2029
    %v2238 = vpack.c.b16 %v2034, %v2030
    %v2239 = vpack.c.b16 %v2035, %v2031
    %v2240 = vpack.c.b16 %v2036, %v2032
    %v2241 = vpack.c.b16 %v2041, %v2037
    %v2242 = vpack.c.b16 %v2042, %v2038
    %v2243 = vpack.c.b16 %v2043, %v2039
    %v2244 = vpack.c.b16 %v2044, %v2040
    %v2245 = vpack.c.b16 %v2049, %v2045
    %v2246 = vpack.c.b16 %v2050, %v2046
    %v2247 = vpack.c.b16 %v2051, %v2047
    %v2248 = vpack.c.b16 %v2052, %v2048
    %v2249 = vpack.c.b16 %v2057, %v2053
    %v2250 = vpack.c.b16 %v2058, %v2054
    %v2251 = vpack.c.b16 %v2059, %v2055
    %v2252 = vpack.c.b16 %v2060, %v2056
    %v2253 = vpack.c.b16 %v2065, %v2061
    %v2254 = vpack.c.b16 %v2066, %v2062
    %v2255 = vpack.c.b16 %v2067, %v2063
    %v2256 = vpack.c.b16 %v2068, %v2064
    %v2257 = vpack.c.b16 %v2073, %v2069
    %v2258 = vpack.c.b16 %v2074, %v2070
    %v2259 = vpack.c.b16 %v2075, %v2071
    %v2260 = vpack.c.b16 %v2076, %v2072
    %v2261 = vpack.c.b16 %v2081, %v2077
    %v2262 = vpack.c.b16 %v2082, %v2078
    %v2263 = vpack.c.b16 %v2083, %v2079
    %v2264 = vpack.c.b16 %v2084, %v2080
    %v2265 = vpack.c.b16 %v2089, %v2085
    %v2266 = vpack.c.b16 %v2090, %v2086
    %v2267 = vpack.c.b16 %v2091, %v2087
    %v2268 = vpack.c.b16 %v2092, %v2088
    %v2269 = vpack.c.b16 %v2097, %v2093
    %v2270 = vpack.c.b16 %v2098, %v2094
    %v2271 = vpack.c.b16 %v2099, %v2095
    %v2272 = vpack.c.b16 %v2100, %v2096
    %v2273 = vpack.c.b16 %v2105, %v2101
    %v2274 = vpack.c.b16 %v2106, %v2102
    %v2275 = vpack.c.b16 %v2107, %v2103
    %v2276 = vpack.c.b16 %v2108, %v2104
    %v2277 = vpack.c.b16 %v2113, %v2109
    %v2278 = vpack.c.b16 %v2114, %v2110
    %v2279 = vpack.c.b16 %v2115, %v2111
    %v2280 = vpack.c.b16 %v2116, %v2112
    %v2281 = vpack.c.b16 %v2121, %v2117
    %v2282 = vpack.c.b16 %v2122, %v2118
    %v2283 = vpack.c.b16 %v2123, %v2119
    %v2284 = vpack.c.b16 %v2124, %v2120
    %v2285 = vpack.c.b16 %v2129, %v2125
    %v2286 = vpack.c.b16 %v2130, %v2126
    %v2287 = vpack.c.b16 %v2131, %v2127
    %v2288 = vpack.c.b16 %v2132, %v2128
    %v2289 = vpack.c.b16 %v2137, %v2133
    %v2290 = vpack.c.b16 %v2138, %v2134
    %v2291 = vpack.c.b16 %v2139, %v2135
    %v2292 = vpack.c.b16 %v2140, %v2136
    %v2293 = vpack.c.b16 %v2145, %v2141
    %v2294 = vpack.c.b16 %v2146, %v2142
    %v2295 = vpack.c.b16 %v2147, %v2143
    %v2296 = vpack.c.b16 %v2148, %v2144
    %v2297 = vpack.c.b16 %v2153, %v2149
    %v2298 = vpack.c.b16 %v2154, %v2150
    %v2299 = vpack.c.b16 %v2155, %v2151
    %v2300 = vpack.c.b16 %v2156, %v2152
    %v2301 = vpack.c.b16 %v2161, %v2157
    %v2302 = vpack.c.b16 %v2162, %v2158
    %v2303 = vpack.c.b16 %v2163, %v2159
    %v2304 = vpack.c.b16 %v2164, %v2160
    %v2305 = vpack.c.b16 %v2169, %v2165
    %v2306 = vpack.c.b16 %v2170, %v2166
    %v2307 = vpack.c.b16 %v2171, %v2167
    %v2308 = vpack.c.b16 %v2172, %v2168
    %v2309 = vpack.c.b16 %v2177, %v2173
    %v2310 = vpack.c.b16 %v2178, %v2174
    %v2311 = vpack.c.b16 %v2179, %v2175
    %v2312 = vpack.c.b16 %v2180, %v2176
    %v2313 = vpack.c.b16 %v2185, %v2181
    %v2314 = vpack.c.b16 %v2186, %v2182
    %v2315 = vpack.c.b16 %v2187, %v2183
    %v2316 = vpack.c.b16 %v2188, %v2184
    %2445 = vmatprep.subr.bf16.mxu0 %v2190
    %2446 = vmatpush1.bf16.msra.mxu0 %v2189
    %2447 = vmatprep.subr.bf16.mxu0 %v2194
    %2448 = vmatpush1.bf16.msra.mxu0 %v2193
    %2449 = vmatprep.subr.bf16.mxu0 %v2198
    %2450 = vmatpush1.bf16.msra.mxu0 %v2197
    %2451 = vmatprep.subr.bf16.mxu0 %v2202
    %2452 = vmatpush1.bf16.msra.mxu0 %v2201
    %2453 = vmatprep.subr.bf16.mxu0 %v2206
    %2454 = vmatpush1.bf16.msra.mxu0 %v2205
    %2455 = vmatprep.subr.bf16.mxu0 %v2210
    %2456 = vmatpush1.bf16.msra.mxu0 %v2209
    %2457 = vmatprep.subr.bf16.mxu0 %v2214
    %2458 = vmatpush1.bf16.msra.mxu0 %v2213
    %2459 = vmatprep.subr.bf16.mxu0 %v2218
    %2460 = vmatpush1.bf16.msra.mxu0 %v2217
    %2461 = vmatprep.subr.bf16.mxu0 %v2222
    %2462 = vmatpush1.bf16.msra.mxu0 %v2221
    %2463 = vmatprep.subr.bf16.mxu0 %v2226
    %2464 = vmatpush1.bf16.msra.mxu0 %v2225
    %2465 = vmatprep.subr.bf16.mxu0 %v2230
    %2466 = vmatpush1.bf16.msra.mxu0 %v2229
    %2467 = vmatprep.subr.bf16.mxu0 %v2234
    %2468 = vmatpush1.bf16.msra.mxu0 %v2233
    %2469 = vmatprep.subr.bf16.mxu0 %v2238
    %2470 = vmatpush1.bf16.msra.mxu0 %v2237
    %2471 = vmatprep.subr.bf16.mxu0 %v2242
    %2472 = vmatpush1.bf16.msra.mxu0 %v2241
    %2473 = vmatprep.subr.bf16.mxu0 %v2246
    %2474 = vmatpush1.bf16.msra.mxu0 %v2245
    %2475 = vmatprep.subr.bf16.mxu0 %v2250
    %2476 = vmatpush1.bf16.msra.mxu0 %v2249
    %2477 = vmatprep.mubr.bf16.mxu0 %v1652
    %2478 = vmatmul.mubr.bf16.gmra.mrb[0].mxu0 %v1651
    %v2479 = vpop.f32.mrb[0].mxu0
    %v2480 = vadd.f32 %v1788, %v2479
    %v2481 = vpop.f32.mrb[0].mxu0
    %v2482 = vadd.f32 %v1792, %v2481
    %v2483 = vpop.f32.mrb[0].mxu0
    %v2484 = vpop.f32.mrb[0].mxu0
    %2485 = vdwg.mxu0
    %2486 = vmatprep.subr.bf16.mxu0 %v2254
    %2487 = vmatpush1.bf16.msra.mxu0 %v2253
    %2488 = vmatprep.subr.bf16.mxu0 %v2258
    %2489 = vmatpush1.bf16.msra.mxu0 %v2257
    %2490 = vmatprep.subr.bf16.mxu0 %v2262
    %2491 = vmatpush1.bf16.msra.mxu0 %v2261
    %2492 = vmatprep.subr.bf16.mxu0 %v2266
    %2493 = vmatpush1.bf16.msra.mxu0 %v2265
    %2494 = vmatprep.subr.bf16.mxu0 %v2270
    %2495 = vmatpush1.bf16.msra.mxu0 %v2269
    %2496 = vmatprep.subr.bf16.mxu0 %v2274
    %2497 = vmatpush1.bf16.msra.mxu0 %v2273
    %2498 = vmatprep.subr.bf16.mxu0 %v2278
    %2499 = vmatpush1.bf16.msra.mxu0 %v2277
    %2500 = vmatprep.subr.bf16.mxu0 %v2282
    %2501 = vmatpush1.bf16.msra.mxu0 %v2281
    %2502 = vmatprep.subr.bf16.mxu0 %v2286
    %2503 = vmatpush1.bf16.msra.mxu0 %v2285
    %2504 = vmatprep.subr.bf16.mxu0 %v2290
    %2505 = vmatpush1.bf16.msra.mxu0 %v2289
    %2506 = vmatprep.subr.bf16.mxu0 %v2294
    %2507 = vmatpush1.bf16.msra.mxu0 %v2293
    %2508 = vmatprep.subr.bf16.mxu0 %v2298
    %2509 = vmatpush1.bf16.msra.mxu0 %v2297
    %2510 = vmatprep.subr.bf16.mxu0 %v2302
    %2511 = vmatpush1.bf16.msra.mxu0 %v2301
    %2512 = vmatprep.subr.bf16.mxu0 %v2306
    %2513 = vmatpush1.bf16.msra.mxu0 %v2305
    %2514 = vmatprep.subr.bf16.mxu0 %v2310
    %2515 = vmatpush1.bf16.msra.mxu0 %v2309
    %2516 = vmatprep.subr.bf16.mxu0 %v2314
    %2517 = vmatpush1.bf16.msra.mxu0 %v2313
    %2518 = vmatprep.mubr.bf16.mxu0 %v1654
    %2519 = vmatmul.mubr.bf16.gmra.mrb[0].mxu0 %v1653
    %v2520 = vpop.f32.mrb[0].mxu0
    %v2521 = vadd.f32 %v2480, %v2520
    %v2522 = vpop.f32.mrb[0].mxu0
    %v2523 = vadd.f32 %v2482, %v2522
    %v2524 = vpop.f32.mrb[0].mxu0
    %v2525 = vpop.f32.mrb[0].mxu0
    %2526 = vdwg.mxu0
    %2527 = vmatprep.subr.bf16.mxu0 %v2192
    %2528 = vmatpush1.bf16.msra.mxu0 %v2191
    %2529 = vmatprep.subr.bf16.mxu0 %v2196
    %2530 = vmatpush1.bf16.msra.mxu0 %v2195
    %2531 = vmatprep.subr.bf16.mxu0 %v2200
    %2532 = vmatpush1.bf16.msra.mxu0 %v2199
    %2533 = vmatprep.subr.bf16.mxu0 %v2204
    %2534 = vmatpush1.bf16.msra.mxu0 %v2203
    %2535 = vmatprep.subr.bf16.mxu0 %v2208
    %2536 = vmatpush1.bf16.msra.mxu0 %v2207
    %2537 = vmatprep.subr.bf16.mxu0 %v2212
    %2538 = vmatpush1.bf16.msra.mxu0 %v2211
    %2539 = vmatprep.subr.bf16.mxu0 %v2216
    %2540 = vmatpush1.bf16.msra.mxu0 %v2215
    %2541 = vmatprep.subr.bf16.mxu0 %v2220
    %2542 = vmatpush1.bf16.msra.mxu0 %v2219
    %2543 = vmatprep.subr.bf16.mxu0 %v2224
    %2544 = vmatpush1.bf16.msra.mxu0 %v2223
    %2545 = vmatprep.subr.bf16.mxu0 %v2228
    %2546 = vmatpush1.bf16.msra.mxu0 %v2227
    %2547 = vmatprep.subr.bf16.mxu0 %v2232
    %2548 = vmatpush1.bf16.msra.mxu0 %v2231
    %2549 = vmatprep.subr.bf16.mxu0 %v2236
    %2550 = vmatpush1.bf16.msra.mxu0 %v2235
    %2551 = vmatprep.subr.bf16.mxu0 %v2240
    %2552 = vmatpush1.bf16.msra.mxu0 %v2239
    %2553 = vmatprep.subr.bf16.mxu0 %v2244
    %2554 = vmatpush1.bf16.msra.mxu0 %v2243
    %2555 = vmatprep.subr.bf16.mxu0 %v2248
    %2556 = vmatpush1.bf16.msra.mxu0 %v2247
    %2557 = vmatprep.subr.bf16.mxu0 %v2252
    %2558 = vmatpush1.bf16.msra.mxu0 %v2251
    %2559 = vmatprep.mubr.bf16.mxu0 %v1652
    %2560 = vmatmul.mubr.bf16.gmra.mrb[0].mxu0 %v1651
    %v2561 = vpop.f32.mrb[0].mxu0
    %v2562 = vadd.f32 %v1796, %v2561
    %v2563 = vpop.f32.mrb[0].mxu0
    %v2564 = vadd.f32 %v1800, %v2563
    %v2565 = vpop.f32.mrb[0].mxu0
    %v2566 = vpop.f32.mrb[0].mxu0
    %2567 = vdwg.mxu0
    %2568 = vmatprep.subr.bf16.mxu0 %v2256
    %2569 = vmatpush1.bf16.msra.mxu0 %v2255
    %2570 = vmatprep.subr.bf16.mxu0 %v2260
    %2571 = vmatpush1.bf16.msra.mxu0 %v2259
    %2572 = vmatprep.subr.bf16.mxu0 %v2264
    %2573 = vmatpush1.bf16.msra.mxu0 %v2263
    %2574 = vmatprep.subr.bf16.mxu0 %v2268
    %2575 = vmatpush1.bf16.msra.mxu0 %v2267
    %2576 = vmatprep.subr.bf16.mxu0 %v2272
    %2577 = vmatpush1.bf16.msra.mxu0 %v2271
    %2578 = vmatprep.subr.bf16.mxu0 %v2276
    %2579 = vmatpush1.bf16.msra.mxu0 %v2275
    %2580 = vmatprep.subr.bf16.mxu0 %v2280
    %2581 = vmatpush1.bf16.msra.mxu0 %v2279
    %2582 = vmatprep.subr.bf16.mxu0 %v2284
    %2583 = vmatpush1.bf16.msra.mxu0 %v2283
    %2584 = vmatprep.subr.bf16.mxu0 %v2288
    %2585 = vmatpush1.bf16.msra.mxu0 %v2287
    %2586 = vmatprep.subr.bf16.mxu0 %v2292
    %2587 = vmatpush1.bf16.msra.mxu0 %v2291
    %2588 = vmatprep.subr.bf16.mxu0 %v2296
    %2589 = vmatpush1.bf16.msra.mxu0 %v2295
    %2590 = vmatprep.subr.bf16.mxu0 %v2300
    %2591 = vmatpush1.bf16.msra.mxu0 %v2299
    %2592 = vmatprep.subr.bf16.mxu0 %v2304
    %2593 = vmatpush1.bf16.msra.mxu0 %v2303
    %2594 = vmatprep.subr.bf16.mxu0 %v2308
    %2595 = vmatpush1.bf16.msra.mxu0 %v2307
    %2596 = vmatprep.subr.bf16.mxu0 %v2312
    %2597 = vmatpush1.bf16.msra.mxu0 %v2311
    %2598 = vmatprep.subr.bf16.mxu0 %v2316
    %2599 = vmatpush1.bf16.msra.mxu0 %v2315
    %2600 = vmatprep.mubr.bf16.mxu0 %v1654
    %2601 = vmatmul.mubr.bf16.gmra.mrb[0].mxu0 %v1653
    %v2602 = vpop.f32.mrb[0].mxu0
    %v2603 = vadd.f32 %v2562, %v2602
    %v2604 = vpop.f32.mrb[0].mxu0
    %v2605 = vadd.f32 %v2564, %v2604
    %v2606 = vpop.f32.mrb[0].mxu0
    %v2607 = vpop.f32.mrb[0].mxu0
    %2608 = vdwg.mxu0
    %v2609 = vmax.f32 %v2521, 0.0
    %v2610 = vmax.f32 %v2523, 0.0
    %v2611 = vmax.f32 %v2603, 0.0
    %v2612 = vmax.f32 %v2605, 0.0
    %v2613 = vpack.c.bf16 %v2609, %v2609
    %v2614 = vpack.c.bf16 %v2610, %v2610
    %v2615 = vpack.c.bf16 %v2611, %v2611
    %v2616 = vpack.c.bf16 %v2612, %v2612
    %v2617 = vld [vmem:[%s6] sm:$0xf]
    %v2618 = vld [vmem:[%s6 + $0x4] sm:$0xf]
    %v2619 = vld [vmem:[%s6 + $0x8] sm:$0xf]
    %v2620 = vld [vmem:[%s6 + $0xc] sm:$0xf]
    %v2621 = vld [vmem:[%s6 + $0x10] sm:$0xf]
    %v2622 = vld [vmem:[%s6 + $0x14] sm:$0xf]
    %v2623 = vld [vmem:[%s6 + $0x18] sm:$0xf]
    %v2624 = vld [vmem:[%s6 + $0x1c] sm:$0xf]
    %v2625 = vld [vmem:[%s6 + $0x20] sm:$0xf]
    %v2626 = vld [vmem:[%s6 + $0x24] sm:$0xf]
    %v2627 = vld [vmem:[%s6 + $0x28] sm:$0xf]
    %v2628 = vld [vmem:[%s6 + $0x2c] sm:$0xf]
    %v2629 = vld [vmem:[%s6 + $0x30] sm:$0xf]
    %v2630 = vld [vmem:[%s6 + $0x34] sm:$0xf]
    %v2631 = vld [vmem:[%s6 + $0x38] sm:$0xf]
    %v2632 = vld [vmem:[%s6 + $0x3c] sm:$0xf]
    %v2633 = vld [vmem:[%s6 + $0x40] sm:$0xf]
    %v2634 = vld [vmem:[%s6 + $0x44] sm:$0xf]
    %v2635 = vld [vmem:[%s6 + $0x48] sm:$0xf]
    %v2636 = vld [vmem:[%s6 + $0x4c] sm:$0xf]
    %v2637 = vld [vmem:[%s6 + $0x50] sm:$0xf]
    %v2638 = vld [vmem:[%s6 + $0x54] sm:$0xf]
    %v2639 = vld [vmem:[%s6 + $0x58] sm:$0xf]
    %v2640 = vld [vmem:[%s6 + $0x5c] sm:$0xf]
    %v2641 = vld [vmem:[%s6 + $0x60] sm:$0xf]
    %v2642 = vld [vmem:[%s6 + $0x64] sm:$0xf]
    %v2643 = vld [vmem:[%s6 + $0x68] sm:$0xf]
    %v2644 = vld [vmem:[%s6 + $0x6c] sm:$0xf]
    %v2645 = vld [vmem:[%s6 + $0x70] sm:$0xf]
    %v2646 = vld [vmem:[%s6 + $0x74] sm:$0xf]
    %v2647 = vld [vmem:[%s6 + $0x78] sm:$0xf]
    %v2648 = vld [vmem:[%s6 + $0x7c] sm:$0xf]
    %v2649 = vld [vmem:[%s6 + $0x80] sm:$0xf]
    %v2650 = vld [vmem:[%s6 + $0x84] sm:$0xf]
    %v2651 = vld [vmem:[%s6 + $0x88] sm:$0xf]
    %v2652 = vld [vmem:[%s6 + $0x8c] sm:$0xf]
    %v2653 = vld [vmem:[%s6 + $0x90] sm:$0xf]
    %v2654 = vld [vmem:[%s6 + $0x94] sm:$0xf]
    %v2655 = vld [vmem:[%s6 + $0x98] sm:$0xf]
    %v2656 = vld [vmem:[%s6 + $0x9c] sm:$0xf]
    %v2657 = vld [vmem:[%s6 + $0xa0] sm:$0xf]
    %v2658 = vld [vmem:[%s6 + $0xa4] sm:$0xf]
    %v2659 = vld [vmem:[%s6 + $0xa8] sm:$0xf]
    %v2660 = vld [vmem:[%s6 + $0xac] sm:$0xf]
    %v2661 = vld [vmem:[%s6 + $0xb0] sm:$0xf]
    %v2662 = vld [vmem:[%s6 + $0xb4] sm:$0xf]
    %v2663 = vld [vmem:[%s6 + $0xb8] sm:$0xf]
    %v2664 = vld [vmem:[%s6 + $0xbc] sm:$0xf]
    %v2665 = vld [vmem:[%s6 + $0xc0] sm:$0xf]
    %v2666 = vld [vmem:[%s6 + $0xc4] sm:$0xf]
    %v2667 = vld [vmem:[%s6 + $0xc8] sm:$0xf]
    %v2668 = vld [vmem:[%s6 + $0xcc] sm:$0xf]
    %v2669 = vld [vmem:[%s6 + $0xd0] sm:$0xf]
    %v2670 = vld [vmem:[%s6 + $0xd4] sm:$0xf]
    %v2671 = vld [vmem:[%s6 + $0xd8] sm:$0xf]
    %v2672 = vld [vmem:[%s6 + $0xdc] sm:$0xf]
    %v2673 = vld [vmem:[%s6 + $0xe0] sm:$0xf]
    %v2674 = vld [vmem:[%s6 + $0xe4] sm:$0xf]
    %v2675 = vld [vmem:[%s6 + $0xe8] sm:$0xf]
    %v2676 = vld [vmem:[%s6 + $0xec] sm:$0xf]
    %v2677 = vld [vmem:[%s6 + $0xf0] sm:$0xf]
    %v2678 = vld [vmem:[%s6 + $0xf4] sm:$0xf]
    %v2679 = vld [vmem:[%s6 + $0xf8] sm:$0xf]
    %v2680 = vld [vmem:[%s6 + $0xfc] sm:$0xf]
    %v2681 = vld [vmem:[%s7] sm:$0x1]
    %v2683 = vlaneseq
    %v2684 = vshrl.u32 %v2683, 7
    %v2685 = vsub.s32 0, %v2684
    %v2686 = vrot.slane %v2681, %v2685
    %v2752 = vunpack.c.l.b16 %v2617
    %v2753 = vunpack.c.l.b16 %v2618
    %v2754 = vunpack.c.l.b16 %v2619
    %v2755 = vunpack.c.l.b16 %v2620
    %v2756 = vunpack.c.l.b16 %v2621
    %v2757 = vunpack.c.l.b16 %v2622
    %v2758 = vunpack.c.l.b16 %v2623
    %v2759 = vunpack.c.l.b16 %v2624
    %v2760 = vunpack.c.l.b16 %v2625
    %v2761 = vunpack.c.l.b16 %v2626
    %v2762 = vunpack.c.l.b16 %v2627
    %v2763 = vunpack.c.l.b16 %v2628
    %v2764 = vunpack.c.l.b16 %v2629
    %v2765 = vunpack.c.l.b16 %v2630
    %v2766 = vunpack.c.l.b16 %v2631
    %v2767 = vunpack.c.l.b16 %v2632
    %v2768 = vunpack.c.l.b16 %v2633
    %v2769 = vunpack.c.l.b16 %v2634
    %v2770 = vunpack.c.l.b16 %v2635
    %v2771 = vunpack.c.l.b16 %v2636
    %v2772 = vunpack.c.l.b16 %v2637
    %v2773 = vunpack.c.l.b16 %v2638
    %v2774 = vunpack.c.l.b16 %v2639
    %v2775 = vunpack.c.l.b16 %v2640
    %v2776 = vunpack.c.l.b16 %v2641
    %v2777 = vunpack.c.l.b16 %v2642
    %v2778 = vunpack.c.l.b16 %v2643
    %v2779 = vunpack.c.l.b16 %v2644
    %v2780 = vunpack.c.l.b16 %v2645
    %v2781 = vunpack.c.l.b16 %v2646
    %v2782 = vunpack.c.l.b16 %v2647
    %v2783 = vunpack.c.l.b16 %v2648
    %v2784 = vunpack.c.l.b16 %v2649
    %v2785 = vunpack.c.l.b16 %v2650
    %v2786 = vunpack.c.l.b16 %v2651
    %v2787 = vunpack.c.l.b16 %v2652
    %v2788 = vunpack.c.l.b16 %v2653
    %v2789 = vunpack.c.l.b16 %v2654
    %v2790 = vunpack.c.l.b16 %v2655
    %v2791 = vunpack.c.l.b16 %v2656
    %v2792 = vunpack.c.l.b16 %v2657
    %v2793 = vunpack.c.l.b16 %v2658
    %v2794 = vunpack.c.l.b16 %v2659
    %v2795 = vunpack.c.l.b16 %v2660
    %v2796 = vunpack.c.l.b16 %v2661
    %v2797 = vunpack.c.l.b16 %v2662
    %v2798 = vunpack.c.l.b16 %v2663
    %v2799 = vunpack.c.l.b16 %v2664
    %v2800 = vunpack.c.l.b16 %v2665
    %v2801 = vunpack.c.l.b16 %v2666
    %v2802 = vunpack.c.l.b16 %v2667
    %v2803 = vunpack.c.l.b16 %v2668
    %v2804 = vunpack.c.l.b16 %v2669
    %v2805 = vunpack.c.l.b16 %v2670
    %v2806 = vunpack.c.l.b16 %v2671
    %v2807 = vunpack.c.l.b16 %v2672
    %v2808 = vunpack.c.l.b16 %v2673
    %v2809 = vunpack.c.l.b16 %v2674
    %v2810 = vunpack.c.l.b16 %v2675
    %v2811 = vunpack.c.l.b16 %v2676
    %v2812 = vunpack.c.l.b16 %v2677
    %v2813 = vunpack.c.l.b16 %v2678
    %v2814 = vunpack.c.l.b16 %v2679
    %v2815 = vunpack.c.l.b16 %v2680
    %v2816 = vpack.c.b16 %v2753, %v2752
    %v2817 = vpack.c.b16 %v2755, %v2754
    %v2818 = vpack.c.b16 %v2757, %v2756
    %v2819 = vpack.c.b16 %v2759, %v2758
    %v2820 = vpack.c.b16 %v2761, %v2760
    %v2821 = vpack.c.b16 %v2763, %v2762
    %v2822 = vpack.c.b16 %v2765, %v2764
    %v2823 = vpack.c.b16 %v2767, %v2766
    %v2824 = vpack.c.b16 %v2769, %v2768
    %v2825 = vpack.c.b16 %v2771, %v2770
    %v2826 = vpack.c.b16 %v2773, %v2772
    %v2827 = vpack.c.b16 %v2775, %v2774
    %v2828 = vpack.c.b16 %v2777, %v2776
    %v2829 = vpack.c.b16 %v2779, %v2778
    %v2830 = vpack.c.b16 %v2781, %v2780
    %v2831 = vpack.c.b16 %v2783, %v2782
    %v2832 = vpack.c.b16 %v2785, %v2784
    %v2833 = vpack.c.b16 %v2787, %v2786
    %v2834 = vpack.c.b16 %v2789, %v2788
    %v2835 = vpack.c.b16 %v2791, %v2790
    %v2836 = vpack.c.b16 %v2793, %v2792
    %v2837 = vpack.c.b16 %v2795, %v2794
    %v2838 = vpack.c.b16 %v2797, %v2796
    %v2839 = vpack.c.b16 %v2799, %v2798
    %v2840 = vpack.c.b16 %v2801, %v2800
    %v2841 = vpack.c.b16 %v2803, %v2802
    %v2842 = vpack.c.b16 %v2805, %v2804
    %v2843 = vpack.c.b16 %v2807, %v2806
    %v2844 = vpack.c.b16 %v2809, %v2808
    %v2845 = vpack.c.b16 %v2811, %v2810
    %v2846 = vpack.c.b16 %v2813, %v2812
    %v2847 = vpack.c.b16 %v2815, %v2814
    %2880 = vmatprep.subr.bf16.mxu0 0
    %2881 = vmatpush1.bf16.msra.mxu0 %v2816
    %2882 = vmatprep.subr.bf16.mxu0 0
    %2883 = vmatpush1.bf16.msra.mxu0 %v2817
    %2884 = vmatprep.subr.bf16.mxu0 0
    %2885 = vmatpush1.bf16.msra.mxu0 %v2818
    %2886 = vmatprep.subr.bf16.mxu0 0
    %2887 = vmatpush1.bf16.msra.mxu0 %v2819
    %2888 = vmatprep.subr.bf16.mxu0 0
    %2889 = vmatpush1.bf16.msra.mxu0 %v2820
    %2890 = vmatprep.subr.bf16.mxu0 0
    %2891 = vmatpush1.bf16.msra.mxu0 %v2821
    %2892 = vmatprep.subr.bf16.mxu0 0
    %2893 = vmatpush1.bf16.msra.mxu0 %v2822
    %2894 = vmatprep.subr.bf16.mxu0 0
    %2895 = vmatpush1.bf16.msra.mxu0 %v2823
    %2896 = vmatprep.subr.bf16.mxu0 0
    %2897 = vmatpush1.bf16.msra.mxu0 %v2824
    %2898 = vmatprep.subr.bf16.mxu0 0
    %2899 = vmatpush1.bf16.msra.mxu0 %v2825
    %2900 = vmatprep.subr.bf16.mxu0 0
    %2901 = vmatpush1.bf16.msra.mxu0 %v2826
    %2902 = vmatprep.subr.bf16.mxu0 0
    %2903 = vmatpush1.bf16.msra.mxu0 %v2827
    %2904 = vmatprep.subr.bf16.mxu0 0
    %2905 = vmatpush1.bf16.msra.mxu0 %v2828
    %2906 = vmatprep.subr.bf16.mxu0 0
    %2907 = vmatpush1.bf16.msra.mxu0 %v2829
    %2908 = vmatprep.subr.bf16.mxu0 0
    %2909 = vmatpush1.bf16.msra.mxu0 %v2830
    %2910 = vmatprep.subr.bf16.mxu0 0
    %2911 = vmatpush1.bf16.msra.mxu0 %v2831
    %2912 = vmatprep.mubr.bf16.mxu0 %v2614
    %2913 = vmatmul.mubr.bf16.gmra.mrb[0].mxu0 %v2613
    %v2914 = vpop.f32.mrb[0].mxu0
    %v2915 = vadd.f32 %v2686, %v2914
    %v2916 = vpop.f32.mrb[0].mxu0
    %v2917 = vpop.f32.mrb[0].mxu0
    %v2918 = vpop.f32.mrb[0].mxu0
    %2919 = vdwg.mxu0
    %2920 = vmatprep.subr.bf16.mxu0 0
    %2921 = vmatpush1.bf16.msra.mxu0 %v2832
    %2922 = vmatprep.subr.bf16.mxu0 0
    %2923 = vmatpush1.bf16.msra.mxu0 %v2833
    %2924 = vmatprep.subr.bf16.mxu0 0
    %2925 = vmatpush1.bf16.msra.mxu0 %v2834
    %2926 = vmatprep.subr.bf16.mxu0 0
    %2927 = vmatpush1.bf16.msra.mxu0 %v2835
    %2928 = vmatprep.subr.bf16.mxu0 0
    %2929 = vmatpush1.bf16.msra.mxu0 %v2836
    %2930 = vmatprep.subr.bf16.mxu0 0
    %2931 = vmatpush1.bf16.msra.mxu0 %v2837
    %2932 = vmatprep.subr.bf16.mxu0 0
    %2933 = vmatpush1.bf16.msra.mxu0 %v2838
    %2934 = vmatprep.subr.bf16.mxu0 0
    %2935 = vmatpush1.bf16.msra.mxu0 %v2839
    %2936 = vmatprep.subr.bf16.mxu0 0
    %2937 = vmatpush1.bf16.msra.mxu0 %v2840
    %2938 = vmatprep.subr.bf16.mxu0 0
    %2939 = vmatpush1.bf16.msra.mxu0 %v2841
    %2940 = vmatprep.subr.bf16.mxu0 0
    %2941 = vmatpush1.bf16.msra.mxu0 %v2842
    %2942 = vmatprep.subr.bf16.mxu0 0
    %2943 = vmatpush1.bf16.msra.mxu0 %v2843
    %2944 = vmatprep.subr.bf16.mxu0 0
    %2945 = vmatpush1.bf16.msra.mxu0 %v2844
    %2946 = vmatprep.subr.bf16.mxu0 0
    %2947 = vmatpush1.bf16.msra.mxu0 %v2845
    %2948 = vmatprep.subr.bf16.mxu0 0
    %2949 = vmatpush1.bf16.msra.mxu0 %v2846
    %2950 = vmatprep.subr.bf16.mxu0 0
    %2951 = vmatpush1.bf16.msra.mxu0 %v2847
    %2952 = vmatprep.mubr.bf16.mxu0 %v2616
    %2953 = vmatmul.mubr.bf16.gmra.mrb[0].mxu0 %v2615
    %v2954 = vpop.f32.mrb[0].mxu0
    %v2955 = vadd.f32 %v2915, %v2954
    %v2956 = vpop.f32.mrb[0].mxu0
    %v2957 = vpop.f32.mrb[0].mxu0
    %v2958 = vpop.f32.mrb[0].mxu0
    %2959 = vdwg.mxu0
    %vm2960 = vcmask 156672
    %2961 = vst.msk [vmem:[#allocation5] sm:$0x3] %vm2960, %v2955
    %v2962 = vmul.f32 %v2955, 0.5
    %v2963 = vmul.f32 %v2962, 1.442695
    %v2964 = vpow.pop %v2963
    %v2965 = vld [vmem:[%s1] sm:$0x3]
    %2967 = vrot.lane.b32.xlu0 %v2964, 118
    %v2968 = vpop.permute.xlu0 %2967
    %v2970 = vmul.f32 %v2965, %v2968
    %v2971 = vadd.f32 %v2955, %v2970
    %v2972 = vld [vmem:[#allocation2] sm:$0xff]
    %v2973 = vld [vmem:[#allocation2 + $0x8] sm:$0xff]
    %v2974 = vld [vmem:[#allocation2 + $0x10] sm:$0xff]
    %v2975 = vld [vmem:[#allocation2 + $0x18] sm:$0xff]
    %v2976 = vld [vmem:[#allocation2 + $0x20] sm:$0x3]
    %v2977 = vld [vmem:[#allocation2 + $0x28] sm:$0x3]
    %v2978 = vld [vmem:[#allocation2 + $0x30] sm:$0x3]
    %v2979 = vld [vmem:[#allocation2 + $0x38] sm:$0x3]
    %v2980 = vld [vmem:[%s9] sm:$0xf]
    %v2982 = vlaneseq
    %v2983 = vshrl.u32 %v2982, 7
    %v2984 = vsub.s32 0, %v2983
    %v2985 = vrot.slane %v2980, %v2984
    %v2986 = vlaneseq
    %v2987 = vshrl.u32 %v2986, 7
    %v2988 = vsub.s32 1, %v2987
    %v2989 = vrot.slane %v2980, %v2988
    %v2990 = vlaneseq
    %v2991 = vshrl.u32 %v2990, 7
    %v2992 = vsub.s32 2, %v2991
    %v2993 = vrot.slane %v2980, %v2992
    %v2994 = vlaneseq
    %v2995 = vshrl.u32 %v2994, 7
    %v2996 = vsub.s32 3, %v2995
    %v2997 = vrot.slane %v2980, %v2996
    %vm3002 = vcmask 80896
    %v3004 = vsel %vm3002, %v2971, 0
    %vm3006 = vcmask 1041408
    %v3008 = vsel %vm3006, %v2976, 0
    %v3011 = vsel %vm3006, %v2977, 0
    %v3014 = vsel %vm3006, %v2978, 0
    %v3017 = vsel %vm3006, %v2979, 0
    %3019 = vmatprep.subr.mxu0 %v2973
    %3020 = vmatpush1.msra.mxu0 %v2972
    %3021 = vmatprep.subr.mxu0 %v3011
    %3022 = vmatpush1.msra.mxu0 %v3008
    %3023 = vmatprep.subr.mxu0 0.0
    %3024 = vmatpush1.msra.mxu0 0.0
    %3025 = vmatprep.subr.mxu0 0.0
    %3026 = vmatpush1.msra.mxu0 0.0
    %3027 = vmatprep.subr.mxu0 0.0
    %3028 = vmatpush1.msra.mxu0 0.0
    %3029 = vmatprep.subr.mxu0 0.0
    %3030 = vmatpush1.msra.mxu0 0.0
    %3031 = vmatprep.subr.mxu0 0.0
    %3032 = vmatpush1.msra.mxu0 0.0
    %3033 = vmatprep.subr.mxu0 0.0
    %3034 = vmatpush1.msra.mxu0 0.0
    %3035 = vmatprep.subr.mxu0 0.0
    %3036 = vmatpush1.msra.mxu0 0.0
    %3037 = vmatprep.subr.mxu0 0.0
    %3038 = vmatpush1.msra.mxu0 0.0
    %3039 = vmatprep.subr.mxu0 0.0
    %3040 = vmatpush1.msra.mxu0 0.0
    %3041 = vmatprep.subr.mxu0 0.0
    %3042 = vmatpush1.msra.mxu0 0.0
    %3043 = vmatprep.subr.mxu0 0.0
    %3044 = vmatpush1.msra.mxu0 0.0
    %3045 = vmatprep.subr.mxu0 0.0
    %3046 = vmatpush1.msra.mxu0 0.0
    %3047 = vmatprep.subr.mxu0 0.0
    %3048 = vmatpush1.msra.mxu0 0.0
    %3049 = vmatprep.subr.mxu0 0.0
    %3050 = vmatpush1.msra.mxu0 0.0
    %3051 = vmatprep.subr.mxu0 0.0
    %3052 = vmatpush1.msra.mxu0 0.0
    %3053 = vmatprep.subr.mxu0 0.0
    %3054 = vmatpush1.msra.mxu0 0.0
    %3055 = vmatprep.subr.mxu0 0.0
    %3056 = vmatpush1.msra.mxu0 0.0
    %3057 = vmatprep.subr.mxu0 0.0
    %3058 = vmatpush1.msra.mxu0 0.0
    %3059 = vmatprep.subr.mxu0 0.0
    %3060 = vmatpush1.msra.mxu0 0.0
    %3061 = vmatprep.subr.mxu0 0.0
    %3062 = vmatpush1.msra.mxu0 0.0
    %3063 = vmatprep.subr.mxu0 0.0
    %3064 = vmatpush1.msra.mxu0 0.0
    %3065 = vmatprep.subr.mxu0 0.0
    %3066 = vmatpush1.msra.mxu0 0.0
    %3067 = vmatprep.subr.mxu0 0.0
    %3068 = vmatpush1.msra.mxu0 0.0
    %3069 = vmatprep.subr.mxu0 0.0
    %3070 = vmatpush1.msra.mxu0 0.0
    %3071 = vmatprep.subr.mxu0 0.0
    %3072 = vmatpush1.msra.mxu0 0.0
    %3073 = vmatprep.subr.mxu0 0.0
    %3074 = vmatpush1.msra.mxu0 0.0
    %3075 = vmatprep.subr.mxu0 0.0
    %3076 = vmatpush1.msra.mxu0 0.0
    %3077 = vmatprep.subr.mxu0 0.0
    %3078 = vmatpush1.msra.mxu0 0.0
    %3079 = vmatprep.subr.mxu0 0.0
    %3080 = vmatpush1.msra.mxu0 0.0
    %3081 = vmatprep.subr.mxu0 0.0
    %3082 = vmatpush1.msra.mxu0 0.0
    %3083 = vmatprep.mubr.f32.mxu0 0.0
    %3084 = vmatmul.mubr.f32.gmra.mrb[0].mxu0 %v3004
    %v3085 = vpop.f32.mrb[0].mxu0
    %v3086 = vadd.f32 %v2985, %v3085
    %v3087 = vpop.f32.mrb[0].mxu0
    %v3088 = vadd.f32 %v2989, %v3087
    %3089 = vdwg.mxu0
    %3090 = vmatprep.subr.mxu0 %v2975
    %3091 = vmatpush1.msra.mxu0 %v2974
    %3092 = vmatprep.subr.mxu0 %v3017
    %3093 = vmatpush1.msra.mxu0 %v3014
    %3094 = vmatprep.subr.mxu0 0.0
    %3095 = vmatpush1.msra.mxu0 0.0
    %3096 = vmatprep.subr.mxu0 0.0
    %3097 = vmatpush1.msra.mxu0 0.0
    %3098 = vmatprep.subr.mxu0 0.0
    %3099 = vmatpush1.msra.mxu0 0.0
    %3100 = vmatprep.subr.mxu0 0.0
    %3101 = vmatpush1.msra.mxu0 0.0
    %3102 = vmatprep.subr.mxu0 0.0
    %3103 = vmatpush1.msra.mxu0 0.0
    %3104 = vmatprep.subr.mxu0 0.0
    %3105 = vmatpush1.msra.mxu0 0.0
    %3106 = vmatprep.subr.mxu0 0.0
    %3107 = vmatpush1.msra.mxu0 0.0
    %3108 = vmatprep.subr.mxu0 0.0
    %3109 = vmatpush1.msra.mxu0 0.0
    %3110 = vmatprep.subr.mxu0 0.0
    %3111 = vmatpush1.msra.mxu0 0.0
    %3112 = vmatprep.subr.mxu0 0.0
    %3113 = vmatpush1.msra.mxu0 0.0
    %3114 = vmatprep.subr.mxu0 0.0
    %3115 = vmatpush1.msra.mxu0 0.0
    %3116 = vmatprep.subr.mxu0 0.0
    %3117 = vmatpush1.msra.mxu0 0.0
    %3118 = vmatprep.subr.mxu0 0.0
    %3119 = vmatpush1.msra.mxu0 0.0
    %3120 = vmatprep.subr.mxu0 0.0
    %3121 = vmatpush1.msra.mxu0 0.0
    %3122 = vmatprep.subr.mxu0 0.0
    %3123 = vmatpush1.msra.mxu0 0.0
    %3124 = vmatprep.subr.mxu0 0.0
    %3125 = vmatpush1.msra.mxu0 0.0
    %3126 = vmatprep.subr.mxu0 0.0
    %3127 = vmatpush1.msra.mxu0 0.0
    %3128 = vmatprep.subr.mxu0 0.0
    %3129 = vmatpush1.msra.mxu0 0.0
    %3130 = vmatprep.subr.mxu0 0.0
    %3131 = vmatpush1.msra.mxu0 0.0
    %3132 = vmatprep.subr.mxu0 0.0
    %3133 = vmatpush1.msra.mxu0 0.0
    %3134 = vmatprep.subr.mxu0 0.0
    %3135 = vmatpush1.msra.mxu0 0.0
    %3136 = vmatprep.subr.mxu0 0.0
    %3137 = vmatpush1.msra.mxu0 0.0
    %3138 = vmatprep.subr.mxu0 0.0
    %3139 = vmatpush1.msra.mxu0 0.0
    %3140 = vmatprep.subr.mxu0 0.0
    %3141 = vmatpush1.msra.mxu0 0.0
    %3142 = vmatprep.subr.mxu0 0.0
    %3143 = vmatpush1.msra.mxu0 0.0
    %3144 = vmatprep.subr.mxu0 0.0
    %3145 = vmatpush1.msra.mxu0 0.0
    %3146 = vmatprep.subr.mxu0 0.0
    %3147 = vmatpush1.msra.mxu0 0.0
    %3148 = vmatprep.subr.mxu0 0.0
    %3149 = vmatpush1.msra.mxu0 0.0
    %3150 = vmatprep.subr.mxu0 0.0
    %3151 = vmatpush1.msra.mxu0 0.0
    %3152 = vmatprep.subr.mxu0 0.0
    %3153 = vmatpush1.msra.mxu0 0.0
    %3154 = vmatprep.mubr.f32.mxu0 0.0
    %3155 = vmatmul.mubr.f32.gmra.mrb[0].mxu0 %v3004
    %v3156 = vpop.f32.mrb[0].mxu0
    %v3157 = vadd.f32 %v2993, %v3156
    %v3158 = vpop.f32.mrb[0].mxu0
    %v3159 = vadd.f32 %v2997, %v3158
    %3160 = vdwg.mxu0
    %v3161 = vmax.f32 %v3086, 0.0
    %v3162 = vmax.f32 %v3088, 0.0
    %v3163 = vmax.f32 %v3157, 0.0
    %v3164 = vmax.f32 %v3159, 0.0
    %v3165 = vpack.c.bf16 %v3161, %v3161
    %v3166 = vpack.c.bf16 %v3162, %v3162
    %v3167 = vpack.c.bf16 %v3163, %v3163
    %v3168 = vpack.c.bf16 %v3164, %v3164
    %v3169 = vld [vmem:[%s10] sm:$0xff]
    %v3170 = vld [vmem:[%s10 + $0x8] sm:$0xff]
    %v3171 = vld [vmem:[%s10 + $0x10] sm:$0xff]
    %v3172 = vld [vmem:[%s10 + $0x18] sm:$0xff]
    %v3173 = vld [vmem:[%s10 + $0x20] sm:$0xff]
    %v3174 = vld [vmem:[%s10 + $0x28] sm:$0xff]
    %v3175 = vld [vmem:[%s10 + $0x30] sm:$0xff]
    %v3176 = vld [vmem:[%s10 + $0x38] sm:$0xff]
    %v3177 = vld [vmem:[%s10 + $0x40] sm:$0xff]
    %v3178 = vld [vmem:[%s10 + $0x48] sm:$0xff]
    %v3179 = vld [vmem:[%s10 + $0x50] sm:$0xff]
    %v3180 = vld [vmem:[%s10 + $0x58] sm:$0xff]
    %v3181 = vld [vmem:[%s10 + $0x60] sm:$0xff]
    %v3182 = vld [vmem:[%s10 + $0x68] sm:$0xff]
    %v3183 = vld [vmem:[%s10 + $0x70] sm:$0xff]
    %v3184 = vld [vmem:[%s10 + $0x78] sm:$0xff]
    %v3185 = vld [vmem:[%s10 + $0x80] sm:$0xff]
    %v3186 = vld [vmem:[%s10 + $0x88] sm:$0xff]
    %v3187 = vld [vmem:[%s10 + $0x90] sm:$0xff]
    %v3188 = vld [vmem:[%s10 + $0x98] sm:$0xff]
    %v3189 = vld [vmem:[%s10 + $0xa0] sm:$0xff]
    %v3190 = vld [vmem:[%s10 + $0xa8] sm:$0xff]
    %v3191 = vld [vmem:[%s10 + $0xb0] sm:$0xff]
    %v3192 = vld [vmem:[%s10 + $0xb8] sm:$0xff]
    %v3193 = vld [vmem:[%s10 + $0xc0] sm:$0xff]
    %v3194 = vld [vmem:[%s10 + $0xc8] sm:$0xff]
    %v3195 = vld [vmem:[%s10 + $0xd0] sm:$0xff]
    %v3196 = vld [vmem:[%s10 + $0xd8] sm:$0xff]
    %v3197 = vld [vmem:[%s10 + $0xe0] sm:$0xff]
    %v3198 = vld [vmem:[%s10 + $0xe8] sm:$0xff]
    %v3199 = vld [vmem:[%s10 + $0xf0] sm:$0xff]
    %v3200 = vld [vmem:[%s10 + $0xf8] sm:$0xff]
    %v3201 = vld [vmem:[%s10 + $0x100] sm:$0xff]
    %v3202 = vld [vmem:[%s10 + $0x108] sm:$0xff]
    %v3203 = vld [vmem:[%s10 + $0x110] sm:$0xff]
    %v3204 = vld [vmem:[%s10 + $0x118] sm:$0xff]
    %v3205 = vld [vmem:[%s10 + $0x120] sm:$0xff]
    %v3206 = vld [vmem:[%s10 + $0x128] sm:$0xff]
    %v3207 = vld [vmem:[%s10 + $0x130] sm:$0xff]
    %v3208 = vld [vmem:[%s10 + $0x138] sm:$0xff]
    %v3209 = vld [vmem:[%s10 + $0x140] sm:$0xff]
    %v3210 = vld [vmem:[%s10 + $0x148] sm:$0xff]
    %v3211 = vld [vmem:[%s10 + $0x150] sm:$0xff]
    %v3212 = vld [vmem:[%s10 + $0x158] sm:$0xff]
    %v3213 = vld [vmem:[%s10 + $0x160] sm:$0xff]
    %v3214 = vld [vmem:[%s10 + $0x168] sm:$0xff]
    %v3215 = vld [vmem:[%s10 + $0x170] sm:$0xff]
    %v3216 = vld [vmem:[%s10 + $0x178] sm:$0xff]
    %v3217 = vld [vmem:[%s10 + $0x180] sm:$0xff]
    %v3218 = vld [vmem:[%s10 + $0x188] sm:$0xff]
    %v3219 = vld [vmem:[%s10 + $0x190] sm:$0xff]
    %v3220 = vld [vmem:[%s10 + $0x198] sm:$0xff]
    %v3221 = vld [vmem:[%s10 + $0x1a0] sm:$0xff]
    %v3222 = vld [vmem:[%s10 + $0x1a8] sm:$0xff]
    %v3223 = vld [vmem:[%s10 + $0x1b0] sm:$0xff]
    %v3224 = vld [vmem:[%s10 + $0x1b8] sm:$0xff]
    %v3225 = vld [vmem:[%s10 + $0x1c0] sm:$0xff]
    %v3226 = vld [vmem:[%s10 + $0x1c8] sm:$0xff]
    %v3227 = vld [vmem:[%s10 + $0x1d0] sm:$0xff]
    %v3228 = vld [vmem:[%s10 + $0x1d8] sm:$0xff]
    %v3229 = vld [vmem:[%s10 + $0x1e0] sm:$0xff]
    %v3230 = vld [vmem:[%s10 + $0x1e8] sm:$0xff]
    %v3231 = vld [vmem:[%s10 + $0x1f0] sm:$0xff]
    %v3232 = vld [vmem:[%s10 + $0x1f8] sm:$0xff]
    %v3233 = vld [vmem:[%s10 + $0x200] sm:$0xff]
    %v3234 = vld [vmem:[%s10 + $0x208] sm:$0xff]
    %v3235 = vld [vmem:[%s10 + $0x210] sm:$0xff]
    %v3236 = vld [vmem:[%s10 + $0x218] sm:$0xff]
    %v3237 = vld [vmem:[%s10 + $0x220] sm:$0xff]
    %v3238 = vld [vmem:[%s10 + $0x228] sm:$0xff]
    %v3239 = vld [vmem:[%s10 + $0x230] sm:$0xff]
    %v3240 = vld [vmem:[%s10 + $0x238] sm:$0xff]
    %v3241 = vld [vmem:[%s10 + $0x240] sm:$0xff]
    %v3242 = vld [vmem:[%s10 + $0x248] sm:$0xff]
    %v3243 = vld [vmem:[%s10 + $0x250] sm:$0xff]
    %v3244 = vld [vmem:[%s10 + $0x258] sm:$0xff]
    %v3245 = vld [vmem:[%s10 + $0x260] sm:$0xff]
    %v3246 = vld [vmem:[%s10 + $0x268] sm:$0xff]
    %v3247 = vld [vmem:[%s10 + $0x270] sm:$0xff]
    %v3248 = vld [vmem:[%s10 + $0x278] sm:$0xff]
    %v3249 = vld [vmem:[%s10 + $0x280] sm:$0xff]
    %v3250 = vld [vmem:[%s10 + $0x288] sm:$0xff]
    %v3251 = vld [vmem:[%s10 + $0x290] sm:$0xff]
    %v3252 = vld [vmem:[%s10 + $0x298] sm:$0xff]
    %v3253 = vld [vmem:[%s10 + $0x2a0] sm:$0xff]
    %v3254 = vld [vmem:[%s10 + $0x2a8] sm:$0xff]
    %v3255 = vld [vmem:[%s10 + $0x2b0] sm:$0xff]
    %v3256 = vld [vmem:[%s10 + $0x2b8] sm:$0xff]
    %v3257 = vld [vmem:[%s10 + $0x2c0] sm:$0xff]
    %v3258 = vld [vmem:[%s10 + $0x2c8] sm:$0xff]
    %v3259 = vld [vmem:[%s10 + $0x2d0] sm:$0xff]
    %v3260 = vld [vmem:[%s10 + $0x2d8] sm:$0xff]
    %v3261 = vld [vmem:[%s10 + $0x2e0] sm:$0xff]
    %v3262 = vld [vmem:[%s10 + $0x2e8] sm:$0xff]
    %v3263 = vld [vmem:[%s10 + $0x2f0] sm:$0xff]
    %v3264 = vld [vmem:[%s10 + $0x2f8] sm:$0xff]
    %v3265 = vld [vmem:[%s10 + $0x300] sm:$0xff]
    %v3266 = vld [vmem:[%s10 + $0x308] sm:$0xff]
    %v3267 = vld [vmem:[%s10 + $0x310] sm:$0xff]
    %v3268 = vld [vmem:[%s10 + $0x318] sm:$0xff]
    %v3269 = vld [vmem:[%s10 + $0x320] sm:$0xff]
    %v3270 = vld [vmem:[%s10 + $0x328] sm:$0xff]
    %v3271 = vld [vmem:[%s10 + $0x330] sm:$0xff]
    %v3272 = vld [vmem:[%s10 + $0x338] sm:$0xff]
    %v3273 = vld [vmem:[%s10 + $0x340] sm:$0xff]
    %v3274 = vld [vmem:[%s10 + $0x348] sm:$0xff]
    %v3275 = vld [vmem:[%s10 + $0x350] sm:$0xff]
    %v3276 = vld [vmem:[%s10 + $0x358] sm:$0xff]
    %v3277 = vld [vmem:[%s10 + $0x360] sm:$0xff]
    %v3278 = vld [vmem:[%s10 + $0x368] sm:$0xff]
    %v3279 = vld [vmem:[%s10 + $0x370] sm:$0xff]
    %v3280 = vld [vmem:[%s10 + $0x378] sm:$0xff]
    %v3281 = vld [vmem:[%s10 + $0x380] sm:$0xff]
    %v3282 = vld [vmem:[%s10 + $0x388] sm:$0xff]
    %v3283 = vld [vmem:[%s10 + $0x390] sm:$0xff]
    %v3284 = vld [vmem:[%s10 + $0x398] sm:$0xff]
    %v3285 = vld [vmem:[%s10 + $0x3a0] sm:$0xff]
    %v3286 = vld [vmem:[%s10 + $0x3a8] sm:$0xff]
    %v3287 = vld [vmem:[%s10 + $0x3b0] sm:$0xff]
    %v3288 = vld [vmem:[%s10 + $0x3b8] sm:$0xff]
    %v3289 = vld [vmem:[%s10 + $0x3c0] sm:$0xff]
    %v3290 = vld [vmem:[%s10 + $0x3c8] sm:$0xff]
    %v3291 = vld [vmem:[%s10 + $0x3d0] sm:$0xff]
    %v3292 = vld [vmem:[%s10 + $0x3d8] sm:$0xff]
    %v3293 = vld [vmem:[%s10 + $0x3e0] sm:$0xff]
    %v3294 = vld [vmem:[%s10 + $0x3e8] sm:$0xff]
    %v3295 = vld [vmem:[%s10 + $0x3f0] sm:$0xff]
    %v3296 = vld [vmem:[%s10 + $0x3f8] sm:$0xff]
    %v3297 = vld [vmem:[%s11] sm:$0xf]
    %v3299 = vlaneseq
    %v3300 = vshrl.u32 %v3299, 7
    %v3301 = vsub.s32 0, %v3300
    %v3302 = vrot.slane %v3297, %v3301
    %v3303 = vlaneseq
    %v3304 = vshrl.u32 %v3303, 7
    %v3305 = vsub.s32 1, %v3304
    %v3306 = vrot.slane %v3297, %v3305
    %v3307 = vlaneseq
    %v3308 = vshrl.u32 %v3307, 7
    %v3309 = vsub.s32 2, %v3308
    %v3310 = vrot.slane %v3297, %v3309
    %v3311 = vlaneseq
    %v3312 = vshrl.u32 %v3311, 7
    %v3313 = vsub.s32 3, %v3312
    %v3314 = vrot.slane %v3297, %v3313
    %v3447 = vunpack.c.l.b16 %v3169
    %v3448 = vunpack.c.h.b16 %v3169
    %v3449 = vunpack.c.l.b16 %v3170
    %v3450 = vunpack.c.h.b16 %v3170
    %v3451 = vunpack.c.l.b16 %v3171
    %v3452 = vunpack.c.h.b16 %v3171
    %v3453 = vunpack.c.l.b16 %v3172
    %v3454 = vunpack.c.h.b16 %v3172
    %v3455 = vunpack.c.l.b16 %v3173
    %v3456 = vunpack.c.h.b16 %v3173
    %v3457 = vunpack.c.l.b16 %v3174
    %v3458 = vunpack.c.h.b16 %v3174
    %v3459 = vunpack.c.l.b16 %v3175
    %v3460 = vunpack.c.h.b16 %v3175
    %v3461 = vunpack.c.l.b16 %v3176
    %v3462 = vunpack.c.h.b16 %v3176
    %v3463 = vunpack.c.l.b16 %v3177
    %v3464 = vunpack.c.h.b16 %v3177
    %v3465 = vunpack.c.l.b16 %v3178
    %v3466 = vunpack.c.h.b16 %v3178
    %v3467 = vunpack.c.l.b16 %v3179
    %v3468 = vunpack.c.h.b16 %v3179
    %v3469 = vunpack.c.l.b16 %v3180
    %v3470 = vunpack.c.h.b16 %v3180
    %v3471 = vunpack.c.l.b16 %v3181
    %v3472 = vunpack.c.h.b16 %v3181
    %v3473 = vunpack.c.l.b16 %v3182
    %v3474 = vunpack.c.h.b16 %v3182
    %v3475 = vunpack.c.l.b16 %v3183
    %v3476 = vunpack.c.h.b16 %v3183
    %v3477 = vunpack.c.l.b16 %v3184
    %v3478 = vunpack.c.h.b16 %v3184
    %v3479 = vunpack.c.l.b16 %v3185
    %v3480 = vunpack.c.h.b16 %v3185
    %v3481 = vunpack.c.l.b16 %v3186
    %v3482 = vunpack.c.h.b16 %v3186
    %v3483 = vunpack.c.l.b16 %v3187
    %v3484 = vunpack.c.h.b16 %v3187
    %v3485 = vunpack.c.l.b16 %v3188
    %v3486 = vunpack.c.h.b16 %v3188
    %v3487 = vunpack.c.l.b16 %v3189
    %v3488 = vunpack.c.h.b16 %v3189
    %v3489 = vunpack.c.l.b16 %v3190
    %v3490 = vunpack.c.h.b16 %v3190
    %v3491 = vunpack.c.l.b16 %v3191
    %v3492 = vunpack.c.h.b16 %v3191
    %v3493 = vunpack.c.l.b16 %v3192
    %v3494 = vunpack.c.h.b16 %v3192
    %v3495 = vunpack.c.l.b16 %v3193
    %v3496 = vunpack.c.h.b16 %v3193
    %v3497 = vunpack.c.l.b16 %v3194
    %v3498 = vunpack.c.h.b16 %v3194
    %v3499 = vunpack.c.l.b16 %v3195
    %v3500 = vunpack.c.h.b16 %v3195
    %v3501 = vunpack.c.l.b16 %v3196
    %v3502 = vunpack.c.h.b16 %v3196
    %v3503 = vunpack.c.l.b16 %v3197
    %v3504 = vunpack.c.h.b16 %v3197
    %v3505 = vunpack.c.l.b16 %v3198
    %v3506 = vunpack.c.h.b16 %v3198
    %v3507 = vunpack.c.l.b16 %v3199
    %v3508 = vunpack.c.h.b16 %v3199
    %v3509 = vunpack.c.l.b16 %v3200
    %v3510 = vunpack.c.h.b16 %v3200
    %v3511 = vunpack.c.l.b16 %v3201
    %v3512 = vunpack.c.h.b16 %v3201
    %v3513 = vunpack.c.l.b16 %v3202
    %v3514 = vunpack.c.h.b16 %v3202
    %v3515 = vunpack.c.l.b16 %v3203
    %v3516 = vunpack.c.h.b16 %v3203
    %v3517 = vunpack.c.l.b16 %v3204
    %v3518 = vunpack.c.h.b16 %v3204
    %v3519 = vunpack.c.l.b16 %v3205
    %v3520 = vunpack.c.h.b16 %v3205
    %v3521 = vunpack.c.l.b16 %v3206
    %v3522 = vunpack.c.h.b16 %v3206
    %v3523 = vunpack.c.l.b16 %v3207
    %v3524 = vunpack.c.h.b16 %v3207
    %v3525 = vunpack.c.l.b16 %v3208
    %v3526 = vunpack.c.h.b16 %v3208
    %v3527 = vunpack.c.l.b16 %v3209
    %v3528 = vunpack.c.h.b16 %v3209
    %v3529 = vunpack.c.l.b16 %v3210
    %v3530 = vunpack.c.h.b16 %v3210
    %v3531 = vunpack.c.l.b16 %v3211
    %v3532 = vunpack.c.h.b16 %v3211
    %v3533 = vunpack.c.l.b16 %v3212
    %v3534 = vunpack.c.h.b16 %v3212
    %v3535 = vunpack.c.l.b16 %v3213
    %v3536 = vunpack.c.h.b16 %v3213
    %v3537 = vunpack.c.l.b16 %v3214
    %v3538 = vunpack.c.h.b16 %v3214
    %v3539 = vunpack.c.l.b16 %v3215
    %v3540 = vunpack.c.h.b16 %v3215
    %v3541 = vunpack.c.l.b16 %v3216
    %v3542 = vunpack.c.h.b16 %v3216
    %v3543 = vunpack.c.l.b16 %v3217
    %v3544 = vunpack.c.h.b16 %v3217
    %v3545 = vunpack.c.l.b16 %v3218
    %v3546 = vunpack.c.h.b16 %v3218
    %v3547 = vunpack.c.l.b16 %v3219
    %v3548 = vunpack.c.h.b16 %v3219
    %v3549 = vunpack.c.l.b16 %v3220
    %v3550 = vunpack.c.h.b16 %v3220
    %v3551 = vunpack.c.l.b16 %v3221
    %v3552 = vunpack.c.h.b16 %v3221
    %v3553 = vunpack.c.l.b16 %v3222
    %v3554 = vunpack.c.h.b16 %v3222
    %v3555 = vunpack.c.l.b16 %v3223
    %v3556 = vunpack.c.h.b16 %v3223
    %v3557 = vunpack.c.l.b16 %v3224
    %v3558 = vunpack.c.h.b16 %v3224
    %v3559 = vunpack.c.l.b16 %v3225
    %v3560 = vunpack.c.h.b16 %v3225
    %v3561 = vunpack.c.l.b16 %v3226
    %v3562 = vunpack.c.h.b16 %v3226
    %v3563 = vunpack.c.l.b16 %v3227
    %v3564 = vunpack.c.h.b16 %v3227
    %v3565 = vunpack.c.l.b16 %v3228
    %v3566 = vunpack.c.h.b16 %v3228
    %v3567 = vunpack.c.l.b16 %v3229
    %v3568 = vunpack.c.h.b16 %v3229
    %v3569 = vunpack.c.l.b16 %v3230
    %v3570 = vunpack.c.h.b16 %v3230
    %v3571 = vunpack.c.l.b16 %v3231
    %v3572 = vunpack.c.h.b16 %v3231
    %v3573 = vunpack.c.l.b16 %v3232
    %v3574 = vunpack.c.h.b16 %v3232
    %v3575 = vunpack.c.l.b16 %v3233
    %v3576 = vunpack.c.h.b16 %v3233
    %v3577 = vunpack.c.l.b16 %v3234
    %v3578 = vunpack.c.h.b16 %v3234
    %v3579 = vunpack.c.l.b16 %v3235
    %v3580 = vunpack.c.h.b16 %v3235
    %v3581 = vunpack.c.l.b16 %v3236
    %v3582 = vunpack.c.h.b16 %v3236
    %v3583 = vunpack.c.l.b16 %v3237
    %v3584 = vunpack.c.h.b16 %v3237
    %v3585 = vunpack.c.l.b16 %v3238
    %v3586 = vunpack.c.h.b16 %v3238
    %v3587 = vunpack.c.l.b16 %v3239
    %v3588 = vunpack.c.h.b16 %v3239
    %v3589 = vunpack.c.l.b16 %v3240
    %v3590 = vunpack.c.h.b16 %v3240
    %v3591 = vunpack.c.l.b16 %v3241
    %v3592 = vunpack.c.h.b16 %v3241
    %v3593 = vunpack.c.l.b16 %v3242
    %v3594 = vunpack.c.h.b16 %v3242
    %v3595 = vunpack.c.l.b16 %v3243
    %v3596 = vunpack.c.h.b16 %v3243
    %v3597 = vunpack.c.l.b16 %v3244
    %v3598 = vunpack.c.h.b16 %v3244
    %v3599 = vunpack.c.l.b16 %v3245
    %v3600 = vunpack.c.h.b16 %v3245
    %v3601 = vunpack.c.l.b16 %v3246
    %v3602 = vunpack.c.h.b16 %v3246
    %v3603 = vunpack.c.l.b16 %v3247
    %v3604 = vunpack.c.h.b16 %v3247
    %v3605 = vunpack.c.l.b16 %v3248
    %v3606 = vunpack.c.h.b16 %v3248
    %v3607 = vunpack.c.l.b16 %v3249
    %v3608 = vunpack.c.h.b16 %v3249
    %v3609 = vunpack.c.l.b16 %v3250
    %v3610 = vunpack.c.h.b16 %v3250
    %v3611 = vunpack.c.l.b16 %v3251
    %v3612 = vunpack.c.h.b16 %v3251
    %v3613 = vunpack.c.l.b16 %v3252
    %v3614 = vunpack.c.h.b16 %v3252
    %v3615 = vunpack.c.l.b16 %v3253
    %v3616 = vunpack.c.h.b16 %v3253
    %v3617 = vunpack.c.l.b16 %v3254
    %v3618 = vunpack.c.h.b16 %v3254
    %v3619 = vunpack.c.l.b16 %v3255
    %v3620 = vunpack.c.h.b16 %v3255
    %v3621 = vunpack.c.l.b16 %v3256
    %v3622 = vunpack.c.h.b16 %v3256
    %v3623 = vunpack.c.l.b16 %v3257
    %v3624 = vunpack.c.h.b16 %v3257
    %v3625 = vunpack.c.l.b16 %v3258
    %v3626 = vunpack.c.h.b16 %v3258
    %v3627 = vunpack.c.l.b16 %v3259
    %v3628 = vunpack.c.h.b16 %v3259
    %v3629 = vunpack.c.l.b16 %v3260
    %v3630 = vunpack.c.h.b16 %v3260
    %v3631 = vunpack.c.l.b16 %v3261
    %v3632 = vunpack.c.h.b16 %v3261
    %v3633 = vunpack.c.l.b16 %v3262
    %v3634 = vunpack.c.h.b16 %v3262
    %v3635 = vunpack.c.l.b16 %v3263
    %v3636 = vunpack.c.h.b16 %v3263
    %v3637 = vunpack.c.l.b16 %v3264
    %v3638 = vunpack.c.h.b16 %v3264
    %v3639 = vunpack.c.l.b16 %v3265
    %v3640 = vunpack.c.h.b16 %v3265
    %v3641 = vunpack.c.l.b16 %v3266
    %v3642 = vunpack.c.h.b16 %v3266
    %v3643 = vunpack.c.l.b16 %v3267
    %v3644 = vunpack.c.h.b16 %v3267
    %v3645 = vunpack.c.l.b16 %v3268
    %v3646 = vunpack.c.h.b16 %v3268
    %v3647 = vunpack.c.l.b16 %v3269
    %v3648 = vunpack.c.h.b16 %v3269
    %v3649 = vunpack.c.l.b16 %v3270
    %v3650 = vunpack.c.h.b16 %v3270
    %v3651 = vunpack.c.l.b16 %v3271
    %v3652 = vunpack.c.h.b16 %v3271
    %v3653 = vunpack.c.l.b16 %v3272
    %v3654 = vunpack.c.h.b16 %v3272
    %v3655 = vunpack.c.l.b16 %v3273
    %v3656 = vunpack.c.h.b16 %v3273
    %v3657 = vunpack.c.l.b16 %v3274
    %v3658 = vunpack.c.h.b16 %v3274
    %v3659 = vunpack.c.l.b16 %v3275
    %v3660 = vunpack.c.h.b16 %v3275
    %v3661 = vunpack.c.l.b16 %v3276
    %v3662 = vunpack.c.h.b16 %v3276
    %v3663 = vunpack.c.l.b16 %v3277
    %v3664 = vunpack.c.h.b16 %v3277
    %v3665 = vunpack.c.l.b16 %v3278
    %v3666 = vunpack.c.h.b16 %v3278
    %v3667 = vunpack.c.l.b16 %v3279
    %v3668 = vunpack.c.h.b16 %v3279
    %v3669 = vunpack.c.l.b16 %v3280
    %v3670 = vunpack.c.h.b16 %v3280
    %v3671 = vunpack.c.l.b16 %v3281
    %v3672 = vunpack.c.h.b16 %v3281
    %v3673 = vunpack.c.l.b16 %v3282
    %v3674 = vunpack.c.h.b16 %v3282
    %v3675 = vunpack.c.l.b16 %v3283
    %v3676 = vunpack.c.h.b16 %v3283
    %v3677 = vunpack.c.l.b16 %v3284
    %v3678 = vunpack.c.h.b16 %v3284
    %v3679 = vunpack.c.l.b16 %v3285
    %v3680 = vunpack.c.h.b16 %v3285
    %v3681 = vunpack.c.l.b16 %v3286
    %v3682 = vunpack.c.h.b16 %v3286
    %v3683 = vunpack.c.l.b16 %v3287
    %v3684 = vunpack.c.h.b16 %v3287
    %v3685 = vunpack.c.l.b16 %v3288
    %v3686 = vunpack.c.h.b16 %v3288
    %v3687 = vunpack.c.l.b16 %v3289
    %v3688 = vunpack.c.h.b16 %v3289
    %v3689 = vunpack.c.l.b16 %v3290
    %v3690 = vunpack.c.h.b16 %v3290
    %v3691 = vunpack.c.l.b16 %v3291
    %v3692 = vunpack.c.h.b16 %v3291
    %v3693 = vunpack.c.l.b16 %v3292
    %v3694 = vunpack.c.h.b16 %v3292
    %v3695 = vunpack.c.l.b16 %v3293
    %v3696 = vunpack.c.h.b16 %v3293
    %v3697 = vunpack.c.l.b16 %v3294
    %v3698 = vunpack.c.h.b16 %v3294
    %v3699 = vunpack.c.l.b16 %v3295
    %v3700 = vunpack.c.h.b16 %v3295
    %v3701 = vunpack.c.l.b16 %v3296
    %v3702 = vunpack.c.h.b16 %v3296
    %v3703 = vpack.c.b16 %v3451, %v3447
    %v3704 = vpack.c.b16 %v3452, %v3448
    %v3705 = vpack.c.b16 %v3453, %v3449
    %v3706 = vpack.c.b16 %v3454, %v3450
    %v3707 = vpack.c.b16 %v3459, %v3455
    %v3708 = vpack.c.b16 %v3460, %v3456
    %v3709 = vpack.c.b16 %v3461, %v3457
    %v3710 = vpack.c.b16 %v3462, %v3458
    %v3711 = vpack.c.b16 %v3467, %v3463
    %v3712 = vpack.c.b16 %v3468, %v3464
    %v3713 = vpack.c.b16 %v3469, %v3465
    %v3714 = vpack.c.b16 %v3470, %v3466
    %v3715 = vpack.c.b16 %v3475, %v3471
    %v3716 = vpack.c.b16 %v3476, %v3472
    %v3717 = vpack.c.b16 %v3477, %v3473
    %v3718 = vpack.c.b16 %v3478, %v3474
    %v3719 = vpack.c.b16 %v3483, %v3479
    %v3720 = vpack.c.b16 %v3484, %v3480
    %v3721 = vpack.c.b16 %v3485, %v3481
    %v3722 = vpack.c.b16 %v3486, %v3482
    %v3723 = vpack.c.b16 %v3491, %v3487
    %v3724 = vpack.c.b16 %v3492, %v3488
    %v3725 = vpack.c.b16 %v3493, %v3489
    %v3726 = vpack.c.b16 %v3494, %v3490
    %v3727 = vpack.c.b16 %v3499, %v3495
    %v3728 = vpack.c.b16 %v3500, %v3496
    %v3729 = vpack.c.b16 %v3501, %v3497
    %v3730 = vpack.c.b16 %v3502, %v3498
    %v3731 = vpack.c.b16 %v3507, %v3503
    %v3732 = vpack.c.b16 %v3508, %v3504
    %v3733 = vpack.c.b16 %v3509, %v3505
    %v3734 = vpack.c.b16 %v3510, %v3506
    %v3735 = vpack.c.b16 %v3515, %v3511
    %v3736 = vpack.c.b16 %v3516, %v3512
    %v3737 = vpack.c.b16 %v3517, %v3513
    %v3738 = vpack.c.b16 %v3518, %v3514
    %v3739 = vpack.c.b16 %v3523, %v3519
    %v3740 = vpack.c.b16 %v3524, %v3520
    %v3741 = vpack.c.b16 %v3525, %v3521
    %v3742 = vpack.c.b16 %v3526, %v3522
    %v3743 = vpack.c.b16 %v3531, %v3527
    %v3744 = vpack.c.b16 %v3532, %v3528
    %v3745 = vpack.c.b16 %v3533, %v3529
    %v3746 = vpack.c.b16 %v3534, %v3530
    %v3747 = vpack.c.b16 %v3539, %v3535
    %v3748 = vpack.c.b16 %v3540, %v3536
    %v3749 = vpack.c.b16 %v3541, %v3537
    %v3750 = vpack.c.b16 %v3542, %v3538
    %v3751 = vpack.c.b16 %v3547, %v3543
    %v3752 = vpack.c.b16 %v3548, %v3544
    %v3753 = vpack.c.b16 %v3549, %v3545
    %v3754 = vpack.c.b16 %v3550, %v3546
    %v3755 = vpack.c.b16 %v3555, %v3551
    %v3756 = vpack.c.b16 %v3556, %v3552
    %v3757 = vpack.c.b16 %v3557, %v3553
    %v3758 = vpack.c.b16 %v3558, %v3554
    %v3759 = vpack.c.b16 %v3563, %v3559
    %v3760 = vpack.c.b16 %v3564, %v3560
    %v3761 = vpack.c.b16 %v3565, %v3561
    %v3762 = vpack.c.b16 %v3566, %v3562
    %v3763 = vpack.c.b16 %v3571, %v3567
    %v3764 = vpack.c.b16 %v3572, %v3568
    %v3765 = vpack.c.b16 %v3573, %v3569
    %v3766 = vpack.c.b16 %v3574, %v3570
    %v3767 = vpack.c.b16 %v3579, %v3575
    %v3768 = vpack.c.b16 %v3580, %v3576
    %v3769 = vpack.c.b16 %v3581, %v3577
    %v3770 = vpack.c.b16 %v3582, %v3578
    %v3771 = vpack.c.b16 %v3587, %v3583
    %v3772 = vpack.c.b16 %v3588, %v3584
    %v3773 = vpack.c.b16 %v3589, %v3585
    %v3774 = vpack.c.b16 %v3590, %v3586
    %v3775 = vpack.c.b16 %v3595, %v3591
    %v3776 = vpack.c.b16 %v3596, %v3592
    %v3777 = vpack.c.b16 %v3597, %v3593
    %v3778 = vpack.c.b16 %v3598, %v3594
    %v3779 = vpack.c.b16 %v3603, %v3599
    %v3780 = vpack.c.b16 %v3604, %v3600
    %v3781 = vpack.c.b16 %v3605, %v3601
    %v3782 = vpack.c.b16 %v3606, %v3602
    %v3783 = vpack.c.b16 %v3611, %v3607
    %v3784 = vpack.c.b16 %v3612, %v3608
    %v3785 = vpack.c.b16 %v3613, %v3609
    %v3786 = vpack.c.b16 %v3614, %v3610
    %v3787 = vpack.c.b16 %v3619, %v3615
    %v3788 = vpack.c.b16 %v3620, %v3616
    %v3789 = vpack.c.b16 %v3621, %v3617
    %v3790 = vpack.c.b16 %v3622, %v3618
    %v3791 = vpack.c.b16 %v3627, %v3623
    %v3792 = vpack.c.b16 %v3628, %v3624
    %v3793 = vpack.c.b16 %v3629, %v3625
    %v3794 = vpack.c.b16 %v3630, %v3626
    %v3795 = vpack.c.b16 %v3635, %v3631
    %v3796 = vpack.c.b16 %v3636, %v3632
    %v3797 = vpack.c.b16 %v3637, %v3633
    %v3798 = vpack.c.b16 %v3638, %v3634
    %v3799 = vpack.c.b16 %v3643, %v3639
    %v3800 = vpack.c.b16 %v3644, %v3640
    %v3801 = vpack.c.b16 %v3645, %v3641
    %v3802 = vpack.c.b16 %v3646, %v3642
    %v3803 = vpack.c.b16 %v3651, %v3647
    %v3804 = vpack.c.b16 %v3652, %v3648
    %v3805 = vpack.c.b16 %v3653, %v3649
    %v3806 = vpack.c.b16 %v3654, %v3650
    %v3807 = vpack.c.b16 %v3659, %v3655
    %v3808 = vpack.c.b16 %v3660, %v3656
    %v3809 = vpack.c.b16 %v3661, %v3657
    %v3810 = vpack.c.b16 %v3662, %v3658
    %v3811 = vpack.c.b16 %v3667, %v3663
    %v3812 = vpack.c.b16 %v3668, %v3664
    %v3813 = vpack.c.b16 %v3669, %v3665
    %v3814 = vpack.c.b16 %v3670, %v3666
    %v3815 = vpack.c.b16 %v3675, %v3671
    %v3816 = vpack.c.b16 %v3676, %v3672
    %v3817 = vpack.c.b16 %v3677, %v3673
    %v3818 = vpack.c.b16 %v3678, %v3674
    %v3819 = vpack.c.b16 %v3683, %v3679
    %v3820 = vpack.c.b16 %v3684, %v3680
    %v3821 = vpack.c.b16 %v3685, %v3681
    %v3822 = vpack.c.b16 %v3686, %v3682
    %v3823 = vpack.c.b16 %v3691, %v3687
    %v3824 = vpack.c.b16 %v3692, %v3688
    %v3825 = vpack.c.b16 %v3693, %v3689
    %v3826 = vpack.c.b16 %v3694, %v3690
    %v3827 = vpack.c.b16 %v3699, %v3695
    %v3828 = vpack.c.b16 %v3700, %v3696
    %v3829 = vpack.c.b16 %v3701, %v3697
    %v3830 = vpack.c.b16 %v3702, %v3698
    %3959 = vmatprep.subr.bf16.mxu0 %v3704
    %3960 = vmatpush1.bf16.msra.mxu0 %v3703
    %3961 = vmatprep.subr.bf16.mxu0 %v3708
    %3962 = vmatpush1.bf16.msra.mxu0 %v3707
    %3963 = vmatprep.subr.bf16.mxu0 %v3712
    %3964 = vmatpush1.bf16.msra.mxu0 %v3711
    %3965 = vmatprep.subr.bf16.mxu0 %v3716
    %3966 = vmatpush1.bf16.msra.mxu0 %v3715
    %3967 = vmatprep.subr.bf16.mxu0 %v3720
    %3968 = vmatpush1.bf16.msra.mxu0 %v3719
    %3969 = vmatprep.subr.bf16.mxu0 %v3724
    %3970 = vmatpush1.bf16.msra.mxu0 %v3723
    %3971 = vmatprep.subr.bf16.mxu0 %v3728
    %3972 = vmatpush1.bf16.msra.mxu0 %v3727
    %3973 = vmatprep.subr.bf16.mxu0 %v3732
    %3974 = vmatpush1.bf16.msra.mxu0 %v3731
    %3975 = vmatprep.subr.bf16.mxu0 %v3736
    %3976 = vmatpush1.bf16.msra.mxu0 %v3735
    %3977 = vmatprep.subr.bf16.mxu0 %v3740
    %3978 = vmatpush1.bf16.msra.mxu0 %v3739
    %3979 = vmatprep.subr.bf16.mxu0 %v3744
    %3980 = vmatpush1.bf16.msra.mxu0 %v3743
    %3981 = vmatprep.subr.bf16.mxu0 %v3748
    %3982 = vmatpush1.bf16.msra.mxu0 %v3747
    %3983 = vmatprep.subr.bf16.mxu0 %v3752
    %3984 = vmatpush1.bf16.msra.mxu0 %v3751
    %3985 = vmatprep.subr.bf16.mxu0 %v3756
    %3986 = vmatpush1.bf16.msra.mxu0 %v3755
    %3987 = vmatprep.subr.bf16.mxu0 %v3760
    %3988 = vmatpush1.bf16.msra.mxu0 %v3759
    %3989 = vmatprep.subr.bf16.mxu0 %v3764
    %3990 = vmatpush1.bf16.msra.mxu0 %v3763
    %3991 = vmatprep.mubr.bf16.mxu0 %v3166
    %3992 = vmatmul.mubr.bf16.gmra.mrb[0].mxu0 %v3165
    %v3993 = vpop.f32.mrb[0].mxu0
    %v3994 = vadd.f32 %v3302, %v3993
    %v3995 = vpop.f32.mrb[0].mxu0
    %v3996 = vadd.f32 %v3306, %v3995
    %v3997 = vpop.f32.mrb[0].mxu0
    %v3998 = vpop.f32.mrb[0].mxu0
    %3999 = vdwg.mxu0
    %4000 = vmatprep.subr.bf16.mxu0 %v3768
    %4001 = vmatpush1.bf16.msra.mxu0 %v3767
    %4002 = vmatprep.subr.bf16.mxu0 %v3772
    %4003 = vmatpush1.bf16.msra.mxu0 %v3771
    %4004 = vmatprep.subr.bf16.mxu0 %v3776
    %4005 = vmatpush1.bf16.msra.mxu0 %v3775
    %4006 = vmatprep.subr.bf16.mxu0 %v3780
    %4007 = vmatpush1.bf16.msra.mxu0 %v3779
    %4008 = vmatprep.subr.bf16.mxu0 %v3784
    %4009 = vmatpush1.bf16.msra.mxu0 %v3783
    %4010 = vmatprep.subr.bf16.mxu0 %v3788
    %4011 = vmatpush1.bf16.msra.mxu0 %v3787
    %4012 = vmatprep.subr.bf16.mxu0 %v3792
    %4013 = vmatpush1.bf16.msra.mxu0 %v3791
    %4014 = vmatprep.subr.bf16.mxu0 %v3796
    %4015 = vmatpush1.bf16.msra.mxu0 %v3795
    %4016 = vmatprep.subr.bf16.mxu0 %v3800
    %4017 = vmatpush1.bf16.msra.mxu0 %v3799
    %4018 = vmatprep.subr.bf16.mxu0 %v3804
    %4019 = vmatpush1.bf16.msra.mxu0 %v3803
    %4020 = vmatprep.subr.bf16.mxu0 %v3808
    %4021 = vmatpush1.bf16.msra.mxu0 %v3807
    %4022 = vmatprep.subr.bf16.mxu0 %v3812
    %4023 = vmatpush1.bf16.msra.mxu0 %v3811
    %4024 = vmatprep.subr.bf16.mxu0 %v3816
    %4025 = vmatpush1.bf16.msra.mxu0 %v3815
    %4026 = vmatprep.subr.bf16.mxu0 %v3820
    %4027 = vmatpush1.bf16.msra.mxu0 %v3819
    %4028 = vmatprep.subr.bf16.mxu0 %v3824
    %4029 = vmatpush1.bf16.msra.mxu0 %v3823
    %4030 = vmatprep.subr.bf16.mxu0 %v3828
    %4031 = vmatpush1.bf16.msra.mxu0 %v3827
    %4032 = vmatprep.mubr.bf16.mxu0 %v3168
    %4033 = vmatmul.mubr.bf16.gmra.mrb[0].mxu0 %v3167
    %v4034 = vpop.f32.mrb[0].mxu0
    %v4035 = vadd.f32 %v3994, %v4034
    %v4036 = vpop.f32.mrb[0].mxu0
    %v4037 = vadd.f32 %v3996, %v4036
    %v4038 = vpop.f32.mrb[0].mxu0
    %v4039 = vpop.f32.mrb[0].mxu0
    %4040 = vdwg.mxu0
    %4041 = vmatprep.subr.bf16.mxu0 %v3706
    %4042 = vmatpush1.bf16.msra.mxu0 %v3705
    %4043 = vmatprep.subr.bf16.mxu0 %v3710
    %4044 = vmatpush1.bf16.msra.mxu0 %v3709
    %4045 = vmatprep.subr.bf16.mxu0 %v3714
    %4046 = vmatpush1.bf16.msra.mxu0 %v3713
    %4047 = vmatprep.subr.bf16.mxu0 %v3718
    %4048 = vmatpush1.bf16.msra.mxu0 %v3717
    %4049 = vmatprep.subr.bf16.mxu0 %v3722
    %4050 = vmatpush1.bf16.msra.mxu0 %v3721
    %4051 = vmatprep.subr.bf16.mxu0 %v3726
    %4052 = vmatpush1.bf16.msra.mxu0 %v3725
    %4053 = vmatprep.subr.bf16.mxu0 %v3730
    %4054 = vmatpush1.bf16.msra.mxu0 %v3729
    %4055 = vmatprep.subr.bf16.mxu0 %v3734
    %4056 = vmatpush1.bf16.msra.mxu0 %v3733
    %4057 = vmatprep.subr.bf16.mxu0 %v3738
    %4058 = vmatpush1.bf16.msra.mxu0 %v3737
    %4059 = vmatprep.subr.bf16.mxu0 %v3742
    %4060 = vmatpush1.bf16.msra.mxu0 %v3741
    %4061 = vmatprep.subr.bf16.mxu0 %v3746
    %4062 = vmatpush1.bf16.msra.mxu0 %v3745
    %4063 = vmatprep.subr.bf16.mxu0 %v3750
    %4064 = vmatpush1.bf16.msra.mxu0 %v3749
    %4065 = vmatprep.subr.bf16.mxu0 %v3754
    %4066 = vmatpush1.bf16.msra.mxu0 %v3753
    %4067 = vmatprep.subr.bf16.mxu0 %v3758
    %4068 = vmatpush1.bf16.msra.mxu0 %v3757
    %4069 = vmatprep.subr.bf16.mxu0 %v3762
    %4070 = vmatpush1.bf16.msra.mxu0 %v3761
    %4071 = vmatprep.subr.bf16.mxu0 %v3766
    %4072 = vmatpush1.bf16.msra.mxu0 %v3765
    %4073 = vmatprep.mubr.bf16.mxu0 %v3166
    %4074 = vmatmul.mubr.bf16.gmra.mrb[0].mxu0 %v3165
    %v4075 = vpop.f32.mrb[0].mxu0
    %v4076 = vadd.f32 %v3310, %v4075
    %v4077 = vpop.f32.mrb[0].mxu0
    %v4078 = vadd.f32 %v3314, %v4077
    %v4079 = vpop.f32.mrb[0].mxu0
    %v4080 = vpop.f32.mrb[0].mxu0
    %4081 = vdwg.mxu0
    %4082 = vmatprep.subr.bf16.mxu0 %v3770
    %4083 = vmatpush1.bf16.msra.mxu0 %v3769
    %4084 = vmatprep.subr.bf16.mxu0 %v3774
    %4085 = vmatpush1.bf16.msra.mxu0 %v3773
    %4086 = vmatprep.subr.bf16.mxu0 %v3778
    %4087 = vmatpush1.bf16.msra.mxu0 %v3777
    %4088 = vmatprep.subr.bf16.mxu0 %v3782
    %4089 = vmatpush1.bf16.msra.mxu0 %v3781
    %4090 = vmatprep.subr.bf16.mxu0 %v3786
    %4091 = vmatpush1.bf16.msra.mxu0 %v3785
    %4092 = vmatprep.subr.bf16.mxu0 %v3790
    %4093 = vmatpush1.bf16.msra.mxu0 %v3789
    %4094 = vmatprep.subr.bf16.mxu0 %v3794
    %4095 = vmatpush1.bf16.msra.mxu0 %v3793
    %4096 = vmatprep.subr.bf16.mxu0 %v3798
    %4097 = vmatpush1.bf16.msra.mxu0 %v3797
    %4098 = vmatprep.subr.bf16.mxu0 %v3802
    %4099 = vmatpush1.bf16.msra.mxu0 %v3801
    %4100 = vmatprep.subr.bf16.mxu0 %v3806
    %4101 = vmatpush1.bf16.msra.mxu0 %v3805
    %4102 = vmatprep.subr.bf16.mxu0 %v3810
    %4103 = vmatpush1.bf16.msra.mxu0 %v3809
    %4104 = vmatprep.subr.bf16.mxu0 %v3814
    %4105 = vmatpush1.bf16.msra.mxu0 %v3813
    %4106 = vmatprep.subr.bf16.mxu0 %v3818
    %4107 = vmatpush1.bf16.msra.mxu0 %v3817
    %4108 = vmatprep.subr.bf16.mxu0 %v3822
    %4109 = vmatpush1.bf16.msra.mxu0 %v3821
    %4110 = vmatprep.subr.bf16.mxu0 %v3826
    %4111 = vmatpush1.bf16.msra.mxu0 %v3825
    %4112 = vmatprep.subr.bf16.mxu0 %v3830
    %4113 = vmatpush1.bf16.msra.mxu0 %v3829
    %4114 = vmatprep.mubr.bf16.mxu0 %v3168
    %4115 = vmatmul.mubr.bf16.gmra.mrb[0].mxu0 %v3167
    %v4116 = vpop.f32.mrb[0].mxu0
    %v4117 = vadd.f32 %v4076, %v4116
    %v4118 = vpop.f32.mrb[0].mxu0
    %v4119 = vadd.f32 %v4078, %v4118
    %v4120 = vpop.f32.mrb[0].mxu0
    %v4121 = vpop.f32.mrb[0].mxu0
    %4122 = vdwg.mxu0
    %v4123 = vmax.f32 %v4035, 0.0
    %v4124 = vmax.f32 %v4037, 0.0
    %v4125 = vmax.f32 %v4117, 0.0
    %v4126 = vmax.f32 %v4119, 0.0
    %v4127 = vpack.c.bf16 %v4123, %v4123
    %v4128 = vpack.c.bf16 %v4124, %v4124
    %v4129 = vpack.c.bf16 %v4125, %v4125
    %v4130 = vpack.c.bf16 %v4126, %v4126
    %v4131 = vld [vmem:[%s12] sm:$0xff]
    %v4132 = vld [vmem:[%s12 + $0x8] sm:$0xff]
    %v4133 = vld [vmem:[%s12 + $0x10] sm:$0xff]
    %v4134 = vld [vmem:[%s12 + $0x18] sm:$0xf]
    %v4135 = vld [vmem:[%s12 + $0x1c] sm:$0xff]
    %v4136 = vld [vmem:[%s12 + $0x24] sm:$0xff]
    %v4137 = vld [vmem:[%s12 + $0x2c] sm:$0xff]
    %v4138 = vld [vmem:[%s12 + $0x34] sm:$0xf]
    %v4139 = vld [vmem:[%s12 + $0x38] sm:$0xff]
    %v4140 = vld [vmem:[%s12 + $0x40] sm:$0xff]
    %v4141 = vld [vmem:[%s12 + $0x48] sm:$0xff]
    %v4142 = vld [vmem:[%s12 + $0x50] sm:$0xf]
    %v4143 = vld [vmem:[%s12 + $0x54] sm:$0xff]
    %v4144 = vld [vmem:[%s12 + $0x5c] sm:$0xff]
    %v4145 = vld [vmem:[%s12 + $0x64] sm:$0xff]
    %v4146 = vld [vmem:[%s12 + $0x6c] sm:$0xf]
    %v4147 = vld [vmem:[%s12 + $0x70] sm:$0xff]
    %v4148 = vld [vmem:[%s12 + $0x78] sm:$0xff]
    %v4149 = vld [vmem:[%s12 + $0x80] sm:$0xff]
    %v4150 = vld [vmem:[%s12 + $0x88] sm:$0xf]
    %v4151 = vld [vmem:[%s12 + $0x8c] sm:$0xff]
    %v4152 = vld [vmem:[%s12 + $0x94] sm:$0xff]
    %v4153 = vld [vmem:[%s12 + $0x9c] sm:$0xff]
    %v4154 = vld [vmem:[%s12 + $0xa4] sm:$0xf]
    %v4155 = vld [vmem:[%s12 + $0xa8] sm:$0xff]
    %v4156 = vld [vmem:[%s12 + $0xb0] sm:$0xff]
    %v4157 = vld [vmem:[%s12 + $0xb8] sm:$0xff]
    %v4158 = vld [vmem:[%s12 + $0xc0] sm:$0xf]
    %v4159 = vld [vmem:[%s12 + $0xc4] sm:$0xff]
    %v4160 = vld [vmem:[%s12 + $0xcc] sm:$0xff]
    %v4161 = vld [vmem:[%s12 + $0xd4] sm:$0xff]
    %v4162 = vld [vmem:[%s12 + $0xdc] sm:$0xf]
    %v4163 = vld [vmem:[%s12 + $0xe0] sm:$0xff]
    %v4164 = vld [vmem:[%s12 + $0xe8] sm:$0xff]
    %v4165 = vld [vmem:[%s12 + $0xf0] sm:$0xff]
    %v4166 = vld [vmem:[%s12 + $0xf8] sm:$0xf]
    %v4167 = vld [vmem:[%s12 + $0xfc] sm:$0xff]
    %v4168 = vld [vmem:[%s12 + $0x104] sm:$0xff]
    %v4169 = vld [vmem:[%s12 + $0x10c] sm:$0xff]
    %v4170 = vld [vmem:[%s12 + $0x114] sm:$0xf]
    %v4171 = vld [vmem:[%s12 + $0x118] sm:$0xff]
    %v4172 = vld [vmem:[%s12 + $0x120] sm:$0xff]
    %v4173 = vld [vmem:[%s12 + $0x128] sm:$0xff]
    %v4174 = vld [vmem:[%s12 + $0x130] sm:$0xf]
    %v4175 = vld [vmem:[%s12 + $0x134] sm:$0xff]
    %v4176 = vld [vmem:[%s12 + $0x13c] sm:$0xff]
    %v4177 = vld [vmem:[%s12 + $0x144] sm:$0xff]
    %v4178 = vld [vmem:[%s12 + $0x14c] sm:$0xf]
    %v4179 = vld [vmem:[%s12 + $0x150] sm:$0xff]
    %v4180 = vld [vmem:[%s12 + $0x158] sm:$0xff]
    %v4181 = vld [vmem:[%s12 + $0x160] sm:$0xff]
    %v4182 = vld [vmem:[%s12 + $0x168] sm:$0xf]
    %v4183 = vld [vmem:[%s12 + $0x16c] sm:$0xff]
    %v4184 = vld [vmem:[%s12 + $0x174] sm:$0xff]
    %v4185 = vld [vmem:[%s12 + $0x17c] sm:$0xff]
    %v4186 = vld [vmem:[%s12 + $0x184] sm:$0xf]
    %v4187 = vld [vmem:[%s12 + $0x188] sm:$0xff]
    %v4188 = vld [vmem:[%s12 + $0x190] sm:$0xff]
    %v4189 = vld [vmem:[%s12 + $0x198] sm:$0xff]
    %v4190 = vld [vmem:[%s12 + $0x1a0] sm:$0xf]
    %v4191 = vld [vmem:[%s12 + $0x1a4] sm:$0xff]
    %v4192 = vld [vmem:[%s12 + $0x1ac] sm:$0xff]
    %v4193 = vld [vmem:[%s12 + $0x1b4] sm:$0xff]
    %v4194 = vld [vmem:[%s12 + $0x1bc] sm:$0xf]
    %v4195 = vld [vmem:[%s12 + $0x1c0] sm:$0xff]
    %v4196 = vld [vmem:[%s12 + $0x1c8] sm:$0xff]
    %v4197 = vld [vmem:[%s12 + $0x1d0] sm:$0xff]
    %v4198 = vld [vmem:[%s12 + $0x1d8] sm:$0xf]
    %v4199 = vld [vmem:[%s12 + $0x1dc] sm:$0xff]
    %v4200 = vld [vmem:[%s12 + $0x1e4] sm:$0xff]
    %v4201 = vld [vmem:[%s12 + $0x1ec] sm:$0xff]
    %v4202 = vld [vmem:[%s12 + $0x1f4] sm:$0xf]
    %v4203 = vld [vmem:[%s12 + $0x1f8] sm:$0xff]
    %v4204 = vld [vmem:[%s12 + $0x200] sm:$0xff]
    %v4205 = vld [vmem:[%s12 + $0x208] sm:$0xff]
    %v4206 = vld [vmem:[%s12 + $0x210] sm:$0xf]
    %v4207 = vld [vmem:[%s12 + $0x214] sm:$0xff]
    %v4208 = vld [vmem:[%s12 + $0x21c] sm:$0xff]
    %v4209 = vld [vmem:[%s12 + $0x224] sm:$0xff]
    %v4210 = vld [vmem:[%s12 + $0x22c] sm:$0xf]
    %v4211 = vld [vmem:[%s12 + $0x230] sm:$0xff]
    %v4212 = vld [vmem:[%s12 + $0x238] sm:$0xff]
    %v4213 = vld [vmem:[%s12 + $0x240] sm:$0xff]
    %v4214 = vld [vmem:[%s12 + $0x248] sm:$0xf]
    %v4215 = vld [vmem:[%s12 + $0x24c] sm:$0xff]
    %v4216 = vld [vmem:[%s12 + $0x254] sm:$0xff]
    %v4217 = vld [vmem:[%s12 + $0x25c] sm:$0xff]
    %v4218 = vld [vmem:[%s12 + $0x264] sm:$0xf]
    %v4219 = vld [vmem:[%s12 + $0x268] sm:$0xff]
    %v4220 = vld [vmem:[%s12 + $0x270] sm:$0xff]
    %v4221 = vld [vmem:[%s12 + $0x278] sm:$0xff]
    %v4222 = vld [vmem:[%s12 + $0x280] sm:$0xf]
    %v4223 = vld [vmem:[%s12 + $0x284] sm:$0xff]
    %v4224 = vld [vmem:[%s12 + $0x28c] sm:$0xff]
    %v4225 = vld [vmem:[%s12 + $0x294] sm:$0xff]
    %v4226 = vld [vmem:[%s12 + $0x29c] sm:$0xf]
    %v4227 = vld [vmem:[%s12 + $0x2a0] sm:$0xff]
    %v4228 = vld [vmem:[%s12 + $0x2a8] sm:$0xff]
    %v4229 = vld [vmem:[%s12 + $0x2b0] sm:$0xff]
    %v4230 = vld [vmem:[%s12 + $0x2b8] sm:$0xf]
    %v4231 = vld [vmem:[%s12 + $0x2bc] sm:$0xff]
    %v4232 = vld [vmem:[%s12 + $0x2c4] sm:$0xff]
    %v4233 = vld [vmem:[%s12 + $0x2cc] sm:$0xff]
    %v4234 = vld [vmem:[%s12 + $0x2d4] sm:$0xf]
    %v4235 = vld [vmem:[%s12 + $0x2d8] sm:$0xff]
    %v4236 = vld [vmem:[%s12 + $0x2e0] sm:$0xff]
    %v4237 = vld [vmem:[%s12 + $0x2e8] sm:$0xff]
    %v4238 = vld [vmem:[%s12 + $0x2f0] sm:$0xf]
    %v4239 = vld [vmem:[%s12 + $0x2f4] sm:$0xff]
    %v4240 = vld [vmem:[%s12 + $0x2fc] sm:$0xff]
    %v4241 = vld [vmem:[%s12 + $0x304] sm:$0xff]
    %v4242 = vld [vmem:[%s12 + $0x30c] sm:$0xf]
    %v4243 = vld [vmem:[%s12 + $0x310] sm:$0xff]
    %v4244 = vld [vmem:[%s12 + $0x318] sm:$0xff]
    %v4245 = vld [vmem:[%s12 + $0x320] sm:$0xff]
    %v4246 = vld [vmem:[%s12 + $0x328] sm:$0xf]
    %v4247 = vld [vmem:[%s12 + $0x32c] sm:$0xff]
    %v4248 = vld [vmem:[%s12 + $0x334] sm:$0xff]
    %v4249 = vld [vmem:[%s12 + $0x33c] sm:$0xff]
    %v4250 = vld [vmem:[%s12 + $0x344] sm:$0xf]
    %v4251 = vld [vmem:[%s12 + $0x348] sm:$0xff]
    %v4252 = vld [vmem:[%s12 + $0x350] sm:$0xff]
    %v4253 = vld [vmem:[%s12 + $0x358] sm:$0xff]
    %v4254 = vld [vmem:[%s12 + $0x360] sm:$0xf]
    %v4255 = vld [vmem:[%s12 + $0x364] sm:$0xff]
    %v4256 = vld [vmem:[%s12 + $0x36c] sm:$0xff]
    %v4257 = vld [vmem:[%s12 + $0x374] sm:$0xff]
    %v4258 = vld [vmem:[%s12 + $0x37c] sm:$0xf]
    %v4259 = vld [vmem:[%s12 + $0x380] sm:$0xff]
    %v4260 = vld [vmem:[%s12 + $0x388] sm:$0xff]
    %v4261 = vld [vmem:[%s12 + $0x390] sm:$0xff]
    %v4262 = vld [vmem:[%s12 + $0x398] sm:$0xf]
    %v4263 = vld [vmem:[%s12 + $0x39c] sm:$0xff]
    %v4264 = vld [vmem:[%s12 + $0x3a4] sm:$0xff]
    %v4265 = vld [vmem:[%s12 + $0x3ac] sm:$0xff]
    %v4266 = vld [vmem:[%s12 + $0x3b4] sm:$0xf]
    %v4267 = vld [vmem:[%s12 + $0x3b8] sm:$0xff]
    %v4268 = vld [vmem:[%s12 + $0x3c0] sm:$0xff]
    %v4269 = vld [vmem:[%s12 + $0x3c8] sm:$0xff]
    %v4270 = vld [vmem:[%s12 + $0x3d0] sm:$0xf]
    %v4271 = vld [vmem:[%s12 + $0x3d4] sm:$0xff]
    %v4272 = vld [vmem:[%s12 + $0x3dc] sm:$0xff]
    %v4273 = vld [vmem:[%s12 + $0x3e4] sm:$0xff]
    %v4274 = vld [vmem:[%s12 + $0x3ec] sm:$0xf]
    %v4275 = vld [vmem:[%s12 + $0x3f0] sm:$0xff]
    %v4276 = vld [vmem:[%s12 + $0x3f8] sm:$0xff]
    %v4277 = vld [vmem:[%s12 + $0x400] sm:$0xff]
    %v4278 = vld [vmem:[%s12 + $0x408] sm:$0xf]
    %v4279 = vld [vmem:[%s12 + $0x40c] sm:$0xff]
    %v4280 = vld [vmem:[%s12 + $0x414] sm:$0xff]
    %v4281 = vld [vmem:[%s12 + $0x41c] sm:$0xff]
    %v4282 = vld [vmem:[%s12 + $0x424] sm:$0xf]
    %v4283 = vld [vmem:[%s12 + $0x428] sm:$0xff]
    %v4284 = vld [vmem:[%s12 + $0x430] sm:$0xff]
    %v4285 = vld [vmem:[%s12 + $0x438] sm:$0xff]
    %v4286 = vld [vmem:[%s12 + $0x440] sm:$0xf]
    %v4287 = vld [vmem:[%s12 + $0x444] sm:$0xff]
    %v4288 = vld [vmem:[%s12 + $0x44c] sm:$0xff]
    %v4289 = vld [vmem:[%s12 + $0x454] sm:$0xff]
    %v4290 = vld [vmem:[%s12 + $0x45c] sm:$0xf]
    %v4291 = vld [vmem:[%s12 + $0x460] sm:$0xff]
    %v4292 = vld [vmem:[%s12 + $0x468] sm:$0xff]
    %v4293 = vld [vmem:[%s12 + $0x470] sm:$0xff]
    %v4294 = vld [vmem:[%s12 + $0x478] sm:$0xf]
    %v4295 = vld [vmem:[%s12 + $0x47c] sm:$0xff]
    %v4296 = vld [vmem:[%s12 + $0x484] sm:$0xff]
    %v4297 = vld [vmem:[%s12 + $0x48c] sm:$0xff]
    %v4298 = vld [vmem:[%s12 + $0x494] sm:$0xf]
    %v4299 = vld [vmem:[%s12 + $0x498] sm:$0xff]
    %v4300 = vld [vmem:[%s12 + $0x4a0] sm:$0xff]
    %v4301 = vld [vmem:[%s12 + $0x4a8] sm:$0xff]
    %v4302 = vld [vmem:[%s12 + $0x4b0] sm:$0xf]
    %v4303 = vld [vmem:[%s12 + $0x4b4] sm:$0xff]
    %v4304 = vld [vmem:[%s12 + $0x4bc] sm:$0xff]
    %v4305 = vld [vmem:[%s12 + $0x4c4] sm:$0xff]
    %v4306 = vld [vmem:[%s12 + $0x4cc] sm:$0xf]
    %v4307 = vld [vmem:[%s12 + $0x4d0] sm:$0xff]
    %v4308 = vld [vmem:[%s12 + $0x4d8] sm:$0xff]
    %v4309 = vld [vmem:[%s12 + $0x4e0] sm:$0xff]
    %v4310 = vld [vmem:[%s12 + $0x4e8] sm:$0xf]
    %v4311 = vld [vmem:[%s12 + $0x4ec] sm:$0xff]
    %v4312 = vld [vmem:[%s12 + $0x4f4] sm:$0xff]
    %v4313 = vld [vmem:[%s12 + $0x4fc] sm:$0xff]
    %v4314 = vld [vmem:[%s12 + $0x504] sm:$0xf]
    %v4315 = vld [vmem:[%s12 + $0x508] sm:$0xff]
    %v4316 = vld [vmem:[%s12 + $0x510] sm:$0xff]
    %v4317 = vld [vmem:[%s12 + $0x518] sm:$0xff]
    %v4318 = vld [vmem:[%s12 + $0x520] sm:$0xf]
    %v4319 = vld [vmem:[%s12 + $0x524] sm:$0xff]
    %v4320 = vld [vmem:[%s12 + $0x52c] sm:$0xff]
    %v4321 = vld [vmem:[%s12 + $0x534] sm:$0xff]
    %v4322 = vld [vmem:[%s12 + $0x53c] sm:$0xf]
    %v4323 = vld [vmem:[%s12 + $0x540] sm:$0xff]
    %v4324 = vld [vmem:[%s12 + $0x548] sm:$0xff]
    %v4325 = vld [vmem:[%s12 + $0x550] sm:$0xff]
    %v4326 = vld [vmem:[%s12 + $0x558] sm:$0xf]
    %v4327 = vld [vmem:[%s12 + $0x55c] sm:$0xff]
    %v4328 = vld [vmem:[%s12 + $0x564] sm:$0xff]
    %v4329 = vld [vmem:[%s12 + $0x56c] sm:$0xff]
    %v4330 = vld [vmem:[%s12 + $0x574] sm:$0xf]
    %v4331 = vld [vmem:[%s12 + $0x578] sm:$0xff]
    %v4332 = vld [vmem:[%s12 + $0x580] sm:$0xff]
    %v4333 = vld [vmem:[%s12 + $0x588] sm:$0xff]
    %v4334 = vld [vmem:[%s12 + $0x590] sm:$0xf]
    %v4335 = vld [vmem:[%s12 + $0x594] sm:$0xff]
    %v4336 = vld [vmem:[%s12 + $0x59c] sm:$0xff]
    %v4337 = vld [vmem:[%s12 + $0x5a4] sm:$0xff]
    %v4338 = vld [vmem:[%s12 + $0x5ac] sm:$0xf]
    %v4339 = vld [vmem:[%s12 + $0x5b0] sm:$0xff]
    %v4340 = vld [vmem:[%s12 + $0x5b8] sm:$0xff]
    %v4341 = vld [vmem:[%s12 + $0x5c0] sm:$0xff]
    %v4342 = vld [vmem:[%s12 + $0x5c8] sm:$0xf]
    %v4343 = vld [vmem:[%s12 + $0x5cc] sm:$0xff]
    %v4344 = vld [vmem:[%s12 + $0x5d4] sm:$0xff]
    %v4345 = vld [vmem:[%s12 + $0x5dc] sm:$0xff]
    %v4346 = vld [vmem:[%s12 + $0x5e4] sm:$0xf]
    %v4347 = vld [vmem:[%s12 + $0x5e8] sm:$0xff]
    %v4348 = vld [vmem:[%s12 + $0x5f0] sm:$0xff]
    %v4349 = vld [vmem:[%s12 + $0x5f8] sm:$0xff]
    %v4350 = vld [vmem:[%s12 + $0x600] sm:$0xf]
    %v4351 = vld [vmem:[%s12 + $0x604] sm:$0xff]
    %v4352 = vld [vmem:[%s12 + $0x60c] sm:$0xff]
    %v4353 = vld [vmem:[%s12 + $0x614] sm:$0xff]
    %v4354 = vld [vmem:[%s12 + $0x61c] sm:$0xf]
    %v4355 = vld [vmem:[%s12 + $0x620] sm:$0xff]
    %v4356 = vld [vmem:[%s12 + $0x628] sm:$0xff]
    %v4357 = vld [vmem:[%s12 + $0x630] sm:$0xff]
    %v4358 = vld [vmem:[%s12 + $0x638] sm:$0xf]
    %v4359 = vld [vmem:[%s12 + $0x63c] sm:$0xff]
    %v4360 = vld [vmem:[%s12 + $0x644] sm:$0xff]
    %v4361 = vld [vmem:[%s12 + $0x64c] sm:$0xff]
    %v4362 = vld [vmem:[%s12 + $0x654] sm:$0xf]
    %v4363 = vld [vmem:[%s12 + $0x658] sm:$0xff]
    %v4364 = vld [vmem:[%s12 + $0x660] sm:$0xff]
    %v4365 = vld [vmem:[%s12 + $0x668] sm:$0xff]
    %v4366 = vld [vmem:[%s12 + $0x670] sm:$0xf]
    %v4367 = vld [vmem:[%s12 + $0x674] sm:$0xff]
    %v4368 = vld [vmem:[%s12 + $0x67c] sm:$0xff]
    %v4369 = vld [vmem:[%s12 + $0x684] sm:$0xff]
    %v4370 = vld [vmem:[%s12 + $0x68c] sm:$0xf]
    %v4371 = vld [vmem:[%s12 + $0x690] sm:$0xff]
    %v4372 = vld [vmem:[%s12 + $0x698] sm:$0xff]
    %v4373 = vld [vmem:[%s12 + $0x6a0] sm:$0xff]
    %v4374 = vld [vmem:[%s12 + $0x6a8] sm:$0xf]
    %v4375 = vld [vmem:[%s12 + $0x6ac] sm:$0xff]
    %v4376 = vld [vmem:[%s12 + $0x6b4] sm:$0xff]
    %v4377 = vld [vmem:[%s12 + $0x6bc] sm:$0xff]
    %v4378 = vld [vmem:[%s12 + $0x6c4] sm:$0xf]
    %v4379 = vld [vmem:[%s12 + $0x6c8] sm:$0xff]
    %v4380 = vld [vmem:[%s12 + $0x6d0] sm:$0xff]
    %v4381 = vld [vmem:[%s12 + $0x6d8] sm:$0xff]
    %v4382 = vld [vmem:[%s12 + $0x6e0] sm:$0xf]
    %v4383 = vld [vmem:[%s12 + $0x6e4] sm:$0xff]
    %v4384 = vld [vmem:[%s12 + $0x6ec] sm:$0xff]
    %v4385 = vld [vmem:[%s12 + $0x6f4] sm:$0xff]
    %v4386 = vld [vmem:[%s12 + $0x6fc] sm:$0xf]
    %v4387 = vld [vmem:[%s13] sm:$0x7f]
    %v4389 = vlaneseq
    %v4390 = vshrl.u32 %v4389, 7
    %v4391 = vsub.s32 0, %v4390
    %v4392 = vrot.slane %v4387, %v4391
    %v4393 = vlaneseq
    %v4394 = vshrl.u32 %v4393, 7
    %v4395 = vsub.s32 1, %v4394
    %v4396 = vrot.slane %v4387, %v4395
    %v4397 = vlaneseq
    %v4398 = vshrl.u32 %v4397, 7
    %v4399 = vsub.s32 2, %v4398
    %v4400 = vrot.slane %v4387, %v4399
    %v4401 = vlaneseq
    %v4402 = vshrl.u32 %v4401, 7
    %v4403 = vsub.s32 3, %v4402
    %v4404 = vrot.slane %v4387, %v4403
    %v4405 = vlaneseq
    %v4406 = vshrl.u32 %v4405, 7
    %v4407 = vsub.s32 4, %v4406
    %v4408 = vrot.slane %v4387, %v4407
    %v4409 = vlaneseq
    %v4410 = vshrl.u32 %v4409, 7
    %v4411 = vsub.s32 5, %v4410
    %v4412 = vrot.slane %v4387, %v4411
    %v4413 = vlaneseq
    %v4414 = vshrl.u32 %v4413, 7
    %v4415 = vsub.s32 6, %v4414
    %v4416 = vrot.slane %v4387, %v4415
    %v4680 = vunpack.c.l.b16 %v4131
    %v4681 = vunpack.c.h.b16 %v4131
    %v4682 = vunpack.c.l.b16 %v4132
    %v4683 = vunpack.c.h.b16 %v4132
    %v4684 = vunpack.c.l.b16 %v4133
    %v4685 = vunpack.c.h.b16 %v4133
    %v4686 = vunpack.c.l.b16 %v4134
    %v4687 = vunpack.c.l.b16 %v4135
    %v4688 = vunpack.c.h.b16 %v4135
    %v4689 = vunpack.c.l.b16 %v4136
    %v4690 = vunpack.c.h.b16 %v4136
    %v4691 = vunpack.c.l.b16 %v4137
    %v4692 = vunpack.c.h.b16 %v4137
    %v4693 = vunpack.c.l.b16 %v4138
    %v4694 = vunpack.c.l.b16 %v4139
    %v4695 = vunpack.c.h.b16 %v4139
    %v4696 = vunpack.c.l.b16 %v4140
    %v4697 = vunpack.c.h.b16 %v4140
    %v4698 = vunpack.c.l.b16 %v4141
    %v4699 = vunpack.c.h.b16 %v4141
    %v4700 = vunpack.c.l.b16 %v4142
    %v4701 = vunpack.c.l.b16 %v4143
    %v4702 = vunpack.c.h.b16 %v4143
    %v4703 = vunpack.c.l.b16 %v4144
    %v4704 = vunpack.c.h.b16 %v4144
    %v4705 = vunpack.c.l.b16 %v4145
    %v4706 = vunpack.c.h.b16 %v4145
    %v4707 = vunpack.c.l.b16 %v4146
    %v4708 = vunpack.c.l.b16 %v4147
    %v4709 = vunpack.c.h.b16 %v4147
    %v4710 = vunpack.c.l.b16 %v4148
    %v4711 = vunpack.c.h.b16 %v4148
    %v4712 = vunpack.c.l.b16 %v4149
    %v4713 = vunpack.c.h.b16 %v4149
    %v4714 = vunpack.c.l.b16 %v4150
    %v4715 = vunpack.c.l.b16 %v4151
    %v4716 = vunpack.c.h.b16 %v4151
    %v4717 = vunpack.c.l.b16 %v4152
    %v4718 = vunpack.c.h.b16 %v4152
    %v4719 = vunpack.c.l.b16 %v4153
    %v4720 = vunpack.c.h.b16 %v4153
    %v4721 = vunpack.c.l.b16 %v4154
    %v4722 = vunpack.c.l.b16 %v4155
    %v4723 = vunpack.c.h.b16 %v4155
    %v4724 = vunpack.c.l.b16 %v4156
    %v4725 = vunpack.c.h.b16 %v4156
    %v4726 = vunpack.c.l.b16 %v4157
    %v4727 = vunpack.c.h.b16 %v4157
    %v4728 = vunpack.c.l.b16 %v4158
    %v4729 = vunpack.c.l.b16 %v4159
    %v4730 = vunpack.c.h.b16 %v4159
    %v4731 = vunpack.c.l.b16 %v4160
    %v4732 = vunpack.c.h.b16 %v4160
    %v4733 = vunpack.c.l.b16 %v4161
    %v4734 = vunpack.c.h.b16 %v4161
    %v4735 = vunpack.c.l.b16 %v4162
    %v4736 = vunpack.c.l.b16 %v4163
    %v4737 = vunpack.c.h.b16 %v4163
    %v4738 = vunpack.c.l.b16 %v4164
    %v4739 = vunpack.c.h.b16 %v4164
    %v4740 = vunpack.c.l.b16 %v4165
    %v4741 = vunpack.c.h.b16 %v4165
    %v4742 = vunpack.c.l.b16 %v4166
    %v4743 = vunpack.c.l.b16 %v4167
    %v4744 = vunpack.c.h.b16 %v4167
    %v4745 = vunpack.c.l.b16 %v4168
    %v4746 = vunpack.c.h.b16 %v4168
    %v4747 = vunpack.c.l.b16 %v4169
    %v4748 = vunpack.c.h.b16 %v4169
    %v4749 = vunpack.c.l.b16 %v4170
    %v4750 = vunpack.c.l.b16 %v4171
    %v4751 = vunpack.c.h.b16 %v4171
    %v4752 = vunpack.c.l.b16 %v4172
    %v4753 = vunpack.c.h.b16 %v4172
    %v4754 = vunpack.c.l.b16 %v4173
    %v4755 = vunpack.c.h.b16 %v4173
    %v4756 = vunpack.c.l.b16 %v4174
    %v4757 = vunpack.c.l.b16 %v4175
    %v4758 = vunpack.c.h.b16 %v4175
    %v4759 = vunpack.c.l.b16 %v4176
    %v4760 = vunpack.c.h.b16 %v4176
    %v4761 = vunpack.c.l.b16 %v4177
    %v4762 = vunpack.c.h.b16 %v4177
    %v4763 = vunpack.c.l.b16 %v4178
    %v4764 = vunpack.c.l.b16 %v4179
    %v4765 = vunpack.c.h.b16 %v4179
    %v4766 = vunpack.c.l.b16 %v4180
    %v4767 = vunpack.c.h.b16 %v4180
    %v4768 = vunpack.c.l.b16 %v4181
    %v4769 = vunpack.c.h.b16 %v4181
    %v4770 = vunpack.c.l.b16 %v4182
    %v4771 = vunpack.c.l.b16 %v4183
    %v4772 = vunpack.c.h.b16 %v4183
    %v4773 = vunpack.c.l.b16 %v4184
    %v4774 = vunpack.c.h.b16 %v4184
    %v4775 = vunpack.c.l.b16 %v4185
    %v4776 = vunpack.c.h.b16 %v4185
    %v4777 = vunpack.c.l.b16 %v4186
    %v4778 = vunpack.c.l.b16 %v4187
    %v4779 = vunpack.c.h.b16 %v4187
    %v4780 = vunpack.c.l.b16 %v4188
    %v4781 = vunpack.c.h.b16 %v4188
    %v4782 = vunpack.c.l.b16 %v4189
    %v4783 = vunpack.c.h.b16 %v4189
    %v4784 = vunpack.c.l.b16 %v4190
    %v4785 = vunpack.c.l.b16 %v4191
    %v4786 = vunpack.c.h.b16 %v4191
    %v4787 = vunpack.c.l.b16 %v4192
    %v4788 = vunpack.c.h.b16 %v4192
    %v4789 = vunpack.c.l.b16 %v4193
    %v4790 = vunpack.c.h.b16 %v4193
    %v4791 = vunpack.c.l.b16 %v4194
    %v4792 = vunpack.c.l.b16 %v4195
    %v4793 = vunpack.c.h.b16 %v4195
    %v4794 = vunpack.c.l.b16 %v4196
    %v4795 = vunpack.c.h.b16 %v4196
    %v4796 = vunpack.c.l.b16 %v4197
    %v4797 = vunpack.c.h.b16 %v4197
    %v4798 = vunpack.c.l.b16 %v4198
    %v4799 = vunpack.c.l.b16 %v4199
    %v4800 = vunpack.c.h.b16 %v4199
    %v4801 = vunpack.c.l.b16 %v4200
    %v4802 = vunpack.c.h.b16 %v4200
    %v4803 = vunpack.c.l.b16 %v4201
    %v4804 = vunpack.c.h.b16 %v4201
    %v4805 = vunpack.c.l.b16 %v4202
    %v4806 = vunpack.c.l.b16 %v4203
    %v4807 = vunpack.c.h.b16 %v4203
    %v4808 = vunpack.c.l.b16 %v4204
    %v4809 = vunpack.c.h.b16 %v4204
    %v4810 = vunpack.c.l.b16 %v4205
    %v4811 = vunpack.c.h.b16 %v4205
    %v4812 = vunpack.c.l.b16 %v4206
    %v4813 = vunpack.c.l.b16 %v4207
    %v4814 = vunpack.c.h.b16 %v4207
    %v4815 = vunpack.c.l.b16 %v4208
    %v4816 = vunpack.c.h.b16 %v4208
    %v4817 = vunpack.c.l.b16 %v4209
    %v4818 = vunpack.c.h.b16 %v4209
    %v4819 = vunpack.c.l.b16 %v4210
    %v4820 = vunpack.c.l.b16 %v4211
    %v4821 = vunpack.c.h.b16 %v4211
    %v4822 = vunpack.c.l.b16 %v4212
    %v4823 = vunpack.c.h.b16 %v4212
    %v4824 = vunpack.c.l.b16 %v4213
    %v4825 = vunpack.c.h.b16 %v4213
    %v4826 = vunpack.c.l.b16 %v4214
    %v4827 = vunpack.c.l.b16 %v4215
    %v4828 = vunpack.c.h.b16 %v4215
    %v4829 = vunpack.c.l.b16 %v4216
    %v4830 = vunpack.c.h.b16 %v4216
    %v4831 = vunpack.c.l.b16 %v4217
    %v4832 = vunpack.c.h.b16 %v4217
    %v4833 = vunpack.c.l.b16 %v4218
    %v4834 = vunpack.c.l.b16 %v4219
    %v4835 = vunpack.c.h.b16 %v4219
    %v4836 = vunpack.c.l.b16 %v4220
    %v4837 = vunpack.c.h.b16 %v4220
    %v4838 = vunpack.c.l.b16 %v4221
    %v4839 = vunpack.c.h.b16 %v4221
    %v4840 = vunpack.c.l.b16 %v4222
    %v4841 = vunpack.c.l.b16 %v4223
    %v4842 = vunpack.c.h.b16 %v4223
    %v4843 = vunpack.c.l.b16 %v4224
    %v4844 = vunpack.c.h.b16 %v4224
    %v4845 = vunpack.c.l.b16 %v4225
    %v4846 = vunpack.c.h.b16 %v4225
    %v4847 = vunpack.c.l.b16 %v4226
    %v4848 = vunpack.c.l.b16 %v4227
    %v4849 = vunpack.c.h.b16 %v4227
    %v4850 = vunpack.c.l.b16 %v4228
    %v4851 = vunpack.c.h.b16 %v4228
    %v4852 = vunpack.c.l.b16 %v4229
    %v4853 = vunpack.c.h.b16 %v4229
    %v4854 = vunpack.c.l.b16 %v4230
    %v4855 = vunpack.c.l.b16 %v4231
    %v4856 = vunpack.c.h.b16 %v4231
    %v4857 = vunpack.c.l.b16 %v4232
    %v4858 = vunpack.c.h.b16 %v4232
    %v4859 = vunpack.c.l.b16 %v4233
    %v4860 = vunpack.c.h.b16 %v4233
    %v4861 = vunpack.c.l.b16 %v4234
    %v4862 = vunpack.c.l.b16 %v4235
    %v4863 = vunpack.c.h.b16 %v4235
    %v4864 = vunpack.c.l.b16 %v4236
    %v4865 = vunpack.c.h.b16 %v4236
    %v4866 = vunpack.c.l.b16 %v4237
    %v4867 = vunpack.c.h.b16 %v4237
    %v4868 = vunpack.c.l.b16 %v4238
    %v4869 = vunpack.c.l.b16 %v4239
    %v4870 = vunpack.c.h.b16 %v4239
    %v4871 = vunpack.c.l.b16 %v4240
    %v4872 = vunpack.c.h.b16 %v4240
    %v4873 = vunpack.c.l.b16 %v4241
    %v4874 = vunpack.c.h.b16 %v4241
    %v4875 = vunpack.c.l.b16 %v4242
    %v4876 = vunpack.c.l.b16 %v4243
    %v4877 = vunpack.c.h.b16 %v4243
    %v4878 = vunpack.c.l.b16 %v4244
    %v4879 = vunpack.c.h.b16 %v4244
    %v4880 = vunpack.c.l.b16 %v4245
    %v4881 = vunpack.c.h.b16 %v4245
    %v4882 = vunpack.c.l.b16 %v4246
    %v4883 = vunpack.c.l.b16 %v4247
    %v4884 = vunpack.c.h.b16 %v4247
    %v4885 = vunpack.c.l.b16 %v4248
    %v4886 = vunpack.c.h.b16 %v4248
    %v4887 = vunpack.c.l.b16 %v4249
    %v4888 = vunpack.c.h.b16 %v4249
    %v4889 = vunpack.c.l.b16 %v4250
    %v4890 = vunpack.c.l.b16 %v4251
    %v4891 = vunpack.c.h.b16 %v4251
    %v4892 = vunpack.c.l.b16 %v4252
    %v4893 = vunpack.c.h.b16 %v4252
    %v4894 = vunpack.c.l.b16 %v4253
    %v4895 = vunpack.c.h.b16 %v4253
    %v4896 = vunpack.c.l.b16 %v4254
    %v4897 = vunpack.c.l.b16 %v4255
    %v4898 = vunpack.c.h.b16 %v4255
    %v4899 = vunpack.c.l.b16 %v4256
    %v4900 = vunpack.c.h.b16 %v4256
    %v4901 = vunpack.c.l.b16 %v4257
    %v4902 = vunpack.c.h.b16 %v4257
    %v4903 = vunpack.c.l.b16 %v4258
    %v4904 = vunpack.c.l.b16 %v4259
    %v4905 = vunpack.c.h.b16 %v4259
    %v4906 = vunpack.c.l.b16 %v4260
    %v4907 = vunpack.c.h.b16 %v4260
    %v4908 = vunpack.c.l.b16 %v4261
    %v4909 = vunpack.c.h.b16 %v4261
    %v4910 = vunpack.c.l.b16 %v4262
    %v4911 = vunpack.c.l.b16 %v4263
    %v4912 = vunpack.c.h.b16 %v4263
    %v4913 = vunpack.c.l.b16 %v4264
    %v4914 = vunpack.c.h.b16 %v4264
    %v4915 = vunpack.c.l.b16 %v4265
    %v4916 = vunpack.c.h.b16 %v4265
    %v4917 = vunpack.c.l.b16 %v4266
    %v4918 = vunpack.c.l.b16 %v4267
    %v4919 = vunpack.c.h.b16 %v4267
    %v4920 = vunpack.c.l.b16 %v4268
    %v4921 = vunpack.c.h.b16 %v4268
    %v4922 = vunpack.c.l.b16 %v4269
    %v4923 = vunpack.c.h.b16 %v4269
    %v4924 = vunpack.c.l.b16 %v4270
    %v4925 = vunpack.c.l.b16 %v4271
    %v4926 = vunpack.c.h.b16 %v4271
    %v4927 = vunpack.c.l.b16 %v4272
    %v4928 = vunpack.c.h.b16 %v4272
    %v4929 = vunpack.c.l.b16 %v4273
    %v4930 = vunpack.c.h.b16 %v4273
    %v4931 = vunpack.c.l.b16 %v4274
    %v4932 = vunpack.c.l.b16 %v4275
    %v4933 = vunpack.c.h.b16 %v4275
    %v4934 = vunpack.c.l.b16 %v4276
    %v4935 = vunpack.c.h.b16 %v4276
    %v4936 = vunpack.c.l.b16 %v4277
    %v4937 = vunpack.c.h.b16 %v4277
    %v4938 = vunpack.c.l.b16 %v4278
    %v4939 = vunpack.c.l.b16 %v4279
    %v4940 = vunpack.c.h.b16 %v4279
    %v4941 = vunpack.c.l.b16 %v4280
    %v4942 = vunpack.c.h.b16 %v4280
    %v4943 = vunpack.c.l.b16 %v4281
    %v4944 = vunpack.c.h.b16 %v4281
    %v4945 = vunpack.c.l.b16 %v4282
    %v4946 = vunpack.c.l.b16 %v4283
    %v4947 = vunpack.c.h.b16 %v4283
    %v4948 = vunpack.c.l.b16 %v4284
    %v4949 = vunpack.c.h.b16 %v4284
    %v4950 = vunpack.c.l.b16 %v4285
    %v4951 = vunpack.c.h.b16 %v4285
    %v4952 = vunpack.c.l.b16 %v4286
    %v4953 = vunpack.c.l.b16 %v4287
    %v4954 = vunpack.c.h.b16 %v4287
    %v4955 = vunpack.c.l.b16 %v4288
    %v4956 = vunpack.c.h.b16 %v4288
    %v4957 = vunpack.c.l.b16 %v4289
    %v4958 = vunpack.c.h.b16 %v4289
    %v4959 = vunpack.c.l.b16 %v4290
    %v4960 = vunpack.c.l.b16 %v4291
    %v4961 = vunpack.c.h.b16 %v4291
    %v4962 = vunpack.c.l.b16 %v4292
    %v4963 = vunpack.c.h.b16 %v4292
    %v4964 = vunpack.c.l.b16 %v4293
    %v4965 = vunpack.c.h.b16 %v4293
    %v4966 = vunpack.c.l.b16 %v4294
    %v4967 = vunpack.c.l.b16 %v4295
    %v4968 = vunpack.c.h.b16 %v4295
    %v4969 = vunpack.c.l.b16 %v4296
    %v4970 = vunpack.c.h.b16 %v4296
    %v4971 = vunpack.c.l.b16 %v4297
    %v4972 = vunpack.c.h.b16 %v4297
    %v4973 = vunpack.c.l.b16 %v4298
    %v4974 = vunpack.c.l.b16 %v4299
    %v4975 = vunpack.c.h.b16 %v4299
    %v4976 = vunpack.c.l.b16 %v4300
    %v4977 = vunpack.c.h.b16 %v4300
    %v4978 = vunpack.c.l.b16 %v4301
    %v4979 = vunpack.c.h.b16 %v4301
    %v4980 = vunpack.c.l.b16 %v4302
    %v4981 = vunpack.c.l.b16 %v4303
    %v4982 = vunpack.c.h.b16 %v4303
    %v4983 = vunpack.c.l.b16 %v4304
    %v4984 = vunpack.c.h.b16 %v4304
    %v4985 = vunpack.c.l.b16 %v4305
    %v4986 = vunpack.c.h.b16 %v4305
    %v4987 = vunpack.c.l.b16 %v4306
    %v4988 = vunpack.c.l.b16 %v4307
    %v4989 = vunpack.c.h.b16 %v4307
    %v4990 = vunpack.c.l.b16 %v4308
    %v4991 = vunpack.c.h.b16 %v4308
    %v4992 = vunpack.c.l.b16 %v4309
    %v4993 = vunpack.c.h.b16 %v4309
    %v4994 = vunpack.c.l.b16 %v4310
    %v4995 = vunpack.c.l.b16 %v4311
    %v4996 = vunpack.c.h.b16 %v4311
    %v4997 = vunpack.c.l.b16 %v4312
    %v4998 = vunpack.c.h.b16 %v4312
    %v4999 = vunpack.c.l.b16 %v4313
    %v5000 = vunpack.c.h.b16 %v4313
    %v5001 = vunpack.c.l.b16 %v4314
    %v5002 = vunpack.c.l.b16 %v4315
    %v5003 = vunpack.c.h.b16 %v4315
    %v5004 = vunpack.c.l.b16 %v4316
    %v5005 = vunpack.c.h.b16 %v4316
    %v5006 = vunpack.c.l.b16 %v4317
    %v5007 = vunpack.c.h.b16 %v4317
    %v5008 = vunpack.c.l.b16 %v4318
    %v5009 = vunpack.c.l.b16 %v4319
    %v5010 = vunpack.c.h.b16 %v4319
    %v5011 = vunpack.c.l.b16 %v4320
    %v5012 = vunpack.c.h.b16 %v4320
    %v5013 = vunpack.c.l.b16 %v4321
    %v5014 = vunpack.c.h.b16 %v4321
    %v5015 = vunpack.c.l.b16 %v4322
    %v5016 = vunpack.c.l.b16 %v4323
    %v5017 = vunpack.c.h.b16 %v4323
    %v5018 = vunpack.c.l.b16 %v4324
    %v5019 = vunpack.c.h.b16 %v4324
    %v5020 = vunpack.c.l.b16 %v4325
    %v5021 = vunpack.c.h.b16 %v4325
    %v5022 = vunpack.c.l.b16 %v4326
    %v5023 = vunpack.c.l.b16 %v4327
    %v5024 = vunpack.c.h.b16 %v4327
    %v5025 = vunpack.c.l.b16 %v4328
    %v5026 = vunpack.c.h.b16 %v4328
    %v5027 = vunpack.c.l.b16 %v4329
    %v5028 = vunpack.c.h.b16 %v4329
    %v5029 = vunpack.c.l.b16 %v4330
    %v5030 = vunpack.c.l.b16 %v4331
    %v5031 = vunpack.c.h.b16 %v4331
    %v5032 = vunpack.c.l.b16 %v4332
    %v5033 = vunpack.c.h.b16 %v4332
    %v5034 = vunpack.c.l.b16 %v4333
    %v5035 = vunpack.c.h.b16 %v4333
    %v5036 = vunpack.c.l.b16 %v4334
    %v5037 = vunpack.c.l.b16 %v4335
    %v5038 = vunpack.c.h.b16 %v4335
    %v5039 = vunpack.c.l.b16 %v4336
    %v5040 = vunpack.c.h.b16 %v4336
    %v5041 = vunpack.c.l.b16 %v4337
    %v5042 = vunpack.c.h.b16 %v4337
    %v5043 = vunpack.c.l.b16 %v4338
    %v5044 = vunpack.c.l.b16 %v4339
    %v5045 = vunpack.c.h.b16 %v4339
    %v5046 = vunpack.c.l.b16 %v4340
    %v5047 = vunpack.c.h.b16 %v4340
    %v5048 = vunpack.c.l.b16 %v4341
    %v5049 = vunpack.c.h.b16 %v4341
    %v5050 = vunpack.c.l.b16 %v4342
    %v5051 = vunpack.c.l.b16 %v4343
    %v5052 = vunpack.c.h.b16 %v4343
    %v5053 = vunpack.c.l.b16 %v4344
    %v5054 = vunpack.c.h.b16 %v4344
    %v5055 = vunpack.c.l.b16 %v4345
    %v5056 = vunpack.c.h.b16 %v4345
    %v5057 = vunpack.c.l.b16 %v4346
    %v5058 = vunpack.c.l.b16 %v4347
    %v5059 = vunpack.c.h.b16 %v4347
    %v5060 = vunpack.c.l.b16 %v4348
    %v5061 = vunpack.c.h.b16 %v4348
    %v5062 = vunpack.c.l.b16 %v4349
    %v5063 = vunpack.c.h.b16 %v4349
    %v5064 = vunpack.c.l.b16 %v4350
    %v5065 = vunpack.c.l.b16 %v4351
    %v5066 = vunpack.c.h.b16 %v4351
    %v5067 = vunpack.c.l.b16 %v4352
    %v5068 = vunpack.c.h.b16 %v4352
    %v5069 = vunpack.c.l.b16 %v4353
    %v5070 = vunpack.c.h.b16 %v4353
    %v5071 = vunpack.c.l.b16 %v4354
    %v5072 = vunpack.c.l.b16 %v4355
    %v5073 = vunpack.c.h.b16 %v4355
    %v5074 = vunpack.c.l.b16 %v4356
    %v5075 = vunpack.c.h.b16 %v4356
    %v5076 = vunpack.c.l.b16 %v4357
    %v5077 = vunpack.c.h.b16 %v4357
    %v5078 = vunpack.c.l.b16 %v4358
    %v5079 = vunpack.c.l.b16 %v4359
    %v5080 = vunpack.c.h.b16 %v4359
    %v5081 = vunpack.c.l.b16 %v4360
    %v5082 = vunpack.c.h.b16 %v4360
    %v5083 = vunpack.c.l.b16 %v4361
    %v5084 = vunpack.c.h.b16 %v4361
    %v5085 = vunpack.c.l.b16 %v4362
    %v5086 = vunpack.c.l.b16 %v4363
    %v5087 = vunpack.c.h.b16 %v4363
    %v5088 = vunpack.c.l.b16 %v4364
    %v5089 = vunpack.c.h.b16 %v4364
    %v5090 = vunpack.c.l.b16 %v4365
    %v5091 = vunpack.c.h.b16 %v4365
    %v5092 = vunpack.c.l.b16 %v4366
    %v5093 = vunpack.c.l.b16 %v4367
    %v5094 = vunpack.c.h.b16 %v4367
    %v5095 = vunpack.c.l.b16 %v4368
    %v5096 = vunpack.c.h.b16 %v4368
    %v5097 = vunpack.c.l.b16 %v4369
    %v5098 = vunpack.c.h.b16 %v4369
    %v5099 = vunpack.c.l.b16 %v4370
    %v5100 = vunpack.c.l.b16 %v4371
    %v5101 = vunpack.c.h.b16 %v4371
    %v5102 = vunpack.c.l.b16 %v4372
    %v5103 = vunpack.c.h.b16 %v4372
    %v5104 = vunpack.c.l.b16 %v4373
    %v5105 = vunpack.c.h.b16 %v4373
    %v5106 = vunpack.c.l.b16 %v4374
    %v5107 = vunpack.c.l.b16 %v4375
    %v5108 = vunpack.c.h.b16 %v4375
    %v5109 = vunpack.c.l.b16 %v4376
    %v5110 = vunpack.c.h.b16 %v4376
    %v5111 = vunpack.c.l.b16 %v4377
    %v5112 = vunpack.c.h.b16 %v4377
    %v5113 = vunpack.c.l.b16 %v4378
    %v5114 = vunpack.c.l.b16 %v4379
    %v5115 = vunpack.c.h.b16 %v4379
    %v5116 = vunpack.c.l.b16 %v4380
    %v5117 = vunpack.c.h.b16 %v4380
    %v5118 = vunpack.c.l.b16 %v4381
    %v5119 = vunpack.c.h.b16 %v4381
    %v5120 = vunpack.c.l.b16 %v4382
    %v5121 = vunpack.c.l.b16 %v4383
    %v5122 = vunpack.c.h.b16 %v4383
    %v5123 = vunpack.c.l.b16 %v4384
    %v5124 = vunpack.c.h.b16 %v4384
    %v5125 = vunpack.c.l.b16 %v4385
    %v5126 = vunpack.c.h.b16 %v4385
    %v5127 = vunpack.c.l.b16 %v4386
    %v5128 = vpack.c.b16 %v4687, %v4680
    %v5129 = vpack.c.b16 %v4688, %v4681
    %v5130 = vpack.c.b16 %v4689, %v4682
    %v5131 = vpack.c.b16 %v4690, %v4683
    %v5132 = vpack.c.b16 %v4691, %v4684
    %v5133 = vpack.c.b16 %v4692, %v4685
    %v5134 = vpack.c.b16 %v4693, %v4686
    %v5135 = vpack.c.b16 %v4701, %v4694
    %v5136 = vpack.c.b16 %v4702, %v4695
    %v5137 = vpack.c.b16 %v4703, %v4696
    %v5138 = vpack.c.b16 %v4704, %v4697
    %v5139 = vpack.c.b16 %v4705, %v4698
    %v5140 = vpack.c.b16 %v4706, %v4699
    %v5141 = vpack.c.b16 %v4707, %v4700
    %v5142 = vpack.c.b16 %v4715, %v4708
    %v5143 = vpack.c.b16 %v4716, %v4709
    %v5144 = vpack.c.b16 %v4717, %v4710
    %v5145 = vpack.c.b16 %v4718, %v4711
    %v5146 = vpack.c.b16 %v4719, %v4712
    %v5147 = vpack.c.b16 %v4720, %v4713
    %v5148 = vpack.c.b16 %v4721, %v4714
    %v5149 = vpack.c.b16 %v4729, %v4722
    %v5150 = vpack.c.b16 %v4730, %v4723
    %v5151 = vpack.c.b16 %v4731, %v4724
    %v5152 = vpack.c.b16 %v4732, %v4725
    %v5153 = vpack.c.b16 %v4733, %v4726
    %v5154 = vpack.c.b16 %v4734, %v4727
    %v5155 = vpack.c.b16 %v4735, %v4728
    %v5156 = vpack.c.b16 %v4743, %v4736
    %v5157 = vpack.c.b16 %v4744, %v4737
    %v5158 = vpack.c.b16 %v4745, %v4738
    %v5159 = vpack.c.b16 %v4746, %v4739
    %v5160 = vpack.c.b16 %v4747, %v4740
    %v5161 = vpack.c.b16 %v4748, %v4741
    %v5162 = vpack.c.b16 %v4749, %v4742
    %v5163 = vpack.c.b16 %v4757, %v4750
    %v5164 = vpack.c.b16 %v4758, %v4751
    %v5165 = vpack.c.b16 %v4759, %v4752
    %v5166 = vpack.c.b16 %v4760, %v4753
    %v5167 = vpack.c.b16 %v4761, %v4754
    %v5168 = vpack.c.b16 %v4762, %v4755
    %v5169 = vpack.c.b16 %v4763, %v4756
    %v5170 = vpack.c.b16 %v4771, %v4764
    %v5171 = vpack.c.b16 %v4772, %v4765
    %v5172 = vpack.c.b16 %v4773, %v4766
    %v5173 = vpack.c.b16 %v4774, %v4767
    %v5174 = vpack.c.b16 %v4775, %v4768
    %v5175 = vpack.c.b16 %v4776, %v4769
    %v5176 = vpack.c.b16 %v4777, %v4770
    %v5177 = vpack.c.b16 %v4785, %v4778
    %v5178 = vpack.c.b16 %v4786, %v4779
    %v5179 = vpack.c.b16 %v4787, %v4780
    %v5180 = vpack.c.b16 %v4788, %v4781
    %v5181 = vpack.c.b16 %v4789, %v4782
    %v5182 = vpack.c.b16 %v4790, %v4783
    %v5183 = vpack.c.b16 %v4791, %v4784
    %v5184 = vpack.c.b16 %v4799, %v4792
    %v5185 = vpack.c.b16 %v4800, %v4793
    %v5186 = vpack.c.b16 %v4801, %v4794
    %v5187 = vpack.c.b16 %v4802, %v4795
    %v5188 = vpack.c.b16 %v4803, %v4796
    %v5189 = vpack.c.b16 %v4804, %v4797
    %v5190 = vpack.c.b16 %v4805, %v4798
    %v5191 = vpack.c.b16 %v4813, %v4806
    %v5192 = vpack.c.b16 %v4814, %v4807
    %v5193 = vpack.c.b16 %v4815, %v4808
    %v5194 = vpack.c.b16 %v4816, %v4809
    %v5195 = vpack.c.b16 %v4817, %v4810
    %v5196 = vpack.c.b16 %v4818, %v4811
    %v5197 = vpack.c.b16 %v4819, %v4812
    %v5198 = vpack.c.b16 %v4827, %v4820
    %v5199 = vpack.c.b16 %v4828, %v4821
    %v5200 = vpack.c.b16 %v4829, %v4822
    %v5201 = vpack.c.b16 %v4830, %v4823
    %v5202 = vpack.c.b16 %v4831, %v4824
    %v5203 = vpack.c.b16 %v4832, %v4825
    %v5204 = vpack.c.b16 %v4833, %v4826
    %v5205 = vpack.c.b16 %v4841, %v4834
    %v5206 = vpack.c.b16 %v4842, %v4835
    %v5207 = vpack.c.b16 %v4843, %v4836
    %v5208 = vpack.c.b16 %v4844, %v4837
    %v5209 = vpack.c.b16 %v4845, %v4838
    %v5210 = vpack.c.b16 %v4846, %v4839
    %v5211 = vpack.c.b16 %v4847, %v4840
    %v5212 = vpack.c.b16 %v4855, %v4848
    %v5213 = vpack.c.b16 %v4856, %v4849
    %v5214 = vpack.c.b16 %v4857, %v4850
    %v5215 = vpack.c.b16 %v4858, %v4851
    %v5216 = vpack.c.b16 %v4859, %v4852
    %v5217 = vpack.c.b16 %v4860, %v4853
    %v5218 = vpack.c.b16 %v4861, %v4854
    %v5219 = vpack.c.b16 %v4869, %v4862
    %v5220 = vpack.c.b16 %v4870, %v4863
    %v5221 = vpack.c.b16 %v4871, %v4864
    %v5222 = vpack.c.b16 %v4872, %v4865
    %v5223 = vpack.c.b16 %v4873, %v4866
    %v5224 = vpack.c.b16 %v4874, %v4867
    %v5225 = vpack.c.b16 %v4875, %v4868
    %v5226 = vpack.c.b16 %v4883, %v4876
    %v5227 = vpack.c.b16 %v4884, %v4877
    %v5228 = vpack.c.b16 %v4885, %v4878
    %v5229 = vpack.c.b16 %v4886, %v4879
    %v5230 = vpack.c.b16 %v4887, %v4880
    %v5231 = vpack.c.b16 %v4888, %v4881
    %v5232 = vpack.c.b16 %v4889, %v4882
    %v5233 = vpack.c.b16 %v4897, %v4890
    %v5234 = vpack.c.b16 %v4898, %v4891
    %v5235 = vpack.c.b16 %v4899, %v4892
    %v5236 = vpack.c.b16 %v4900, %v4893
    %v5237 = vpack.c.b16 %v4901, %v4894
    %v5238 = vpack.c.b16 %v4902, %v4895
    %v5239 = vpack.c.b16 %v4903, %v4896
    %v5240 = vpack.c.b16 %v4911, %v4904
    %v5241 = vpack.c.b16 %v4912, %v4905
    %v5242 = vpack.c.b16 %v4913, %v4906
    %v5243 = vpack.c.b16 %v4914, %v4907
    %v5244 = vpack.c.b16 %v4915, %v4908
    %v5245 = vpack.c.b16 %v4916, %v4909
    %v5246 = vpack.c.b16 %v4917, %v4910
    %v5247 = vpack.c.b16 %v4925, %v4918
    %v5248 = vpack.c.b16 %v4926, %v4919
    %v5249 = vpack.c.b16 %v4927, %v4920
    %v5250 = vpack.c.b16 %v4928, %v4921
    %v5251 = vpack.c.b16 %v4929, %v4922
    %v5252 = vpack.c.b16 %v4930, %v4923
    %v5253 = vpack.c.b16 %v4931, %v4924
    %v5254 = vpack.c.b16 %v4939, %v4932
    %v5255 = vpack.c.b16 %v4940, %v4933
    %v5256 = vpack.c.b16 %v4941, %v4934
    %v5257 = vpack.c.b16 %v4942, %v4935
    %v5258 = vpack.c.b16 %v4943, %v4936
    %v5259 = vpack.c.b16 %v4944, %v4937
    %v5260 = vpack.c.b16 %v4945, %v4938
    %v5261 = vpack.c.b16 %v4953, %v4946
    %v5262 = vpack.c.b16 %v4954, %v4947
    %v5263 = vpack.c.b16 %v4955, %v4948
    %v5264 = vpack.c.b16 %v4956, %v4949
    %v5265 = vpack.c.b16 %v4957, %v4950
    %v5266 = vpack.c.b16 %v4958, %v4951
    %v5267 = vpack.c.b16 %v4959, %v4952
    %v5268 = vpack.c.b16 %v4967, %v4960
    %v5269 = vpack.c.b16 %v4968, %v4961
    %v5270 = vpack.c.b16 %v4969, %v4962
    %v5271 = vpack.c.b16 %v4970, %v4963
    %v5272 = vpack.c.b16 %v4971, %v4964
    %v5273 = vpack.c.b16 %v4972, %v4965
    %v5274 = vpack.c.b16 %v4973, %v4966
    %v5275 = vpack.c.b16 %v4981, %v4974
    %v5276 = vpack.c.b16 %v4982, %v4975
    %v5277 = vpack.c.b16 %v4983, %v4976
    %v5278 = vpack.c.b16 %v4984, %v4977
    %v5279 = vpack.c.b16 %v4985, %v4978
    %v5280 = vpack.c.b16 %v4986, %v4979
    %v5281 = vpack.c.b16 %v4987, %v4980
    %v5282 = vpack.c.b16 %v4995, %v4988
    %v5283 = vpack.c.b16 %v4996, %v4989
    %v5284 = vpack.c.b16 %v4997, %v4990
    %v5285 = vpack.c.b16 %v4998, %v4991
    %v5286 = vpack.c.b16 %v4999, %v4992
    %v5287 = vpack.c.b16 %v5000, %v4993
    %v5288 = vpack.c.b16 %v5001, %v4994
    %v5289 = vpack.c.b16 %v5009, %v5002
    %v5290 = vpack.c.b16 %v5010, %v5003
    %v5291 = vpack.c.b16 %v5011, %v5004
    %v5292 = vpack.c.b16 %v5012, %v5005
    %v5293 = vpack.c.b16 %v5013, %v5006
    %v5294 = vpack.c.b16 %v5014, %v5007
    %v5295 = vpack.c.b16 %v5015, %v5008
    %v5296 = vpack.c.b16 %v5023, %v5016
    %v5297 = vpack.c.b16 %v5024, %v5017
    %v5298 = vpack.c.b16 %v5025, %v5018
    %v5299 = vpack.c.b16 %v5026, %v5019
    %v5300 = vpack.c.b16 %v5027, %v5020
    %v5301 = vpack.c.b16 %v5028, %v5021
    %v5302 = vpack.c.b16 %v5029, %v5022
    %v5303 = vpack.c.b16 %v5037, %v5030
    %v5304 = vpack.c.b16 %v5038, %v5031
    %v5305 = vpack.c.b16 %v5039, %v5032
    %v5306 = vpack.c.b16 %v5040, %v5033
    %v5307 = vpack.c.b16 %v5041, %v5034
    %v5308 = vpack.c.b16 %v5042, %v5035
    %v5309 = vpack.c.b16 %v5043, %v5036
    %v5310 = vpack.c.b16 %v5051, %v5044
    %v5311 = vpack.c.b16 %v5052, %v5045
    %v5312 = vpack.c.b16 %v5053, %v5046
    %v5313 = vpack.c.b16 %v5054, %v5047
    %v5314 = vpack.c.b16 %v5055, %v5048
    %v5315 = vpack.c.b16 %v5056, %v5049
    %v5316 = vpack.c.b16 %v5057, %v5050
    %v5317 = vpack.c.b16 %v5065, %v5058
    %v5318 = vpack.c.b16 %v5066, %v5059
    %v5319 = vpack.c.b16 %v5067, %v5060
    %v5320 = vpack.c.b16 %v5068, %v5061
    %v5321 = vpack.c.b16 %v5069, %v5062
    %v5322 = vpack.c.b16 %v5070, %v5063
    %v5323 = vpack.c.b16 %v5071, %v5064
    %v5324 = vpack.c.b16 %v5079, %v5072
    %v5325 = vpack.c.b16 %v5080, %v5073
    %v5326 = vpack.c.b16 %v5081, %v5074
    %v5327 = vpack.c.b16 %v5082, %v5075
    %v5328 = vpack.c.b16 %v5083, %v5076
    %v5329 = vpack.c.b16 %v5084, %v5077
    %v5330 = vpack.c.b16 %v5085, %v5078
    %v5331 = vpack.c.b16 %v5093, %v5086
    %v5332 = vpack.c.b16 %v5094, %v5087
    %v5333 = vpack.c.b16 %v5095, %v5088
    %v5334 = vpack.c.b16 %v5096, %v5089
    %v5335 = vpack.c.b16 %v5097, %v5090
    %v5336 = vpack.c.b16 %v5098, %v5091
    %v5337 = vpack.c.b16 %v5099, %v5092
    %v5338 = vpack.c.b16 %v5107, %v5100
    %v5339 = vpack.c.b16 %v5108, %v5101
    %v5340 = vpack.c.b16 %v5109, %v5102
    %v5341 = vpack.c.b16 %v5110, %v5103
    %v5342 = vpack.c.b16 %v5111, %v5104
    %v5343 = vpack.c.b16 %v5112, %v5105
    %v5344 = vpack.c.b16 %v5113, %v5106
    %v5345 = vpack.c.b16 %v5121, %v5114
    %v5346 = vpack.c.b16 %v5122, %v5115
    %v5347 = vpack.c.b16 %v5123, %v5116
    %v5348 = vpack.c.b16 %v5124, %v5117
    %v5349 = vpack.c.b16 %v5125, %v5118
    %v5350 = vpack.c.b16 %v5126, %v5119
    %v5351 = vpack.c.b16 %v5127, %v5120
    %5576 = vmatprep.subr.bf16.mxu0 %v5129
    %5577 = vmatpush1.bf16.msra.mxu0 %v5128
    %5578 = vmatprep.subr.bf16.mxu0 %v5136
    %5579 = vmatpush1.bf16.msra.mxu0 %v5135
    %5580 = vmatprep.subr.bf16.mxu0 %v5143
    %5581 = vmatpush1.bf16.msra.mxu0 %v5142
    %5582 = vmatprep.subr.bf16.mxu0 %v5150
    %5583 = vmatpush1.bf16.msra.mxu0 %v5149
    %5584 = vmatprep.subr.bf16.mxu0 %v5157
    %5585 = vmatpush1.bf16.msra.mxu0 %v5156
    %5586 = vmatprep.subr.bf16.mxu0 %v5164
    %5587 = vmatpush1.bf16.msra.mxu0 %v5163
    %5588 = vmatprep.subr.bf16.mxu0 %v5171
    %5589 = vmatpush1.bf16.msra.mxu0 %v5170
    %5590 = vmatprep.subr.bf16.mxu0 %v5178
    %5591 = vmatpush1.bf16.msra.mxu0 %v5177
    %5592 = vmatprep.subr.bf16.mxu0 %v5185
    %5593 = vmatpush1.bf16.msra.mxu0 %v5184
    %5594 = vmatprep.subr.bf16.mxu0 %v5192
    %5595 = vmatpush1.bf16.msra.mxu0 %v5191
    %5596 = vmatprep.subr.bf16.mxu0 %v5199
    %5597 = vmatpush1.bf16.msra.mxu0 %v5198
    %5598 = vmatprep.subr.bf16.mxu0 %v5206
    %5599 = vmatpush1.bf16.msra.mxu0 %v5205
    %5600 = vmatprep.subr.bf16.mxu0 %v5213
    %5601 = vmatpush1.bf16.msra.mxu0 %v5212
    %5602 = vmatprep.subr.bf16.mxu0 %v5220
    %5603 = vmatpush1.bf16.msra.mxu0 %v5219
    %5604 = vmatprep.subr.bf16.mxu0 %v5227
    %5605 = vmatpush1.bf16.msra.mxu0 %v5226
    %5606 = vmatprep.subr.bf16.mxu0 %v5234
    %5607 = vmatpush1.bf16.msra.mxu0 %v5233
    %5608 = vmatprep.mubr.bf16.mxu0 %v4128
    %5609 = vmatmul.mubr.bf16.gmra.mrb[0].mxu0 %v4127
    %v5610 = vpop.f32.mrb[0].mxu0
    %v5611 = vadd.f32 %v4392, %v5610
    %v5612 = vpop.f32.mrb[0].mxu0
    %v5613 = vadd.f32 %v4396, %v5612
    %v5614 = vpop.f32.mrb[0].mxu0
    %v5615 = vpop.f32.mrb[0].mxu0
    %5616 = vdwg.mxu0
    %5617 = vmatprep.subr.bf16.mxu0 %v5241
    %5618 = vmatpush1.bf16.msra.mxu0 %v5240
    %5619 = vmatprep.subr.bf16.mxu0 %v5248
    %5620 = vmatpush1.bf16.msra.mxu0 %v5247
    %5621 = vmatprep.subr.bf16.mxu0 %v5255
    %5622 = vmatpush1.bf16.msra.mxu0 %v5254
    %5623 = vmatprep.subr.bf16.mxu0 %v5262
    %5624 = vmatpush1.bf16.msra.mxu0 %v5261
    %5625 = vmatprep.subr.bf16.mxu0 %v5269
    %5626 = vmatpush1.bf16.msra.mxu0 %v5268
    %5627 = vmatprep.subr.bf16.mxu0 %v5276
    %5628 = vmatpush1.bf16.msra.mxu0 %v5275
    %5629 = vmatprep.subr.bf16.mxu0 %v5283
    %5630 = vmatpush1.bf16.msra.mxu0 %v5282
    %5631 = vmatprep.subr.bf16.mxu0 %v5290
    %5632 = vmatpush1.bf16.msra.mxu0 %v5289
    %5633 = vmatprep.subr.bf16.mxu0 %v5297
    %5634 = vmatpush1.bf16.msra.mxu0 %v5296
    %5635 = vmatprep.subr.bf16.mxu0 %v5304
    %5636 = vmatpush1.bf16.msra.mxu0 %v5303
    %5637 = vmatprep.subr.bf16.mxu0 %v5311
    %5638 = vmatpush1.bf16.msra.mxu0 %v5310
    %5639 = vmatprep.subr.bf16.mxu0 %v5318
    %5640 = vmatpush1.bf16.msra.mxu0 %v5317
    %5641 = vmatprep.subr.bf16.mxu0 %v5325
    %5642 = vmatpush1.bf16.msra.mxu0 %v5324
    %5643 = vmatprep.subr.bf16.mxu0 %v5332
    %5644 = vmatpush1.bf16.msra.mxu0 %v5331
    %5645 = vmatprep.subr.bf16.mxu0 %v5339
    %5646 = vmatpush1.bf16.msra.mxu0 %v5338
    %5647 = vmatprep.subr.bf16.mxu0 %v5346
    %5648 = vmatpush1.bf16.msra.mxu0 %v5345
    %5649 = vmatprep.mubr.bf16.mxu0 %v4130
    %5650 = vmatmul.mubr.bf16.gmra.mrb[0].mxu0 %v4129
    %v5651 = vpop.f32.mrb[0].mxu0
    %v5652 = vadd.f32 %v5611, %v5651
    %v5653 = vpop.f32.mrb[0].mxu0
    %v5654 = vadd.f32 %v5613, %v5653
    %v5655 = vpop.f32.mrb[0].mxu0
    %v5656 = vpop.f32.mrb[0].mxu0
    %5657 = vdwg.mxu0
    %5658 = vmatprep.subr.bf16.mxu0 %v5131
    %5659 = vmatpush1.bf16.msra.mxu0 %v5130
    %5660 = vmatprep.subr.bf16.mxu0 %v5138
    %5661 = vmatpush1.bf16.msra.mxu0 %v5137
    %5662 = vmatprep.subr.bf16.mxu0 %v5145
    %5663 = vmatpush1.bf16.msra.mxu0 %v5144
    %5664 = vmatprep.subr.bf16.mxu0 %v5152
    %5665 = vmatpush1.bf16.msra.mxu0 %v5151
    %5666 = vmatprep.subr.bf16.mxu0 %v5159
    %5667 = vmatpush1.bf16.msra.mxu0 %v5158
    %5668 = vmatprep.subr.bf16.mxu0 %v5166
    %5669 = vmatpush1.bf16.msra.mxu0 %v5165
    %5670 = vmatprep.subr.bf16.mxu0 %v5173
    %5671 = vmatpush1.bf16.msra.mxu0 %v5172
    %5672 = vmatprep.subr.bf16.mxu0 %v5180
    %5673 = vmatpush1.bf16.msra.mxu0 %v5179
    %5674 = vmatprep.subr.bf16.mxu0 %v5187
    %5675 = vmatpush1.bf16.msra.mxu0 %v5186
    %5676 = vmatprep.subr.bf16.mxu0 %v5194
    %5677 = vmatpush1.bf16.msra.mxu0 %v5193
    %5678 = vmatprep.subr.bf16.mxu0 %v5201
    %5679 = vmatpush1.bf16.msra.mxu0 %v5200
    %5680 = vmatprep.subr.bf16.mxu0 %v5208
    %5681 = vmatpush1.bf16.msra.mxu0 %v5207
    %5682 = vmatprep.subr.bf16.mxu0 %v5215
    %5683 = vmatpush1.bf16.msra.mxu0 %v5214
    %5684 = vmatprep.subr.bf16.mxu0 %v5222
    %5685 = vmatpush1.bf16.msra.mxu0 %v5221
    %5686 = vmatprep.subr.bf16.mxu0 %v5229
    %5687 = vmatpush1.bf16.msra.mxu0 %v5228
    %5688 = vmatprep.subr.bf16.mxu0 %v5236
    %5689 = vmatpush1.bf16.msra.mxu0 %v5235
    %5690 = vmatprep.mubr.bf16.mxu0 %v4128
    %5691 = vmatmul.mubr.bf16.gmra.mrb[0].mxu0 %v4127
    %v5692 = vpop.f32.mrb[0].mxu0
    %v5693 = vadd.f32 %v4400, %v5692
    %v5694 = vpop.f32.mrb[0].mxu0
    %v5695 = vadd.f32 %v4404, %v5694
    %v5696 = vpop.f32.mrb[0].mxu0
    %v5697 = vpop.f32.mrb[0].mxu0
    %5698 = vdwg.mxu0
    %5699 = vmatprep.subr.bf16.mxu0 %v5243
    %5700 = vmatpush1.bf16.msra.mxu0 %v5242
    %5701 = vmatprep.subr.bf16.mxu0 %v5250
    %5702 = vmatpush1.bf16.msra.mxu0 %v5249
    %5703 = vmatprep.subr.bf16.mxu0 %v5257
    %5704 = vmatpush1.bf16.msra.mxu0 %v5256
    %5705 = vmatprep.subr.bf16.mxu0 %v5264
    %5706 = vmatpush1.bf16.msra.mxu0 %v5263
    %5707 = vmatprep.subr.bf16.mxu0 %v5271
    %5708 = vmatpush1.bf16.msra.mxu0 %v5270
    %5709 = vmatprep.subr.bf16.mxu0 %v5278
    %5710 = vmatpush1.bf16.msra.mxu0 %v5277
    %5711 = vmatprep.subr.bf16.mxu0 %v5285
    %5712 = vmatpush1.bf16.msra.mxu0 %v5284
    %5713 = vmatprep.subr.bf16.mxu0 %v5292
    %5714 = vmatpush1.bf16.msra.mxu0 %v5291
    %5715 = vmatprep.subr.bf16.mxu0 %v5299
    %5716 = vmatpush1.bf16.msra.mxu0 %v5298
    %5717 = vmatprep.subr.bf16.mxu0 %v5306
    %5718 = vmatpush1.bf16.msra.mxu0 %v5305
    %5719 = vmatprep.subr.bf16.mxu0 %v5313
    %5720 = vmatpush1.bf16.msra.mxu0 %v5312
    %5721 = vmatprep.subr.bf16.mxu0 %v5320
    %5722 = vmatpush1.bf16.msra.mxu0 %v5319
    %5723 = vmatprep.subr.bf16.mxu0 %v5327
    %5724 = vmatpush1.bf16.msra.mxu0 %v5326
    %5725 = vmatprep.subr.bf16.mxu0 %v5334
    %5726 = vmatpush1.bf16.msra.mxu0 %v5333
    %5727 = vmatprep.subr.bf16.mxu0 %v5341
    %5728 = vmatpush1.bf16.msra.mxu0 %v5340
    %5729 = vmatprep.subr.bf16.mxu0 %v5348
    %5730 = vmatpush1.bf16.msra.mxu0 %v5347
    %5731 = vmatprep.mubr.bf16.mxu0 %v4130
    %5732 = vmatmul.mubr.bf16.gmra.mrb[0].mxu0 %v4129
    %v5733 = vpop.f32.mrb[0].mxu0
    %v5734 = vadd.f32 %v5693, %v5733
    %v5735 = vpop.f32.mrb[0].mxu0
    %v5736 = vadd.f32 %v5695, %v5735
    %v5737 = vpop.f32.mrb[0].mxu0
    %v5738 = vpop.f32.mrb[0].mxu0
    %5739 = vdwg.mxu0
    %5740 = vmatprep.subr.bf16.mxu0 %v5133
    %5741 = vmatpush1.bf16.msra.mxu0 %v5132
    %5742 = vmatprep.subr.bf16.mxu0 %v5140
    %5743 = vmatpush1.bf16.msra.mxu0 %v5139
    %5744 = vmatprep.subr.bf16.mxu0 %v5147
    %5745 = vmatpush1.bf16.msra.mxu0 %v5146
    %5746 = vmatprep.subr.bf16.mxu0 %v5154
    %5747 = vmatpush1.bf16.msra.mxu0 %v5153
    %5748 = vmatprep.subr.bf16.mxu0 %v5161
    %5749 = vmatpush1.bf16.msra.mxu0 %v5160
    %5750 = vmatprep.subr.bf16.mxu0 %v5168
    %5751 = vmatpush1.bf16.msra.mxu0 %v5167
    %5752 = vmatprep.subr.bf16.mxu0 %v5175
    %5753 = vmatpush1.bf16.msra.mxu0 %v5174
    %5754 = vmatprep.subr.bf16.mxu0 %v5182
    %5755 = vmatpush1.bf16.msra.mxu0 %v5181
    %5756 = vmatprep.subr.bf16.mxu0 %v5189
    %5757 = vmatpush1.bf16.msra.mxu0 %v5188
    %5758 = vmatprep.subr.bf16.mxu0 %v5196
    %5759 = vmatpush1.bf16.msra.mxu0 %v5195
    %5760 = vmatprep.subr.bf16.mxu0 %v5203
    %5761 = vmatpush1.bf16.msra.mxu0 %v5202
    %5762 = vmatprep.subr.bf16.mxu0 %v5210
    %5763 = vmatpush1.bf16.msra.mxu0 %v5209
    %5764 = vmatprep.subr.bf16.mxu0 %v5217
    %5765 = vmatpush1.bf16.msra.mxu0 %v5216
    %5766 = vmatprep.subr.bf16.mxu0 %v5224
    %5767 = vmatpush1.bf16.msra.mxu0 %v5223
    %5768 = vmatprep.subr.bf16.mxu0 %v5231
    %5769 = vmatpush1.bf16.msra.mxu0 %v5230
    %5770 = vmatprep.subr.bf16.mxu0 %v5238
    %5771 = vmatpush1.bf16.msra.mxu0 %v5237
    %5772 = vmatprep.mubr.bf16.mxu0 %v4128
    %5773 = vmatmul.mubr.bf16.gmra.mrb[0].mxu0 %v4127
    %v5774 = vpop.f32.mrb[0].mxu0
    %v5775 = vadd.f32 %v4408, %v5774
    %v5776 = vpop.f32.mrb[0].mxu0
    %v5777 = vadd.f32 %v4412, %v5776
    %v5778 = vpop.f32.mrb[0].mxu0
    %v5779 = vpop.f32.mrb[0].mxu0
    %5780 = vdwg.mxu0
    %5781 = vmatprep.subr.bf16.mxu0 %v5245
    %5782 = vmatpush1.bf16.msra.mxu0 %v5244
    %5783 = vmatprep.subr.bf16.mxu0 %v5252
    %5784 = vmatpush1.bf16.msra.mxu0 %v5251
    %5785 = vmatprep.subr.bf16.mxu0 %v5259
    %5786 = vmatpush1.bf16.msra.mxu0 %v5258
    %5787 = vmatprep.subr.bf16.mxu0 %v5266
    %5788 = vmatpush1.bf16.msra.mxu0 %v5265
    %5789 = vmatprep.subr.bf16.mxu0 %v5273
    %5790 = vmatpush1.bf16.msra.mxu0 %v5272
    %5791 = vmatprep.subr.bf16.mxu0 %v5280
    %5792 = vmatpush1.bf16.msra.mxu0 %v5279
    %5793 = vmatprep.subr.bf16.mxu0 %v5287
    %5794 = vmatpush1.bf16.msra.mxu0 %v5286
    %5795 = vmatprep.subr.bf16.mxu0 %v5294
    %5796 = vmatpush1.bf16.msra.mxu0 %v5293
    %5797 = vmatprep.subr.bf16.mxu0 %v5301
    %5798 = vmatpush1.bf16.msra.mxu0 %v5300
    %5799 = vmatprep.subr.bf16.mxu0 %v5308
    %5800 = vmatpush1.bf16.msra.mxu0 %v5307
    %5801 = vmatprep.subr.bf16.mxu0 %v5315
    %5802 = vmatpush1.bf16.msra.mxu0 %v5314
    %5803 = vmatprep.subr.bf16.mxu0 %v5322
    %5804 = vmatpush1.bf16.msra.mxu0 %v5321
    %5805 = vmatprep.subr.bf16.mxu0 %v5329
    %5806 = vmatpush1.bf16.msra.mxu0 %v5328
    %5807 = vmatprep.subr.bf16.mxu0 %v5336
    %5808 = vmatpush1.bf16.msra.mxu0 %v5335
    %5809 = vmatprep.subr.bf16.mxu0 %v5343
    %5810 = vmatpush1.bf16.msra.mxu0 %v5342
    %5811 = vmatprep.subr.bf16.mxu0 %v5350
    %5812 = vmatpush1.bf16.msra.mxu0 %v5349
    %5813 = vmatprep.mubr.bf16.mxu0 %v4130
    %5814 = vmatmul.mubr.bf16.gmra.mrb[0].mxu0 %v4129
    %v5815 = vpop.f32.mrb[0].mxu0
    %v5816 = vadd.f32 %v5775, %v5815
    %v5817 = vpop.f32.mrb[0].mxu0
    %v5818 = vadd.f32 %v5777, %v5817
    %v5819 = vpop.f32.mrb[0].mxu0
    %v5820 = vpop.f32.mrb[0].mxu0
    %5821 = vdwg.mxu0
    %5822 = vmatprep.subr.bf16.mxu0 0
    %5823 = vmatpush1.bf16.msra.mxu0 %v5134
    %5824 = vmatprep.subr.bf16.mxu0 0
    %5825 = vmatpush1.bf16.msra.mxu0 %v5141
    %5826 = vmatprep.subr.bf16.mxu0 0
    %5827 = vmatpush1.bf16.msra.mxu0 %v5148
    %5828 = vmatprep.subr.bf16.mxu0 0
    %5829 = vmatpush1.bf16.msra.mxu0 %v5155
    %5830 = vmatprep.subr.bf16.mxu0 0
    %5831 = vmatpush1.bf16.msra.mxu0 %v5162
    %5832 = vmatprep.subr.bf16.mxu0 0
    %5833 = vmatpush1.bf16.msra.mxu0 %v5169
    %5834 = vmatprep.subr.bf16.mxu0 0
    %5835 = vmatpush1.bf16.msra.mxu0 %v5176
    %5836 = vmatprep.subr.bf16.mxu0 0
    %5837 = vmatpush1.bf16.msra.mxu0 %v5183
    %5838 = vmatprep.subr.bf16.mxu0 0
    %5839 = vmatpush1.bf16.msra.mxu0 %v5190
    %5840 = vmatprep.subr.bf16.mxu0 0
    %5841 = vmatpush1.bf16.msra.mxu0 %v5197
    %5842 = vmatprep.subr.bf16.mxu0 0
    %5843 = vmatpush1.bf16.msra.mxu0 %v5204
    %5844 = vmatprep.subr.bf16.mxu0 0
    %5845 = vmatpush1.bf16.msra.mxu0 %v5211
    %5846 = vmatprep.subr.bf16.mxu0 0
    %5847 = vmatpush1.bf16.msra.mxu0 %v5218
    %5848 = vmatprep.subr.bf16.mxu0 0
    %5849 = vmatpush1.bf16.msra.mxu0 %v5225
    %5850 = vmatprep.subr.bf16.mxu0 0
    %5851 = vmatpush1.bf16.msra.mxu0 %v5232
    %5852 = vmatprep.subr.bf16.mxu0 0
    %5853 = vmatpush1.bf16.msra.mxu0 %v5239
    %5854 = vmatprep.mubr.bf16.mxu0 %v4128
    %5855 = vmatmul.mubr.bf16.gmra.mrb[0].mxu0 %v4127
    %v5856 = vpop.f32.mrb[0].mxu0
    %v5857 = vadd.f32 %v4416, %v5856
    %v5858 = vpop.f32.mrb[0].mxu0
    %v5859 = vpop.f32.mrb[0].mxu0
    %v5860 = vpop.f32.mrb[0].mxu0
    %5861 = vdwg.mxu0
    %5862 = vmatprep.subr.bf16.mxu0 0
    %5863 = vmatpush1.bf16.msra.mxu0 %v5246
    %5864 = vmatprep.subr.bf16.mxu0 0
    %5865 = vmatpush1.bf16.msra.mxu0 %v5253
    %5866 = vmatprep.subr.bf16.mxu0 0
    %5867 = vmatpush1.bf16.msra.mxu0 %v5260
    %5868 = vmatprep.subr.bf16.mxu0 0
    %5869 = vmatpush1.bf16.msra.mxu0 %v5267
    %5870 = vmatprep.subr.bf16.mxu0 0
    %5871 = vmatpush1.bf16.msra.mxu0 %v5274
    %5872 = vmatprep.subr.bf16.mxu0 0
    %5873 = vmatpush1.bf16.msra.mxu0 %v5281
    %5874 = vmatprep.subr.bf16.mxu0 0
    %5875 = vmatpush1.bf16.msra.mxu0 %v5288
    %5876 = vmatprep.subr.bf16.mxu0 0
    %5877 = vmatpush1.bf16.msra.mxu0 %v5295
    %5878 = vmatprep.subr.bf16.mxu0 0
    %5879 = vmatpush1.bf16.msra.mxu0 %v5302
    %5880 = vmatprep.subr.bf16.mxu0 0
    %5881 = vmatpush1.bf16.msra.mxu0 %v5309
    %5882 = vmatprep.subr.bf16.mxu0 0
    %5883 = vmatpush1.bf16.msra.mxu0 %v5316
    %5884 = vmatprep.subr.bf16.mxu0 0
    %5885 = vmatpush1.bf16.msra.mxu0 %v5323
    %5886 = vmatprep.subr.bf16.mxu0 0
    %5887 = vmatpush1.bf16.msra.mxu0 %v5330
    %5888 = vmatprep.subr.bf16.mxu0 0
    %5889 = vmatpush1.bf16.msra.mxu0 %v5337
    %5890 = vmatprep.subr.bf16.mxu0 0
    %5891 = vmatpush1.bf16.msra.mxu0 %v5344
    %5892 = vmatprep.subr.bf16.mxu0 0
    %5893 = vmatpush1.bf16.msra.mxu0 %v5351
    %5894 = vmatprep.mubr.bf16.mxu0 %v4130
    %5895 = vmatmul.mubr.bf16.gmra.mrb[0].mxu0 %v4129
    %v5896 = vpop.f32.mrb[0].mxu0
    %v5897 = vadd.f32 %v5857, %v5896
    %v5898 = vpop.f32.mrb[0].mxu0
    %v5899 = vpop.f32.mrb[0].mxu0
    %v5900 = vpop.f32.mrb[0].mxu0
    %5901 = vdwg.mxu0
    %v5902 = vxor.u32 %v5652, 2147483648
    %v5903 = vxor.u32 %v5654, 2147483648
    %v5904 = vxor.u32 %v5734, 2147483648
    %v5905 = vxor.u32 %v5736, 2147483648
    %v5906 = vxor.u32 %v5816, 2147483648
    %v5907 = vxor.u32 %v5818, 2147483648
    %v5908 = vxor.u32 %v5897, 2147483648
    %v5909 = vmul.f32 %v5902, 1.442695
    %v5910 = vpow.pop %v5909
    %v5911 = vmul.f32 %v5903, 1.442695
    %v5912 = vpow.pop %v5911
    %v5913 = vmul.f32 %v5904, 1.442695
    %v5914 = vpow.pop %v5913
    %v5915 = vmul.f32 %v5905, 1.442695
    %v5916 = vpow.pop %v5915
    %v5917 = vmul.f32 %v5906, 1.442695
    %v5918 = vpow.pop %v5917
    %v5919 = vmul.f32 %v5907, 1.442695
    %v5920 = vpow.pop %v5919
    %v5921 = vmul.f32 %v5908, 1.442695
    %v5922 = vpow.pop %v5921
    %v5923 = vadd.f32 %v5910, 1.0
    %v5924 = vadd.f32 %v5912, 1.0
    %v5925 = vadd.f32 %v5914, 1.0
    %v5926 = vadd.f32 %v5916, 1.0
    %v5927 = vadd.f32 %v5918, 1.0
    %v5928 = vadd.f32 %v5920, 1.0
    %v5929 = vadd.f32 %v5922, 1.0
    %v5930 = vrcp.pop %v5923
    %v5931 = vmul.f32 1.0, %v5930
    %v5932 = vrcp.pop %v5924
    %v5933 = vmul.f32 1.0, %v5932
    %v5934 = vrcp.pop %v5925
    %v5935 = vmul.f32 1.0, %v5934
    %v5936 = vrcp.pop %v5926
    %v5937 = vmul.f32 1.0, %v5936
    %v5938 = vrcp.pop %v5927
    %v5939 = vmul.f32 1.0, %v5938
    %v5940 = vrcp.pop %v5928
    %v5941 = vmul.f32 1.0, %v5940
    %v5942 = vrcp.pop %v5929
    %v5943 = vmul.f32 1.0, %v5942
    %v5944 = vpack.c.bf16 %v5931, %v5931
    %v5945 = vpack.c.bf16 %v5933, %v5933
    %v5946 = vpack.c.bf16 %v5935, %v5935
    %v5947 = vpack.c.bf16 %v5937, %v5937
    %v5948 = vpack.c.bf16 %v5939, %v5939
    %v5949 = vpack.c.bf16 %v5941, %v5941
    %v5950 = vpack.c.bf16 %v5943, %v5943
    %v5958 = vcombine.low %v5944, %v5945
    %v5959 = vcombine.low %v5946, %v5947
    %v5960 = vcombine.low %v5948, %v5949
    %v5962 = vunpack.c.l.s4 1966171168
    %v5963 = vunpack.c.0.s8 %v5962
    %v5964 = vlaneseq
    %v5965 = vshrl.u32 %v5964, 7
    %v5966 = vsub.s32 %v5963, %v5965
    %v5967 = vrot.slane %v5958, %v5966
    %v5969 = vunpack.c.l.s4 1966171168
    %v5970 = vunpack.c.0.s8 %v5969
    %v5971 = vlaneseq
    %v5972 = vshrl.u32 %v5971, 7
    %v5973 = vsub.s32 %v5970, %v5972
    %v5974 = vrot.slane %v5959, %v5973
    %v5976 = vunpack.c.l.s4 1966171168
    %v5977 = vunpack.c.0.s8 %v5976
    %v5978 = vlaneseq
    %v5979 = vshrl.u32 %v5978, 7
    %v5980 = vsub.s32 %v5977, %v5979
    %v5981 = vrot.slane %v5960, %v5980
    %v5983 = vunpack.c.l.s4 1966171168
    %v5984 = vunpack.c.0.s8 %v5983
    %v5985 = vlaneseq
    %v5986 = vshrl.u32 %v5985, 7
    %v5987 = vsub.s32 %v5984, %v5986
    %v5988 = vrot.slane %v5950, %v5987
    %v5989 = vcombine.low %v5967, %v5974
    %v5990 = vcombine.low %v5981, %v5988
    %v5992 = vunpack.c.l.s4 1966171168
    %v5993 = vunpack.c.0.s8 %v5992
    %v5994 = vlaneseq
    %v5995 = vshrl.u32 %v5994, 7
    %v5996 = vsub.s32 %v5993, %v5995
    %v5997 = vrot.slane %v5989, %v5996
    %v5999 = vunpack.c.l.s4 1966171168
    %v6000 = vunpack.c.0.s8 %v5999
    %v6001 = vlaneseq
    %v6002 = vshrl.u32 %v6001, 7
    %v6003 = vsub.s32 %v6000, %v6002
    %v6004 = vrot.slane %v5990, %v6003
    %v6005 = vcombine.low %v5997, %v6004
    %vm6007 = vcmask 1040384
    %vm6008 = vcmask 1041409
    %vm6009 = vmor %vm6008, %vm6007
    %vm6010 = vcmask 1042434
    %vm6011 = vmor %vm6010, %vm6009
    %vm6012 = vcmask 1043459
    %vm6013 = vmor %vm6012, %vm6011
    %vm6014 = vcmask 1044484
    %vm6015 = vmor %vm6014, %vm6013
    %vm6016 = vcmask 1045509
    %vm6017 = vmor %vm6016, %vm6015
    %vm6018 = vcmask 129030
    %vm6019 = vmor %vm6018, %vm6017
    %6020 = vst.msk [vmem:[#allocation6] sm:$0x7f] %vm6019, %v6005
    // Predicated region
    $region62: #{tpu_custom_call.1} parent=1 // pred_check
      _
    $region63: #{tpu_custom_call.1} parent=1 // pred_check_branch
      %6022 = sbr.rel (0) target = $region65
    $region64: #{tpu_custom_call.1} parent=1 // pred_region
      %s6024 = ssub.s32 32, 32
      %6025 = vsyncadd [#allocation4], %s6024
      %s6027 = sshll.u32 [#allocation5], 4
      %s6028 = int_to_ptr.vmem [resolvable:$true] %s6027
      %6030 = dma.vmem_to_hbm [thread:$0]  %s6028, 32, %s14, [#allocation4]
    $region65: #{tpu_custom_call.1} parent=1 // pred_fallthru
      _
    // Predicated region
    $region66: #{tpu_custom_call.1} parent=1 // pred_check
      _
    $region67: #{tpu_custom_call.1} parent=1 // pred_check_branch
      %6032 = sbr.rel (0) target = $region69
    $region68: #{tpu_custom_call.1} parent=1 // pred_region
      %s6034 = ssub.s32 112, 112
      %6035 = vsyncadd [#allocation7], %s6034
      %s6037 = sshll.u32 [#allocation6], 4
      %s6038 = int_to_ptr.vmem [resolvable:$true] %s6037
      %6040 = dma.vmem_to_hbm [thread:$0]  %s6038, 112, %s15, [#allocation7]
    $region69: #{tpu_custom_call.1} parent=1 // pred_fallthru
      _
    // Predicated region
    $region70: #{tpu_custom_call.1} parent=1 // pred_check
      _
    $region71: #{tpu_custom_call.1} parent=1 // pred_check_branch
      %6042 = sbr.rel (0) target = $region73
    $region72: #{tpu_custom_call.1} parent=1 // pred_region
      %6043 = dma.done [#allocation4], 32
    $region73: #{tpu_custom_call.1} parent=1 // pred_fallthru
      _
    // Predicated region
    $region74: #{tpu_custom_call.1} parent=1 // pred_check
      _
    $region75: #{tpu_custom_call.1} parent=1 // pred_check_branch
      %6045 = sbr.rel (0) target = $region77
    $region76: #{tpu_custom_call.1} parent=1 // pred_region
      %6046 = dma.done [#allocation7], 112
    $region77: #{tpu_custom_call.1} parent=1 // pred_fallthru
      _
    %6047 = vsyncpa [#allocation3], 1
    %6048 = vsyncpa [#allocation4], 1
    %6049 = vsyncpa [#allocation7], 1

</llo_original>
